<compile_context>
chip_gen: v7x
topology: tpu7x:2x2x1
jax: 0.10.0
libtpu: 0.0.40
codegen_flags: <defaults>
</compile_context>

<pallas_src>
import functools

import jax
import jax.numpy as jnp
from jax.experimental import pallas as pl
from jax.experimental.pallas import tpu as pltpu


# ----------------------------------------------------------------------------
# Shared in-kernel helper.
#   x:   (BB*C, T)   input block of the *other* modality
#   w1:  (BB*A, BB*C) block-diagonal folded conv1 weight (BN folded in)
#   b1:  (BB*A, 1)    folded conv1 bias
#   w2e: (BB*C, BB*A) conv2 weight, expanded so every channel row of a batch
#                     gets that batch's gate directly (free MXU padding)
#   b2:  scalar       conv2 bias
# returns the sigmoid gate broadcast to (BB*C, T)
# ----------------------------------------------------------------------------
def _spatial_gate(x, w1, b1, w2e, b2):
    h = jnp.dot(w1, x, preferred_element_type=jnp.float32) + b1     # (BB*A, T)
    h = jnp.maximum(h, 0.0)
    a = jnp.dot(w2e, h, preferred_element_type=jnp.float32) + b2    # (BB*C, T) lane-dense
    return jax.nn.sigmoid(a)


# ----------------------------------------------------------------------------
# Pass 1: accumulate per-(batch, channel) sums of the spatially-attended features
# ----------------------------------------------------------------------------
def _desc_kernel(xc_ref, xb_ref,
                 w1c_ref, b1c_ref, w2c_ref,
                 w1b_ref, b1b_ref, w2b_ref,
                 b2_ref,
                 desc_c_ref, desc_b_ref):
    t = pl.program_id(1)

    @pl.when(t == 0)
    def _init():
        desc_c_ref[...] = jnp.zeros_like(desc_c_ref)
        desc_b_ref[...] = jnp.zeros_like(desc_b_ref)

    xc = xc_ref[...]                                   # (BB*C, T)
    xb = xb_ref[...]                                   # (BB*C, T)

    # color_spatial_attn is applied to brightness, brightness_spatial_attn to color.
    gate_c = _spatial_gate(xb, w1c_ref[...], b1c_ref[...], w2c_ref[...], b2_ref[0])
    desc_c_ref[...] += jnp.sum(xc * gate_c, axis=-1, keepdims=True)   # (BB*C, 1)

    gate_b = _spatial_gate(xc, w1b_ref[...], b1b_ref[...], w2b_ref[...], b2_ref[1])
    desc_b_ref[...] += jnp.sum(xb * gate_b, axis=-1, keepdims=True)


# ----------------------------------------------------------------------------
# Pass 2: recompute the cheap gate, apply gate * channel-attention scale
# ----------------------------------------------------------------------------
def _apply_kernel(xc_ref, xb_ref,
                  w1c_ref, b1c_ref, w2c_ref,
                  w1b_ref, b1b_ref, w2b_ref,
                  b2_ref,
                  scale_c_ref, scale_b_ref,
                  out_c_ref, out_b_ref):
    xc = xc_ref[...]                                   # (BB*C, T)
    xb = xb_ref[...]

    gate_c = _spatial_gate(xb, w1c_ref[...], b1c_ref[...], w2c_ref[...], b2_ref[0])
    out_c_ref[...] = (xc * gate_c * scale_c_ref[...]).astype(out_c_ref.dtype)

    gate_b = _spatial_gate(xc, w1b_ref[...], b1b_ref[...], w2b_ref[...], b2_ref[1])
    out_b_ref[...] = (xb * gate_b * scale_b_ref[...]).astype(out_b_ref.dtype)


# ----------------------------------------------------------------------------
# Wrapper helpers
# ----------------------------------------------------------------------------
def _fold_bn(w1, b1, gamma, beta, rmean, rvar, eps=1e-5):
    """Fold eval-mode BatchNorm (running stats) into the preceding 1x1 conv."""
    sc = gamma / jnp.sqrt(rvar + eps)                   # (A,)
    sh = beta - rmean * sc
    return w1 * sc[:, None], b1 * sc + sh               # (A, C), (A,)


def _make_block_weights(w1f, b1f, w2, BB, C):
    """Block-diagonal (over BB batches) conv1, channel-expanded conv2."""
    W1blk = jax.scipy.linalg.block_diag(*([w1f] * BB))                         # (BB*A, BB*C)
    b1blk = jnp.tile(b1f, BB)[:, None]                                         # (BB*A, 1)
    W2exp = jax.scipy.linalg.block_diag(*([jnp.tile(w2, (C, 1))] * BB))        # (BB*C, BB*A)
    return W1blk.astype(jnp.float32), b1blk.astype(jnp.float32), W2exp.astype(jnp.float32)


def _pick_bb(B, C):
    """Smallest batch block such that BB*C fills the 8 f32 sublanes."""
    if C % 8 == 0:
        return 1
    for bb in range(1, B + 1):
        if B % bb == 0 and (bb * C) % 8 == 0:
            return bb
    return B   # full-batch block: block dim equals array dim -> always legal


def _vmem_capacity_bytes():
    try:
        return int(pltpu.get_tpu_info().vmem_capacity_bytes)
    except Exception:
        return 64 * 1024 * 1024   # conservative fallback (v7x per-TensorCore)


def _pick_tile(hw, budget_bytes, bytes_per_hw):
    """Largest divisor of HW (multiple of 128, or HW itself) fitting the VMEM budget."""
    t_max = max(128, budget_bytes // max(1, bytes_per_hw))
    cands = [hw] + [d for d in range(128, hw + 1, 128) if hw % d == 0]
    fits = [c for c in cands if c <= t_max]
    return max(fits) if fits else min(cands)


# ----------------------------------------------------------------------------
# Jitted core (static tiling config)
# ----------------------------------------------------------------------------
@functools.partial(jax.jit, static_argnames=("BB", "tile_hw", "vmem_limit_bytes"))
def _scma_impl(color, bright, params, *, BB, tile_hw, vmem_limit_bytes):
    B, C, H, W = color.shape
    HW = H * W
    BBC = BB * C
    grid = (B // BB, HW // tile_hw)

    # Pure leading/trailing dim collapse of a default-layout array: metadata-only.
    x_c = color.reshape(B * C, HW).astype(jnp.float32)
    x_b = bright.reshape(B * C, HW).astype(jnp.float32)

    # Fold eval-mode BN into conv1; build batch-block weights; conv2 biases -> SMEM.
    w1c_f, b1c_f = _fold_bn(params["w1c"], params["b1c"], params["gamma_c"],
                            params["beta_c"], params["rmean_c"], params["rvar_c"])
    w1b_f, b1b_f = _fold_bn(params["w1b"], params["b1b"], params["gamma_b"],
                            params["beta_b"], params["rmean_b"], params["rvar_b"])
    W1c, b1c, W2c = _make_block_weights(w1c_f, b1c_f, params["w2c"], BB, C)
    W1b, b1b, W2b = _make_block_weights(w1b_f, b1b_f, params["w2b"], BB, C)
    b2 = jnp.stack([params["b2c"], params["b2b"]]).astype(jnp.float32)   # (2,) SMEM

    vmem = pl.BlockSpec(memory_space=pltpu.MemorySpace.VMEM)
    smem = pl.BlockSpec(memory_space=pltpu.MemorySpace.SMEM)
    feat_spec = pl.BlockSpec((BBC, tile_hw), lambda b, t: (b, t))
    desc_spec = pl.BlockSpec((BBC, 1), lambda b, t: (b, 0))   # resident across t, blocked on b

    cparams1 = pltpu.CompilerParams(
        dimension_semantics=("parallel", "arbitrary"),
        vmem_limit_bytes=vmem_limit_bytes)
    cparams2 = pltpu.CompilerParams(
        dimension_semantics=("parallel", "parallel"),
        vmem_limit_bytes=vmem_limit_bytes)

    # -------- Pass 1: per-(batch, channel) sums of spatially-attended features
    desc_c_flat, desc_b_flat = pl.pallas_call(
        _desc_kernel,
        grid=grid,
        in_specs=[feat_spec, feat_spec,
                  vmem, vmem, vmem,
                  vmem, vmem, vmem,
                  smem],
        out_specs=(desc_spec, desc_spec),
        out_shape=(jax.ShapeDtypeStruct((B * C, 1), jnp.float32),
                   jax.ShapeDtypeStruct((B * C, 1), jnp.float32)),
        compiler_params=cparams1,
    )(x_c, x_b, W1c, b1c, W2c, W1b, b1b, W2b, b2)

    # -------- Tiny (B, B) cross-modal softmax: wrapper glue (negligible work)
    color_desc = desc_c_flat.reshape(B, C) / HW                  # global avg pool
    bright_desc = desc_b_flat.reshape(B, C) / HW
    temp = (C ** 0.5) * params["temperature_param"]
    attn_c = jax.nn.softmax((color_desc @ bright_desc.T) / temp, axis=-1)   # (B, B)
    attn_b = jax.nn.softmax((bright_desc @ color_desc.T) / temp, axis=-1)
    # dropout(eval) == identity; attn.view(B, C, 1, 1) with B == C:
    scale_c = attn_c.reshape(B * C, 1)
    scale_b = attn_b.reshape(B * C, 1)
    scale_spec = pl.BlockSpec((BBC, 1), lambda b, t: (b, 0))

    # -------- Pass 2: recompute gate, apply gate * channel scale, write out
    c_out, b_out = pl.pallas_call(
        _apply_kernel,
        grid=grid,
        in_specs=[feat_spec, feat_spec,
                  vmem, vmem, vmem,
                  vmem, vmem, vmem,
                  smem, scale_spec, scale_spec],
        out_specs=(feat_spec, feat_spec),
        out_shape=(jax.ShapeDtypeStruct((B * C, HW), jnp.float32),
                   jax.ShapeDtypeStruct((B * C, HW), jnp.float32)),
        compiler_params=cparams2,
    )(x_c, x_b, W1c, b1c, W2c, W1b, b1b, W2b, b2, scale_c, scale_b)

    return c_out.reshape(B, C, H, W), b_out.reshape(B, C, H, W)


# ----------------------------------------------------------------------------
# Public wrapper: static tiling / VMEM-budget decisions, then jitted core
# ----------------------------------------------------------------------------
def spatial_cross_modal_attention(color, bright, params, *, tile_hw=None):
    """color, bright: (B, C, H, W) float32 (NCHW, like the PyTorch module)."""
    B, C, H, W = color.shape
    assert B == C, "reference .view(B, C, 1, 1) on a (B, B) matrix requires B == C"
    HW = H * W
    A = int(params["w1c"].shape[0])

    BB = _pick_bb(B, C)
    BBC = BB * C

    vmem_cap = _vmem_capacity_bytes()
    vmem_limit = int(min(vmem_cap * 0.75, 120 * 1024 * 1024))

    # VMEM per HW element per grid step (f32):
    #   4 feature blocks (2 in + 2 out) x 2 pipeline buffers x BBC rows
    # + the (BB*A, T) ReLU intermediate (budget for both branches live)
    # + gate / preactivation rows and slack.
    bytes_per_hw = 4 * 2 * BBC * 4 + 2 * BB * A * 4 + 4 * BBC * 4 + 256

    if tile_hw is None:
        tile_hw = _pick_tile(HW, int(vmem_cap * 0.45), bytes_per_hw)
    tile_hw = int(tile_hw)
    assert HW % tile_hw == 0
    assert tile_hw == HW or tile_hw % 128 == 0

    return _scma_impl(color, bright, params, BB=BB, tile_hw=tile_hw,
                      vmem_limit_bytes=vmem_limit)


# ----------------------------------------------------------------------------
# Deterministic parameter construction (matches module __init__ shapes)
# ----------------------------------------------------------------------------
def make_branch_params(keys, C, A):
    return dict(
        w1=0.1 * jax.random.normal(keys[0], (A, C), jnp.float32),   # Conv2d(C, A, 1).weight
        b1=0.1 * jax.random.normal(keys[1], (A,), jnp.float32),
        gamma=1.0 + 0.1 * jax.random.normal(keys[2], (A,), jnp.float32),
        beta=0.1 * jax.random.normal(keys[3], (A,), jnp.float32),
        rmean=0.1 * jax.random.normal(keys[4], (A,), jnp.float32),
        rvar=jax.random.uniform(keys[5], (A,), jnp.float32, 0.5, 1.5),
        w2=0.1 * jax.random.normal(keys[6], (1, A), jnp.float32),   # Conv2d(A, 1, 1).weight
        b2=0.1 * jax.random.normal(keys[7], (), jnp.float32),
    )


# ----------------------------------------------------------------------------
# Pure-JAX reference (NCHW, unfolded BN) for verification
# ----------------------------------------------------------------------------
def reference(color, bright, p):
    B, C, H, W = color.shape
    hp = jax.lax.Precision.HIGHEST

    def spatial(x, w1, b1, gamma, beta, rmean, rvar, w2, b2):
        h = jnp.einsum("bchw,ac->bahw", x, w1, precision=hp) + b1.reshape(1, -1, 1, 1)
        sc = gamma / jnp.sqrt(rvar + 1e-5)
        sh = beta - rmean * sc
        h = h * sc.reshape(1, -1, 1, 1) + sh.reshape(1, -1, 1, 1)
        h = jnp.maximum(h, 0.0)
        a = jnp.einsum("bahw,oa->bohw", h, w2, precision=hp) + b2
        return jax.nn.sigmoid(a)

    c_sp = spatial(bright, p["w1c"], p["b1c"], p["gamma_c"], p["beta_c"],
                   p["rmean_c"], p["rvar_c"], p["w2c"], p["b2c"])
    b_sp = spatial(color, p["w1b"], p["b1b"], p["gamma_b"], p["beta_b"],
                   p["rmean_b"], p["rvar_b"], p["w2b"], p["b2b"])
    color_sa = color * c_sp
    bright_sa = bright * b_sp
    color_desc = color_sa.mean(axis=(2, 3))
    bright_desc = bright_sa.mean(axis=(2, 3))
    temp = (C ** 0.5) * p["temperature_param"]
    attn_c = jax.nn.softmax(color_desc @ bright_desc.T / temp, axis=-1)
    attn_b = jax.nn.softmax(bright_desc @ color_desc.T / temp, axis=-1)
    return (color_sa * attn_c.reshape(B, C, 1, 1),
            bright_sa * attn_b.reshape(B, C, 1, 1))


if __name__ == "__main__":
    B, C, H, W = 4, 4, 16, 16          # B == C required by the reference forward
    A = 64                             # attention_dim

    key = jax.random.PRNGKey(0)
    ks = jax.random.split(key, 18)

    pc = make_branch_params(ks[0:8], C, A)
    pb = make_branch_params(ks[8:16], C, A)
    params = {
        "w1c": pc["w1"], "b1c": pc["b1"], "gamma_c": pc["gamma"], "beta_c": pc["beta"],
        "rmean_c": pc["rmean"], "rvar_c": pc["rvar"], "w2c": pc["w2"], "b2c": pc["b2"],
        "w1b": pb["w1"], "b1b": pb["b1"], "gamma_b": pb["gamma"], "beta_b": pb["beta"],
        "rmean_b": pb["rmean"], "rvar_b": pb["rvar"], "w2b": pb["w2"], "b2b": pb["b2"],
        "temperature_param": jnp.float32(1.0),
    }

    color = jax.random.normal(ks[16], (B, C, H, W), jnp.float32)
    bright = jax.random.normal(ks[17], (B, C, H, W), jnp.float32)

    c_ref, b_ref = reference(color, bright, params)

    # Default (auto tile = whole HW at this size).
    c_out, b_out = spatial_cross_modal_attention(color, bright, params)
    jax.block_until_ready((c_out, b_out))
    assert jnp.allclose(c_out, c_ref, rtol=1e-4, atol=1e-4), "color output mismatch"
    assert jnp.allclose(b_out, b_ref, rtol=1e-4, atol=1e-4), "brightness output mismatch"

    # Explicit 128-wide HW tiles -> grid (B/BB, 2): exercises pipelined tiling and
    # the cross-tile descriptor accumulation path.
    c_out2, b_out2 = spatial_cross_modal_attention(color, bright, params, tile_hw=128)
    jax.block_until_ready((c_out2, b_out2))
    assert jnp.allclose(c_out2, c_ref, rtol=1e-4, atol=1e-4), "color output mismatch (tiled)"
    assert jnp.allclose(b_out2, b_ref, rtol=1e-4, atol=1e-4), "brightness output mismatch (tiled)"

    print("KERNEL_OK")
</pallas_src>

<mosaic_0001>
module attributes {stable_mosaic.version = 11 : i64} {
  func.func @_desc_kernel(%arg0: i32, %arg1: i32, %arg2: memref<8x256xf32, #tpu.memory_space<vmem>>, %arg3: memref<8x256xf32, #tpu.memory_space<vmem>>, %arg4: memref<128x8xf32, #tpu.memory_space<vmem>>, %arg5: memref<128x1xf32, #tpu.memory_space<vmem>>, %arg6: memref<8x128xf32, #tpu.memory_space<vmem>>, %arg7: memref<128x8xf32, #tpu.memory_space<vmem>>, %arg8: memref<128x1xf32, #tpu.memory_space<vmem>>, %arg9: memref<8x128xf32, #tpu.memory_space<vmem>>, %arg10: memref<2xf32, #tpu.memory_space<smem>>, %arg11: memref<8x1xf32, #tpu.memory_space<vmem>>, %arg12: memref<8x1xf32, #tpu.memory_space<vmem>>) attributes {dimension_semantics = [#tpu.dimension_semantics<parallel>, #tpu.dimension_semantics<arbitrary>], iteration_bounds = array<i64: 2, 1>, scalar_prefetch = 0 : i64, scratch_operands = 0 : i64, tpu.core_type = #tpu.core_type<tc>, window_params = [{transform_indices = @transform_0, window_bounds = array<i64: 8, 256>}, {transform_indices = @transform_1, window_bounds = array<i64: 8, 256>}, {pipeline_mode = #tpu.pipeline_mode<synchronous>, transform_indices = @transform_2, window_bounds = array<i64: 128, 8>}, {pipeline_mode = #tpu.pipeline_mode<synchronous>, transform_indices = @transform_3, window_bounds = array<i64: 128, 1>}, {pipeline_mode = #tpu.pipeline_mode<synchronous>, transform_indices = @transform_4, window_bounds = array<i64: 8, 128>}, {pipeline_mode = #tpu.pipeline_mode<synchronous>, transform_indices = @transform_5, window_bounds = array<i64: 128, 8>}, {pipeline_mode = #tpu.pipeline_mode<synchronous>, transform_indices = @transform_6, window_bounds = array<i64: 128, 1>}, {pipeline_mode = #tpu.pipeline_mode<synchronous>, transform_indices = @transform_7, window_bounds = array<i64: 8, 128>}, {transform_indices = @transform_8, window_bounds = array<i64: 2>}, {transform_indices = @transform_9, window_bounds = array<i64: 8, 1>}, {transform_indices = @transform_10, window_bounds = array<i64: 8, 1>}]} {
    %c0_i32 = arith.constant 0 : i32
    %0 = arith.cmpi eq, %arg1, %c0_i32 : i32
    %1 = arith.extui %0 : i1 to i32
    %c0_i32_0 = arith.constant 0 : i32
    %2 = arith.cmpi ne, %1, %c0_i32_0 : i32
    scf.if %2 {
      %cst_34 = arith.constant 0.000000e+00 : f32
      %51 = vector.broadcast %cst_34 : f32 to vector<8x1xf32>
      %c0_35 = arith.constant 0 : index
      %c0_36 = arith.constant 0 : index
      %52 = vector.load %arg11[%c0_35, %c0_36] : memref<8x1xf32, #tpu.memory_space<vmem>>, vector<8x1xf32>
      tpu.vector_store %arg11[%c0_35, %c0_36], %51 {strides = array<i32>} : memref<8x1xf32, #tpu.memory_space<vmem>>, vector<8x1xf32>,
      %cst_37 = arith.constant 0.000000e+00 : f32
      %53 = vector.broadcast %cst_37 : f32 to vector<8x1xf32>
      %c0_38 = arith.constant 0 : index
      %c0_39 = arith.constant 0 : index
      %54 = vector.load %arg12[%c0_38, %c0_39] : memref<8x1xf32, #tpu.memory_space<vmem>>, vector<8x1xf32>
      tpu.vector_store %arg12[%c0_38, %c0_39], %53 {strides = array<i32>} : memref<8x1xf32, #tpu.memory_space<vmem>>, vector<8x1xf32>,
    } else {
    }
    %c0 = arith.constant 0 : index
    %c0_1 = arith.constant 0 : index
    %3 = vector.load %arg2[%c0, %c0_1] : memref<8x256xf32, #tpu.memory_space<vmem>>, vector<8x256xf32>
    %c0_2 = arith.constant 0 : index
    %c0_3 = arith.constant 0 : index
    %4 = vector.load %arg3[%c0_2, %c0_3] : memref<8x256xf32, #tpu.memory_space<vmem>>, vector<8x256xf32>
    %c0_4 = arith.constant 0 : index
    %c0_5 = arith.constant 0 : index
    %5 = vector.load %arg4[%c0_4, %c0_5] : memref<128x8xf32, #tpu.memory_space<vmem>>, vector<128x8xf32>
    %c0_6 = arith.constant 0 : index
    %c0_7 = arith.constant 0 : index
    %6 = vector.load %arg5[%c0_6, %c0_7] : memref<128x1xf32, #tpu.memory_space<vmem>>, vector<128x1xf32>
    %c0_8 = arith.constant 0 : index
    %c0_9 = arith.constant 0 : index
    %7 = vector.load %arg6[%c0_8, %c0_9] : memref<8x128xf32, #tpu.memory_space<vmem>>, vector<8x128xf32>
    %c0_10 = arith.constant 0 : index
    %8 = memref.load %arg10[%c0_10] : memref<2xf32, #tpu.memory_space<smem>>
    %cst = arith.constant dense<0.000000e+00> : vector<128x256xf32>
    %9 = tpu.matmul %5, %4, %cst {dimension_numbers = #tpu.dot_dimension_numbers<[1], [0], [0], [1], [0, 0, 1, 1], [], []>} : vector<128x8xf32>, vector<8x256xf32>, vector<128x256xf32> -> vector<128x256xf32>
    %10 = vector.broadcast %6 : vector<128x1xf32> to vector<128x256xf32>
    %11 = arith.addf %9, %10 : vector<128x256xf32>
    %cst_11 = arith.constant 0.000000e+00 : f32
    %12 = vector.broadcast %cst_11 : f32 to vector<128x256xf32>
    %13 = arith.maximumf %11, %12 : vector<128x256xf32>
    %cst_12 = arith.constant dense<0.000000e+00> : vector<8x256xf32>
    %14 = tpu.matmul %7, %13, %cst_12 {dimension_numbers = #tpu.dot_dimension_numbers<[1], [0], [0], [1], [0, 0, 1, 1], [], []>} : vector<8x128xf32>, vector<128x256xf32>, vector<8x256xf32> -> vector<8x256xf32>
    %15 = vector.broadcast %8 : f32 to vector<8x256xf32>
    %16 = arith.addf %14, %15 : vector<8x256xf32>
    %17 = arith.negf %16 : vector<8x256xf32>
    %18 = math.exp %17 : vector<8x256xf32>
    %cst_13 = arith.constant 1.000000e+00 : f32
    %19 = vector.broadcast %cst_13 : f32 to vector<8x256xf32>
    %20 = arith.addf %19, %18 : vector<8x256xf32>
    %21 = arith.divf %19, %20 : vector<8x256xf32>
    %c0_14 = arith.constant 0 : index
    %c0_15 = arith.constant 0 : index
    %22 = vector.load %arg11[%c0_14, %c0_15] : memref<8x1xf32, #tpu.memory_space<vmem>>, vector<8x1xf32>
    %23 = arith.mulf %3, %21 : vector<8x256xf32>
    %cst_16 = arith.constant dense<0.000000e+00> : vector<8xf32>
    %24 = vector.multi_reduction <add>, %23, %cst_16 [1] : vector<8x256xf32> to vector<8xf32>
    %25 = vector.shape_cast %24 : vector<8xf32> to vector<8x1xf32>
    %26 = arith.addf %22, %25 : vector<8x1xf32>
    %c0_17 = arith.constant 0 : index
    %c0_18 = arith.constant 0 : index
    %27 = vector.load %arg11[%c0_17, %c0_18] : memref<8x1xf32, #tpu.memory_space<vmem>>, vector<8x1xf32>
    tpu.vector_store %arg11[%c0_17, %c0_18], %26 {strides = array<i32>} : memref<8x1xf32, #tpu.memory_space<vmem>>, vector<8x1xf32>,
    %c0_19 = arith.constant 0 : index
    %c0_20 = arith.constant 0 : index
    %28 = vector.load %arg7[%c0_19, %c0_20] : memref<128x8xf32, #tpu.memory_space<vmem>>, vector<128x8xf32>
    %c0_21 = arith.constant 0 : index
    %c0_22 = arith.constant 0 : index
    %29 = vector.load %arg8[%c0_21, %c0_22] : memref<128x1xf32, #tpu.memory_space<vmem>>, vector<128x1xf32>
    %c0_23 = arith.constant 0 : index
    %c0_24 = arith.constant 0 : index
    %30 = vector.load %arg9[%c0_23, %c0_24] : memref<8x128xf32, #tpu.memory_space<vmem>>, vector<8x128xf32>
    %c1 = arith.constant 1 : index
    %31 = memref.load %arg10[%c1] : memref<2xf32, #tpu.memory_space<smem>>
    %cst_25 = arith.constant dense<0.000000e+00> : vector<128x256xf32>
    %32 = tpu.matmul %28, %3, %cst_25 {dimension_numbers = #tpu.dot_dimension_numbers<[1], [0], [0], [1], [0, 0, 1, 1], [], []>} : vector<128x8xf32>, vector<8x256xf32>, vector<128x256xf32> -> vector<128x256xf32>
    %33 = vector.broadcast %29 : vector<128x1xf32> to vector<128x256xf32>
    %34 = arith.addf %32, %33 : vector<128x256xf32>
    %cst_26 = arith.constant 0.000000e+00 : f32
    %35 = vector.broadcast %cst_26 : f32 to vector<128x256xf32>
    %36 = arith.maximumf %34, %35 : vector<128x256xf32>
    %cst_27 = arith.constant dense<0.000000e+00> : vector<8x256xf32>
    %37 = tpu.matmul %30, %36, %cst_27 {dimension_numbers = #tpu.dot_dimension_numbers<[1], [0], [0], [1], [0, 0, 1, 1], [], []>} : vector<8x128xf32>, vector<128x256xf32>, vector<8x256xf32> -> vector<8x256xf32>
    %38 = vector.broadcast %31 : f32 to vector<8x256xf32>
    %39 = arith.addf %37, %38 : vector<8x256xf32>
    %40 = arith.negf %39 : vector<8x256xf32>
    %41 = math.exp %40 : vector<8x256xf32>
    %cst_28 = arith.constant 1.000000e+00 : f32
    %42 = vector.broadcast %cst_28 : f32 to vector<8x256xf32>
    %43 = arith.addf %42, %41 : vector<8x256xf32>
    %44 = arith.divf %42, %43 : vector<8x256xf32>
    %c0_29 = arith.constant 0 : index
    %c0_30 = arith.constant 0 : index
    %45 = vector.load %arg12[%c0_29, %c0_30] : memref<8x1xf32, #tpu.memory_space<vmem>>, vector<8x1xf32>
    %46 = arith.mulf %4, %44 : vector<8x256xf32>
    %cst_31 = arith.constant dense<0.000000e+00> : vector<8xf32>
    %47 = vector.multi_reduction <add>, %46, %cst_31 [1] : vector<8x256xf32> to vector<8xf32>
    %48 = vector.shape_cast %47 : vector<8xf32> to vector<8x1xf32>
    %49 = arith.addf %45, %48 : vector<8x1xf32>
    %c0_32 = arith.constant 0 : index
    %c0_33 = arith.constant 0 : index
    %50 = vector.load %arg12[%c0_32, %c0_33] : memref<8x1xf32, #tpu.memory_space<vmem>>, vector<8x1xf32>
    tpu.vector_store %arg12[%c0_32, %c0_33], %49 {strides = array<i32>} : memref<8x1xf32, #tpu.memory_space<vmem>>, vector<8x1xf32>,
    return
  }
  func.func @transform_0(%arg0: i32, %arg1: i32) -> (i32, i32) {
    %c0_i32 = arith.constant 0 : i32
    return %arg0, %arg1 : i32, i32
  }
  func.func @transform_1(%arg0: i32, %arg1: i32) -> (i32, i32) {
    %c0_i32 = arith.constant 0 : i32
    return %arg0, %arg1 : i32, i32
  }
  func.func @transform_2(%arg0: i32, %arg1: i32) -> (i32, i32) {
    %c0_i32 = arith.constant 0 : i32
    %c0_i32_0 = arith.constant 0 : i32
    %c0_i32_1 = arith.constant 0 : i32
    return %c0_i32, %c0_i32_0 : i32, i32
  }
  func.func @transform_3(%arg0: i32, %arg1: i32) -> (i32, i32) {
    %c0_i32 = arith.constant 0 : i32
    %c0_i32_0 = arith.constant 0 : i32
    %c0_i32_1 = arith.constant 0 : i32
    return %c0_i32, %c0_i32_0 : i32, i32
  }
  func.func @transform_4(%arg0: i32, %arg1: i32) -> (i32, i32) {
    %c0_i32 = arith.constant 0 : i32
    %c0_i32_0 = arith.constant 0 : i32
    %c0_i32_1 = arith.constant 0 : i32
    return %c0_i32, %c0_i32_0 : i32, i32
  }
  func.func @transform_5(%arg0: i32, %arg1: i32) -> (i32, i32) {
    %c0_i32 = arith.constant 0 : i32
    %c0_i32_0 = arith.constant 0 : i32
    %c0_i32_1 = arith.constant 0 : i32
    return %c0_i32, %c0_i32_0 : i32, i32
  }
  func.func @transform_6(%arg0: i32, %arg1: i32) -> (i32, i32) {
    %c0_i32 = arith.constant 0 : i32
    %c0_i32_0 = arith.constant 0 : i32
    %c0_i32_1 = arith.constant 0 : i32
    return %c0_i32, %c0_i32_0 : i32, i32
  }
  func.func @transform_7(%arg0: i32, %arg1: i32) -> (i32, i32) {
    %c0_i32 = arith.constant 0 : i32
    %c0_i32_0 = arith.constant 0 : i32
    %c0_i32_1 = arith.constant 0 : i32
    return %c0_i32, %c0_i32_0 : i32, i32
  }
  func.func @transform_8(%arg0: i32, %arg1: i32) -> i32 {
    %c0_i32 = arith.constant 0 : i32
    %c0_i32_0 = arith.constant 0 : i32
    return %c0_i32 : i32
  }
  func.func @transform_9(%arg0: i32, %arg1: i32) -> (i32, i32) {
    %c0_i32 = arith.constant 0 : i32
    %c0_i32_0 = arith.constant 0 : i32
    return %arg0, %c0_i32 : i32, i32
  }
  func.func @transform_10(%arg0: i32, %arg1: i32) -> (i32, i32) {
    %c0_i32 = arith.constant 0 : i32
    %c0_i32_0 = arith.constant 0 : i32
    return %arg0, %c0_i32 : i32, i32
  }
}

module attributes {stable_mosaic.version = 11 : i64} {
  func.func @_apply_kernel(%arg0: i32, %arg1: i32, %arg2: memref<8x256xf32, #tpu.memory_space<vmem>>, %arg3: memref<8x256xf32, #tpu.memory_space<vmem>>, %arg4: memref<128x8xf32, #tpu.memory_space<vmem>>, %arg5: memref<128x1xf32, #tpu.memory_space<vmem>>, %arg6: memref<8x128xf32, #tpu.memory_space<vmem>>, %arg7: memref<128x8xf32, #tpu.memory_space<vmem>>, %arg8: memref<128x1xf32, #tpu.memory_space<vmem>>, %arg9: memref<8x128xf32, #tpu.memory_space<vmem>>, %arg10: memref<2xf32, #tpu.memory_space<smem>>, %arg11: memref<8x1xf32, #tpu.memory_space<vmem>>, %arg12: memref<8x1xf32, #tpu.memory_space<vmem>>, %arg13: memref<8x256xf32, #tpu.memory_space<vmem>>, %arg14: memref<8x256xf32, #tpu.memory_space<vmem>>) attributes {dimension_semantics = [#tpu.dimension_semantics<parallel>, #tpu.dimension_semantics<parallel>], iteration_bounds = array<i64: 2, 1>, scalar_prefetch = 0 : i64, scratch_operands = 0 : i64, tpu.core_type = #tpu.core_type<tc>, window_params = [{transform_indices = @transform_0, window_bounds = array<i64: 8, 256>}, {transform_indices = @transform_1, window_bounds = array<i64: 8, 256>}, {pipeline_mode = #tpu.pipeline_mode<synchronous>, transform_indices = @transform_2, window_bounds = array<i64: 128, 8>}, {pipeline_mode = #tpu.pipeline_mode<synchronous>, transform_indices = @transform_3, window_bounds = array<i64: 128, 1>}, {pipeline_mode = #tpu.pipeline_mode<synchronous>, transform_indices = @transform_4, window_bounds = array<i64: 8, 128>}, {pipeline_mode = #tpu.pipeline_mode<synchronous>, transform_indices = @transform_5, window_bounds = array<i64: 128, 8>}, {pipeline_mode = #tpu.pipeline_mode<synchronous>, transform_indices = @transform_6, window_bounds = array<i64: 128, 1>}, {pipeline_mode = #tpu.pipeline_mode<synchronous>, transform_indices = @transform_7, window_bounds = array<i64: 8, 128>}, {transform_indices = @transform_8, window_bounds = array<i64: 2>}, {transform_indices = @transform_9, window_bounds = array<i64: 8, 1>}, {transform_indices = @transform_10, window_bounds = array<i64: 8, 1>}, {transform_indices = @transform_11, window_bounds = array<i64: 8, 256>}, {transform_indices = @transform_12, window_bounds = array<i64: 8, 256>}]} {
    %c0 = arith.constant 0 : index
    %c0_0 = arith.constant 0 : index
    %0 = vector.load %arg2[%c0, %c0_0] : memref<8x256xf32, #tpu.memory_space<vmem>>, vector<8x256xf32>
    %c0_1 = arith.constant 0 : index
    %c0_2 = arith.constant 0 : index
    %1 = vector.load %arg3[%c0_1, %c0_2] : memref<8x256xf32, #tpu.memory_space<vmem>>, vector<8x256xf32>
    %c0_3 = arith.constant 0 : index
    %c0_4 = arith.constant 0 : index
    %2 = vector.load %arg4[%c0_3, %c0_4] : memref<128x8xf32, #tpu.memory_space<vmem>>, vector<128x8xf32>
    %c0_5 = arith.constant 0 : index
    %c0_6 = arith.constant 0 : index
    %3 = vector.load %arg5[%c0_5, %c0_6] : memref<128x1xf32, #tpu.memory_space<vmem>>, vector<128x1xf32>
    %c0_7 = arith.constant 0 : index
    %c0_8 = arith.constant 0 : index
    %4 = vector.load %arg6[%c0_7, %c0_8] : memref<8x128xf32, #tpu.memory_space<vmem>>, vector<8x128xf32>
    %c0_9 = arith.constant 0 : index
    %5 = memref.load %arg10[%c0_9] : memref<2xf32, #tpu.memory_space<smem>>
    %cst = arith.constant dense<0.000000e+00> : vector<128x256xf32>
    %6 = tpu.matmul %2, %1, %cst {dimension_numbers = #tpu.dot_dimension_numbers<[1], [0], [0], [1], [0, 0, 1, 1], [], []>} : vector<128x8xf32>, vector<8x256xf32>, vector<128x256xf32> -> vector<128x256xf32>
    %7 = vector.broadcast %3 : vector<128x1xf32> to vector<128x256xf32>
    %8 = arith.addf %6, %7 : vector<128x256xf32>
    %cst_10 = arith.constant 0.000000e+00 : f32
    %9 = vector.broadcast %cst_10 : f32 to vector<128x256xf32>
    %10 = arith.maximumf %8, %9 : vector<128x256xf32>
    %cst_11 = arith.constant dense<0.000000e+00> : vector<8x256xf32>
    %11 = tpu.matmul %4, %10, %cst_11 {dimension_numbers = #tpu.dot_dimension_numbers<[1], [0], [0], [1], [0, 0, 1, 1], [], []>} : vector<8x128xf32>, vector<128x256xf32>, vector<8x256xf32> -> vector<8x256xf32>
    %12 = vector.broadcast %5 : f32 to vector<8x256xf32>
    %13 = arith.addf %11, %12 : vector<8x256xf32>
    %14 = arith.negf %13 : vector<8x256xf32>
    %15 = math.exp %14 : vector<8x256xf32>
    %cst_12 = arith.constant 1.000000e+00 : f32
    %16 = vector.broadcast %cst_12 : f32 to vector<8x256xf32>
    %17 = arith.addf %16, %15 : vector<8x256xf32>
    %18 = arith.divf %16, %17 : vector<8x256xf32>
    %19 = arith.mulf %0, %18 : vector<8x256xf32>
    %c0_13 = arith.constant 0 : index
    %c0_14 = arith.constant 0 : index
    %20 = vector.load %arg11[%c0_13, %c0_14] : memref<8x1xf32, #tpu.memory_space<vmem>>, vector<8x1xf32>
    %21 = vector.broadcast %20 : vector<8x1xf32> to vector<8x256xf32>
    %22 = arith.mulf %19, %21 : vector<8x256xf32>
    %c0_15 = arith.constant 0 : index
    %c0_16 = arith.constant 0 : index
    %23 = vector.load %arg13[%c0_15, %c0_16] : memref<8x256xf32, #tpu.memory_space<vmem>>, vector<8x256xf32>
    tpu.vector_store %arg13[%c0_15, %c0_16], %22 {strides = array<i32>} : memref<8x256xf32, #tpu.memory_space<vmem>>, vector<8x256xf32>,
    %c0_17 = arith.constant 0 : index
    %c0_18 = arith.constant 0 : index
    %24 = vector.load %arg7[%c0_17, %c0_18] : memref<128x8xf32, #tpu.memory_space<vmem>>, vector<128x8xf32>
    %c0_19 = arith.constant 0 : index
    %c0_20 = arith.constant 0 : index
    %25 = vector.load %arg8[%c0_19, %c0_20] : memref<128x1xf32, #tpu.memory_space<vmem>>, vector<128x1xf32>
    %c0_21 = arith.constant 0 : index
    %c0_22 = arith.constant 0 : index
    %26 = vector.load %arg9[%c0_21, %c0_22] : memref<8x128xf32, #tpu.memory_space<vmem>>, vector<8x128xf32>
    %c1 = arith.constant 1 : index
    %27 = memref.load %arg10[%c1] : memref<2xf32, #tpu.memory_space<smem>>
    %cst_23 = arith.constant dense<0.000000e+00> : vector<128x256xf32>
    %28 = tpu.matmul %24, %0, %cst_23 {dimension_numbers = #tpu.dot_dimension_numbers<[1], [0], [0], [1], [0, 0, 1, 1], [], []>} : vector<128x8xf32>, vector<8x256xf32>, vector<128x256xf32> -> vector<128x256xf32>
    %29 = vector.broadcast %25 : vector<128x1xf32> to vector<128x256xf32>
    %30 = arith.addf %28, %29 : vector<128x256xf32>
    %cst_24 = arith.constant 0.000000e+00 : f32
    %31 = vector.broadcast %cst_24 : f32 to vector<128x256xf32>
    %32 = arith.maximumf %30, %31 : vector<128x256xf32>
    %cst_25 = arith.constant dense<0.000000e+00> : vector<8x256xf32>
    %33 = tpu.matmul %26, %32, %cst_25 {dimension_numbers = #tpu.dot_dimension_numbers<[1], [0], [0], [1], [0, 0, 1, 1], [], []>} : vector<8x128xf32>, vector<128x256xf32>, vector<8x256xf32> -> vector<8x256xf32>
    %34 = vector.broadcast %27 : f32 to vector<8x256xf32>
    %35 = arith.addf %33, %34 : vector<8x256xf32>
    %36 = arith.negf %35 : vector<8x256xf32>
    %37 = math.exp %36 : vector<8x256xf32>
    %cst_26 = arith.constant 1.000000e+00 : f32
    %38 = vector.broadcast %cst_26 : f32 to vector<8x256xf32>
    %39 = arith.addf %38, %37 : vector<8x256xf32>
    %40 = arith.divf %38, %39 : vector<8x256xf32>
    %41 = arith.mulf %1, %40 : vector<8x256xf32>
    %c0_27 = arith.constant 0 : index
    %c0_28 = arith.constant 0 : index
    %42 = vector.load %arg12[%c0_27, %c0_28] : memref<8x1xf32, #tpu.memory_space<vmem>>, vector<8x1xf32>
    %43 = vector.broadcast %42 : vector<8x1xf32> to vector<8x256xf32>
    %44 = arith.mulf %41, %43 : vector<8x256xf32>
    %c0_29 = arith.constant 0 : index
    %c0_30 = arith.constant 0 : index
    %45 = vector.load %arg14[%c0_29, %c0_30] : memref<8x256xf32, #tpu.memory_space<vmem>>, vector<8x256xf32>
    tpu.vector_store %arg14[%c0_29, %c0_30], %44 {strides = array<i32>} : memref<8x256xf32, #tpu.memory_space<vmem>>, vector<8x256xf32>,
    return
  }
  func.func @transform_0(%arg0: i32, %arg1: i32) -> (i32, i32) {
    %c0_i32 = arith.constant 0 : i32
    return %arg0, %arg1 : i32, i32
  }
  func.func @transform_1(%arg0: i32, %arg1: i32) -> (i32, i32) {
    %c0_i32 = arith.constant 0 : i32
    return %arg0, %arg1 : i32, i32
  }
  func.func @transform_2(%arg0: i32, %arg1: i32) -> (i32, i32) {
    %c0_i32 = arith.constant 0 : i32
    %c0_i32_0 = arith.constant 0 : i32
    %c0_i32_1 = arith.constant 0 : i32
    return %c0_i32, %c0_i32_0 : i32, i32
  }
  func.func @transform_3(%arg0: i32, %arg1: i32) -> (i32, i32) {
    %c0_i32 = arith.constant 0 : i32
    %c0_i32_0 = arith.constant 0 : i32
    %c0_i32_1 = arith.constant 0 : i32
    return %c0_i32, %c0_i32_0 : i32, i32
  }
  func.func @transform_4(%arg0: i32, %arg1: i32) -> (i32, i32) {
    %c0_i32 = arith.constant 0 : i32
    %c0_i32_0 = arith.constant 0 : i32
    %c0_i32_1 = arith.constant 0 : i32
    return %c0_i32, %c0_i32_0 : i32, i32
  }
  func.func @transform_5(%arg0: i32, %arg1: i32) -> (i32, i32) {
    %c0_i32 = arith.constant 0 : i32
    %c0_i32_0 = arith.constant 0 : i32
    %c0_i32_1 = arith.constant 0 : i32
    return %c0_i32, %c0_i32_0 : i32, i32
  }
  func.func @transform_6(%arg0: i32, %arg1: i32) -> (i32, i32) {
    %c0_i32 = arith.constant 0 : i32
    %c0_i32_0 = arith.constant 0 : i32
    %c0_i32_1 = arith.constant 0 : i32
    return %c0_i32, %c0_i32_0 : i32, i32
  }
  func.func @transform_7(%arg0: i32, %arg1: i32) -> (i32, i32) {
    %c0_i32 = arith.constant 0 : i32
    %c0_i32_0 = arith.constant 0 : i32
    %c0_i32_1 = arith.constant 0 : i32
    return %c0_i32, %c0_i32_0 : i32, i32
  }
  func.func @transform_8(%arg0: i32, %arg1: i32) -> i32 {
    %c0_i32 = arith.constant 0 : i32
    %c0_i32_0 = arith.constant 0 : i32
    return %c0_i32 : i32
  }
  func.func @transform_9(%arg0: i32, %arg1: i32) -> (i32, i32) {
    %c0_i32 = arith.constant 0 : i32
    %c0_i32_0 = arith.constant 0 : i32
    return %arg0, %c0_i32 : i32, i32
  }
  func.func @transform_10(%arg0: i32, %arg1: i32) -> (i32, i32) {
    %c0_i32 = arith.constant 0 : i32
    %c0_i32_0 = arith.constant 0 : i32
    return %arg0, %c0_i32 : i32, i32
  }
  func.func @transform_11(%arg0: i32, %arg1: i32) -> (i32, i32) {
    %c0_i32 = arith.constant 0 : i32
    return %arg0, %arg1 : i32, i32
  }
  func.func @transform_12(%arg0: i32, %arg1: i32) -> (i32, i32) {
    %c0_i32 = arith.constant 0 : i32
    return %arg0, %arg1 : i32, i32
  }
}

</mosaic_0001>

<llo_original>
// kernel: tile.33
$region0: #{tile.33}
  #allocation0 [shape = 's32[1]{0}', space=sflag, size = 0x4, scoped, tag = 'scoped memory for tile.33']
  %s0 = inlined_call_operand.vmem [shape: f32[64], index: 0, kind: input, shape index: {}]
  %s1 = inlined_call_operand.vmem [shape: f32[2,64], index: 1, kind: output, shape index: {}]
  // Predicated region
  $region2: #{tile.33} parent=0 // pred_check
    _
  $region3: #{tile.33} parent=0 // pred_check_branch
    %3 = sbr.rel (0) target = $region5
  $region4: #{tile.33} parent=0 // pred_region
    _
  $region5: #{tile.33} parent=0 // pred_fallthru
    _
  %v4 = vld [vmem:[%s0] ss:$0 sm:$0xff]
  %5 = vst [vmem:[%s1] sm:$0x3] %v4

// kernel: tile.0
$region0: #{tile.0}
  %s0 = inlined_call_operand.vmem [shape: f32[2,64], index: 0, kind: input, shape index: {}]
  %s1 = inlined_call_operand.vmem [shape: f32[128,1], index: 1, kind: output, shape index: {}]
  $region1: #{tile.0} parent=0
    #allocation0 [shape = 'u8[4096]{0}', space=vmem, size = 0x1000, scoped, tag = 'scoped mem for input reshape']
    %s3 = sshllo.u32 0, 2
    %v4 = vld [vmem:[%s0] sm:%s3]
    %5 = vst [vmem:[#allocation0] sm:%s3] %v4
    %v6 = vld [vmem:[#allocation0] sm:$0x3]
    %vm7 = vcmask 7168
    %8 = vst.msk [vmem:[%s1] sm:$0x1] %vm7, %v6
    %s9 = scalar_lea.vmem %s1, 63
    %10 = vst.msk [vmem:[%s9] sm:$0x2] %vm7, %v6
    %v11 = vld [vmem:[#allocation0] sm:$0x3]
    %12 = vrot.lane.b32.xlu0 %v11, 127
    %v13 = vpop.permute.xlu0 %12
    %vm14 = vcmask 7168
    %s15 = scalar_lea.vmem %s1, 1
    %16 = vst.msk [vmem:[%s15] sm:$0x1] %vm14, %v13
    %s17 = scalar_lea.vmem %s1, 64
    %18 = vst.msk [vmem:[%s17] sm:$0x2] %vm14, %v13
    %v19 = vld [vmem:[#allocation0] sm:$0x3]
    %20 = vrot.lane.b32.xlu0 %v19, 126
    %v21 = vpop.permute.xlu0 %20
    %vm22 = vcmask 7168
    %s23 = scalar_lea.vmem %s1, 2
    %24 = vst.msk [vmem:[%s23] sm:$0x1] %vm22, %v21
    %s25 = scalar_lea.vmem %s1, 65
    %26 = vst.msk [vmem:[%s25] sm:$0x2] %vm22, %v21
    %v27 = vld [vmem:[#allocation0] sm:$0x3]
    %28 = vrot.lane.b32.xlu0 %v27, 125
    %v29 = vpop.permute.xlu0 %28
    %vm30 = vcmask 7168
    %s31 = scalar_lea.vmem %s1, 3
    %32 = vst.msk [vmem:[%s31] sm:$0x1] %vm30, %v29
    %s33 = scalar_lea.vmem %s1, 66
    %34 = vst.msk [vmem:[%s33] sm:$0x2] %vm30, %v29
    %v35 = vld [vmem:[#allocation0] sm:$0x3]
    %36 = vrot.lane.b32.xlu0 %v35, 124
    %v37 = vpop.permute.xlu0 %36
    %vm38 = vcmask 7168
    %s39 = scalar_lea.vmem %s1, 4
    %40 = vst.msk [vmem:[%s39] sm:$0x1] %vm38, %v37
    %s41 = scalar_lea.vmem %s1, 67
    %42 = vst.msk [vmem:[%s41] sm:$0x2] %vm38, %v37
    %v43 = vld [vmem:[#allocation0] sm:$0x3]
    %44 = vrot.lane.b32.xlu0 %v43, 123
    %v45 = vpop.permute.xlu0 %44
    %vm46 = vcmask 7168
    %s47 = scalar_lea.vmem %s1, 5
    %48 = vst.msk [vmem:[%s47] sm:$0x1] %vm46, %v45
    %s49 = scalar_lea.vmem %s1, 68
    %50 = vst.msk [vmem:[%s49] sm:$0x2] %vm46, %v45
    %v51 = vld [vmem:[#allocation0] sm:$0x3]
    %52 = vrot.lane.b32.xlu0 %v51, 122
    %v53 = vpop.permute.xlu0 %52
    %vm54 = vcmask 7168
    %s55 = scalar_lea.vmem %s1, 6
    %56 = vst.msk [vmem:[%s55] sm:$0x1] %vm54, %v53
    %s57 = scalar_lea.vmem %s1, 69
    %58 = vst.msk [vmem:[%s57] sm:$0x2] %vm54, %v53
    %v59 = vld [vmem:[#allocation0] sm:$0x3]
    %60 = vrot.lane.b32.xlu0 %v59, 121
    %v61 = vpop.permute.xlu0 %60
    %vm62 = vcmask 7168
    %s63 = scalar_lea.vmem %s1, 7
    %64 = vst.msk [vmem:[%s63] sm:$0x1] %vm62, %v61
    %s65 = scalar_lea.vmem %s1, 70
    %66 = vst.msk [vmem:[%s65] sm:$0x2] %vm62, %v61
    %v67 = vld [vmem:[#allocation0] sm:$0x3]
    %68 = vrot.lane.b32.xlu0 %v67, 120
    %v69 = vpop.permute.xlu0 %68
    %vm70 = vcmask 7168
    %s71 = scalar_lea.vmem %s1, 8
    %72 = vst.msk [vmem:[%s71] sm:$0x1] %vm70, %v69
    %s73 = scalar_lea.vmem %s1, 71
    %74 = vst.msk [vmem:[%s73] sm:$0x2] %vm70, %v69
    %v75 = vld [vmem:[#allocation0] sm:$0x3]
    %76 = vrot.lane.b32.xlu0 %v75, 119
    %v77 = vpop.permute.xlu0 %76
    %vm78 = vcmask 7168
    %s79 = scalar_lea.vmem %s1, 9
    %80 = vst.msk [vmem:[%s79] sm:$0x1] %vm78, %v77
    %s81 = scalar_lea.vmem %s1, 72
    %82 = vst.msk [vmem:[%s81] sm:$0x2] %vm78, %v77
    %v83 = vld [vmem:[#allocation0] sm:$0x3]
    %84 = vrot.lane.b32.xlu0 %v83, 118
    %v85 = vpop.permute.xlu0 %84
    %vm86 = vcmask 7168
    %s87 = scalar_lea.vmem %s1, 10
    %88 = vst.msk [vmem:[%s87] sm:$0x1] %vm86, %v85
    %s89 = scalar_lea.vmem %s1, 73
    %90 = vst.msk [vmem:[%s89] sm:$0x2] %vm86, %v85
    %v91 = vld [vmem:[#allocation0] sm:$0x3]
    %92 = vrot.lane.b32.xlu0 %v91, 117
    %v93 = vpop.permute.xlu0 %92
    %vm94 = vcmask 7168
    %s95 = scalar_lea.vmem %s1, 11
    %96 = vst.msk [vmem:[%s95] sm:$0x1] %vm94, %v93
    %s97 = scalar_lea.vmem %s1, 74
    %98 = vst.msk [vmem:[%s97] sm:$0x2] %vm94, %v93
    %v99 = vld [vmem:[#allocation0] sm:$0x3]
    %100 = vrot.lane.b32.xlu0 %v99, 116
    %v101 = vpop.permute.xlu0 %100
    %vm102 = vcmask 7168
    %s103 = scalar_lea.vmem %s1, 12
    %104 = vst.msk [vmem:[%s103] sm:$0x1] %vm102, %v101
    %s105 = scalar_lea.vmem %s1, 75
    %106 = vst.msk [vmem:[%s105] sm:$0x2] %vm102, %v101
    %v107 = vld [vmem:[#allocation0] sm:$0x3]
    %108 = vrot.lane.b32.xlu0 %v107, 115
    %v109 = vpop.permute.xlu0 %108
    %vm110 = vcmask 7168
    %s111 = scalar_lea.vmem %s1, 13
    %112 = vst.msk [vmem:[%s111] sm:$0x1] %vm110, %v109
    %s113 = scalar_lea.vmem %s1, 76
    %114 = vst.msk [vmem:[%s113] sm:$0x2] %vm110, %v109
    %v115 = vld [vmem:[#allocation0] sm:$0x3]
    %116 = vrot.lane.b32.xlu0 %v115, 114
    %v117 = vpop.permute.xlu0 %116
    %vm118 = vcmask 7168
    %s119 = scalar_lea.vmem %s1, 14
    %120 = vst.msk [vmem:[%s119] sm:$0x1] %vm118, %v117
    %s121 = scalar_lea.vmem %s1, 77
    %122 = vst.msk [vmem:[%s121] sm:$0x2] %vm118, %v117
    %v123 = vld [vmem:[#allocation0] sm:$0x3]
    %124 = vrot.lane.b32.xlu0 %v123, 113
    %v125 = vpop.permute.xlu0 %124
    %vm126 = vcmask 7168
    %s127 = scalar_lea.vmem %s1, 15
    %128 = vst.msk [vmem:[%s127] sm:$0x1] %vm126, %v125
    %s129 = scalar_lea.vmem %s1, 78
    %130 = vst.msk [vmem:[%s129] sm:$0x2] %vm126, %v125
    %v131 = vld [vmem:[#allocation0] sm:$0x3]
    %132 = vrot.lane.b32.xlu0 %v131, 112
    %v133 = vpop.permute.xlu0 %132
    %vm134 = vcmask 7168
    %s135 = scalar_lea.vmem %s1, 16
    %136 = vst.msk [vmem:[%s135] sm:$0x1] %vm134, %v133
    %s137 = scalar_lea.vmem %s1, 79
    %138 = vst.msk [vmem:[%s137] sm:$0x2] %vm134, %v133
    %v139 = vld [vmem:[#allocation0] sm:$0x3]
    %140 = vrot.lane.b32.xlu0 %v139, 111
    %v141 = vpop.permute.xlu0 %140
    %vm142 = vcmask 7168
    %s143 = scalar_lea.vmem %s1, 17
    %144 = vst.msk [vmem:[%s143] sm:$0x1] %vm142, %v141
    %s145 = scalar_lea.vmem %s1, 80
    %146 = vst.msk [vmem:[%s145] sm:$0x2] %vm142, %v141
    %v147 = vld [vmem:[#allocation0] sm:$0x3]
    %148 = vrot.lane.b32.xlu0 %v147, 110
    %v149 = vpop.permute.xlu0 %148
    %vm150 = vcmask 7168
    %s151 = scalar_lea.vmem %s1, 18
    %152 = vst.msk [vmem:[%s151] sm:$0x1] %vm150, %v149
    %s153 = scalar_lea.vmem %s1, 81
    %154 = vst.msk [vmem:[%s153] sm:$0x2] %vm150, %v149
    %v155 = vld [vmem:[#allocation0] sm:$0x3]
    %156 = vrot.lane.b32.xlu0 %v155, 109
    %v157 = vpop.permute.xlu0 %156
    %vm158 = vcmask 7168
    %s159 = scalar_lea.vmem %s1, 19
    %160 = vst.msk [vmem:[%s159] sm:$0x1] %vm158, %v157
    %s161 = scalar_lea.vmem %s1, 82
    %162 = vst.msk [vmem:[%s161] sm:$0x2] %vm158, %v157
    %v163 = vld [vmem:[#allocation0] sm:$0x3]
    %164 = vrot.lane.b32.xlu0 %v163, 108
    %v165 = vpop.permute.xlu0 %164
    %vm166 = vcmask 7168
    %s167 = scalar_lea.vmem %s1, 20
    %168 = vst.msk [vmem:[%s167] sm:$0x1] %vm166, %v165
    %s169 = scalar_lea.vmem %s1, 83
    %170 = vst.msk [vmem:[%s169] sm:$0x2] %vm166, %v165
    %v171 = vld [vmem:[#allocation0] sm:$0x3]
    %172 = vrot.lane.b32.xlu0 %v171, 107
    %v173 = vpop.permute.xlu0 %172
    %vm174 = vcmask 7168
    %s175 = scalar_lea.vmem %s1, 21
    %176 = vst.msk [vmem:[%s175] sm:$0x1] %vm174, %v173
    %s177 = scalar_lea.vmem %s1, 84
    %178 = vst.msk [vmem:[%s177] sm:$0x2] %vm174, %v173
    %v179 = vld [vmem:[#allocation0] sm:$0x3]
    %180 = vrot.lane.b32.xlu0 %v179, 106
    %v181 = vpop.permute.xlu0 %180
    %vm182 = vcmask 7168
    %s183 = scalar_lea.vmem %s1, 22
    %184 = vst.msk [vmem:[%s183] sm:$0x1] %vm182, %v181
    %s185 = scalar_lea.vmem %s1, 85
    %186 = vst.msk [vmem:[%s185] sm:$0x2] %vm182, %v181
    %v187 = vld [vmem:[#allocation0] sm:$0x3]
    %188 = vrot.lane.b32.xlu0 %v187, 105
    %v189 = vpop.permute.xlu0 %188
    %vm190 = vcmask 7168
    %s191 = scalar_lea.vmem %s1, 23
    %192 = vst.msk [vmem:[%s191] sm:$0x1] %vm190, %v189
    %s193 = scalar_lea.vmem %s1, 86
    %194 = vst.msk [vmem:[%s193] sm:$0x2] %vm190, %v189
    %v195 = vld [vmem:[#allocation0] sm:$0x3]
    %196 = vrot.lane.b32.xlu0 %v195, 104
    %v197 = vpop.permute.xlu0 %196
    %vm198 = vcmask 7168
    %s199 = scalar_lea.vmem %s1, 24
    %200 = vst.msk [vmem:[%s199] sm:$0x1] %vm198, %v197
    %s201 = scalar_lea.vmem %s1, 87
    %202 = vst.msk [vmem:[%s201] sm:$0x2] %vm198, %v197
    %v203 = vld [vmem:[#allocation0] sm:$0x3]
    %204 = vrot.lane.b32.xlu0 %v203, 103
    %v205 = vpop.permute.xlu0 %204
    %vm206 = vcmask 7168
    %s207 = scalar_lea.vmem %s1, 25
    %208 = vst.msk [vmem:[%s207] sm:$0x1] %vm206, %v205
    %s209 = scalar_lea.vmem %s1, 88
    %210 = vst.msk [vmem:[%s209] sm:$0x2] %vm206, %v205
    %v211 = vld [vmem:[#allocation0] sm:$0x3]
    %212 = vrot.lane.b32.xlu0 %v211, 102
    %v213 = vpop.permute.xlu0 %212
    %vm214 = vcmask 7168
    %s215 = scalar_lea.vmem %s1, 26
    %216 = vst.msk [vmem:[%s215] sm:$0x1] %vm214, %v213
    %s217 = scalar_lea.vmem %s1, 89
    %218 = vst.msk [vmem:[%s217] sm:$0x2] %vm214, %v213
    %v219 = vld [vmem:[#allocation0] sm:$0x3]
    %220 = vrot.lane.b32.xlu0 %v219, 101
    %v221 = vpop.permute.xlu0 %220
    %vm222 = vcmask 7168
    %s223 = scalar_lea.vmem %s1, 27
    %224 = vst.msk [vmem:[%s223] sm:$0x1] %vm222, %v221
    %s225 = scalar_lea.vmem %s1, 90
    %226 = vst.msk [vmem:[%s225] sm:$0x2] %vm222, %v221
    %v227 = vld [vmem:[#allocation0] sm:$0x3]
    %228 = vrot.lane.b32.xlu0 %v227, 100
    %v229 = vpop.permute.xlu0 %228
    %vm230 = vcmask 7168
    %s231 = scalar_lea.vmem %s1, 28
    %232 = vst.msk [vmem:[%s231] sm:$0x1] %vm230, %v229
    %s233 = scalar_lea.vmem %s1, 91
    %234 = vst.msk [vmem:[%s233] sm:$0x2] %vm230, %v229
    %v235 = vld [vmem:[#allocation0] sm:$0x3]
    %236 = vrot.lane.b32.xlu0 %v235, 99
    %v237 = vpop.permute.xlu0 %236
    %vm238 = vcmask 7168
    %s239 = scalar_lea.vmem %s1, 29
    %240 = vst.msk [vmem:[%s239] sm:$0x1] %vm238, %v237
    %s241 = scalar_lea.vmem %s1, 92
    %242 = vst.msk [vmem:[%s241] sm:$0x2] %vm238, %v237
    %v243 = vld [vmem:[#allocation0] sm:$0x3]
    %244 = vrot.lane.b32.xlu0 %v243, 98
    %v245 = vpop.permute.xlu0 %244
    %vm246 = vcmask 7168
    %s247 = scalar_lea.vmem %s1, 30
    %248 = vst.msk [vmem:[%s247] sm:$0x1] %vm246, %v245
    %s249 = scalar_lea.vmem %s1, 93
    %250 = vst.msk [vmem:[%s249] sm:$0x2] %vm246, %v245
    %v251 = vld [vmem:[#allocation0] sm:$0x3]
    %252 = vrot.lane.b32.xlu0 %v251, 97
    %v253 = vpop.permute.xlu0 %252
    %vm254 = vcmask 7168
    %s255 = scalar_lea.vmem %s1, 31
    %256 = vst.msk [vmem:[%s255] sm:$0x1] %vm254, %v253
    %s257 = scalar_lea.vmem %s1, 94
    %258 = vst.msk [vmem:[%s257] sm:$0x2] %vm254, %v253
    %v259 = vld [vmem:[#allocation0] sm:$0x3]
    %260 = vrot.lane.b32.xlu0 %v259, 96
    %v261 = vpop.permute.xlu0 %260
    %vm262 = vcmask 7168
    %s263 = scalar_lea.vmem %s1, 32
    %264 = vst.msk [vmem:[%s263] sm:$0x1] %vm262, %v261
    %s265 = scalar_lea.vmem %s1, 95
    %266 = vst.msk [vmem:[%s265] sm:$0x2] %vm262, %v261
    %v267 = vld [vmem:[#allocation0] sm:$0x3]
    %268 = vrot.lane.b32.xlu0 %v267, 95
    %v269 = vpop.permute.xlu0 %268
    %vm270 = vcmask 7168
    %s271 = scalar_lea.vmem %s1, 33
    %272 = vst.msk [vmem:[%s271] sm:$0x1] %vm270, %v269
    %s273 = scalar_lea.vmem %s1, 96
    %274 = vst.msk [vmem:[%s273] sm:$0x2] %vm270, %v269
    %v275 = vld [vmem:[#allocation0] sm:$0x3]
    %276 = vrot.lane.b32.xlu0 %v275, 94
    %v277 = vpop.permute.xlu0 %276
    %vm278 = vcmask 7168
    %s279 = scalar_lea.vmem %s1, 34
    %280 = vst.msk [vmem:[%s279] sm:$0x1] %vm278, %v277
    %s281 = scalar_lea.vmem %s1, 97
    %282 = vst.msk [vmem:[%s281] sm:$0x2] %vm278, %v277
    %v283 = vld [vmem:[#allocation0] sm:$0x3]
    %284 = vrot.lane.b32.xlu0 %v283, 93
    %v285 = vpop.permute.xlu0 %284
    %vm286 = vcmask 7168
    %s287 = scalar_lea.vmem %s1, 35
    %288 = vst.msk [vmem:[%s287] sm:$0x1] %vm286, %v285
    %s289 = scalar_lea.vmem %s1, 98
    %290 = vst.msk [vmem:[%s289] sm:$0x2] %vm286, %v285
    %v291 = vld [vmem:[#allocation0] sm:$0x3]
    %292 = vrot.lane.b32.xlu0 %v291, 92
    %v293 = vpop.permute.xlu0 %292
    %vm294 = vcmask 7168
    %s295 = scalar_lea.vmem %s1, 36
    %296 = vst.msk [vmem:[%s295] sm:$0x1] %vm294, %v293
    %s297 = scalar_lea.vmem %s1, 99
    %298 = vst.msk [vmem:[%s297] sm:$0x2] %vm294, %v293
    %v299 = vld [vmem:[#allocation0] sm:$0x3]
    %300 = vrot.lane.b32.xlu0 %v299, 91
    %v301 = vpop.permute.xlu0 %300
    %vm302 = vcmask 7168
    %s303 = scalar_lea.vmem %s1, 37
    %304 = vst.msk [vmem:[%s303] sm:$0x1] %vm302, %v301
    %s305 = scalar_lea.vmem %s1, 100
    %306 = vst.msk [vmem:[%s305] sm:$0x2] %vm302, %v301
    %v307 = vld [vmem:[#allocation0] sm:$0x3]
    %308 = vrot.lane.b32.xlu0 %v307, 90
    %v309 = vpop.permute.xlu0 %308
    %vm310 = vcmask 7168
    %s311 = scalar_lea.vmem %s1, 38
    %312 = vst.msk [vmem:[%s311] sm:$0x1] %vm310, %v309
    %s313 = scalar_lea.vmem %s1, 101
    %314 = vst.msk [vmem:[%s313] sm:$0x2] %vm310, %v309
    %v315 = vld [vmem:[#allocation0] sm:$0x3]
    %316 = vrot.lane.b32.xlu0 %v315, 89
    %v317 = vpop.permute.xlu0 %316
    %vm318 = vcmask 7168
    %s319 = scalar_lea.vmem %s1, 39
    %320 = vst.msk [vmem:[%s319] sm:$0x1] %vm318, %v317
    %s321 = scalar_lea.vmem %s1, 102
    %322 = vst.msk [vmem:[%s321] sm:$0x2] %vm318, %v317
    %v323 = vld [vmem:[#allocation0] sm:$0x3]
    %324 = vrot.lane.b32.xlu0 %v323, 88
    %v325 = vpop.permute.xlu0 %324
    %vm326 = vcmask 7168
    %s327 = scalar_lea.vmem %s1, 40
    %328 = vst.msk [vmem:[%s327] sm:$0x1] %vm326, %v325
    %s329 = scalar_lea.vmem %s1, 103
    %330 = vst.msk [vmem:[%s329] sm:$0x2] %vm326, %v325
    %v331 = vld [vmem:[#allocation0] sm:$0x3]
    %332 = vrot.lane.b32.xlu0 %v331, 87
    %v333 = vpop.permute.xlu0 %332
    %vm334 = vcmask 7168
    %s335 = scalar_lea.vmem %s1, 41
    %336 = vst.msk [vmem:[%s335] sm:$0x1] %vm334, %v333
    %s337 = scalar_lea.vmem %s1, 104
    %338 = vst.msk [vmem:[%s337] sm:$0x2] %vm334, %v333
    %v339 = vld [vmem:[#allocation0] sm:$0x3]
    %340 = vrot.lane.b32.xlu0 %v339, 86
    %v341 = vpop.permute.xlu0 %340
    %vm342 = vcmask 7168
    %s343 = scalar_lea.vmem %s1, 42
    %344 = vst.msk [vmem:[%s343] sm:$0x1] %vm342, %v341
    %s345 = scalar_lea.vmem %s1, 105
    %346 = vst.msk [vmem:[%s345] sm:$0x2] %vm342, %v341
    %v347 = vld [vmem:[#allocation0] sm:$0x3]
    %348 = vrot.lane.b32.xlu0 %v347, 85
    %v349 = vpop.permute.xlu0 %348
    %vm350 = vcmask 7168
    %s351 = scalar_lea.vmem %s1, 43
    %352 = vst.msk [vmem:[%s351] sm:$0x1] %vm350, %v349
    %s353 = scalar_lea.vmem %s1, 106
    %354 = vst.msk [vmem:[%s353] sm:$0x2] %vm350, %v349
    %v355 = vld [vmem:[#allocation0] sm:$0x3]
    %356 = vrot.lane.b32.xlu0 %v355, 84
    %v357 = vpop.permute.xlu0 %356
    %vm358 = vcmask 7168
    %s359 = scalar_lea.vmem %s1, 44
    %360 = vst.msk [vmem:[%s359] sm:$0x1] %vm358, %v357
    %s361 = scalar_lea.vmem %s1, 107
    %362 = vst.msk [vmem:[%s361] sm:$0x2] %vm358, %v357
    %v363 = vld [vmem:[#allocation0] sm:$0x3]
    %364 = vrot.lane.b32.xlu0 %v363, 83
    %v365 = vpop.permute.xlu0 %364
    %vm366 = vcmask 7168
    %s367 = scalar_lea.vmem %s1, 45
    %368 = vst.msk [vmem:[%s367] sm:$0x1] %vm366, %v365
    %s369 = scalar_lea.vmem %s1, 108
    %370 = vst.msk [vmem:[%s369] sm:$0x2] %vm366, %v365
    %v371 = vld [vmem:[#allocation0] sm:$0x3]
    %372 = vrot.lane.b32.xlu0 %v371, 82
    %v373 = vpop.permute.xlu0 %372
    %vm374 = vcmask 7168
    %s375 = scalar_lea.vmem %s1, 46
    %376 = vst.msk [vmem:[%s375] sm:$0x1] %vm374, %v373
    %s377 = scalar_lea.vmem %s1, 109
    %378 = vst.msk [vmem:[%s377] sm:$0x2] %vm374, %v373
    %v379 = vld [vmem:[#allocation0] sm:$0x3]
    %380 = vrot.lane.b32.xlu0 %v379, 81
    %v381 = vpop.permute.xlu0 %380
    %vm382 = vcmask 7168
    %s383 = scalar_lea.vmem %s1, 47
    %384 = vst.msk [vmem:[%s383] sm:$0x1] %vm382, %v381
    %s385 = scalar_lea.vmem %s1, 110
    %386 = vst.msk [vmem:[%s385] sm:$0x2] %vm382, %v381
    %v387 = vld [vmem:[#allocation0] sm:$0x3]
    %388 = vrot.lane.b32.xlu0 %v387, 80
    %v389 = vpop.permute.xlu0 %388
    %vm390 = vcmask 7168
    %s391 = scalar_lea.vmem %s1, 48
    %392 = vst.msk [vmem:[%s391] sm:$0x1] %vm390, %v389
    %s393 = scalar_lea.vmem %s1, 111
    %394 = vst.msk [vmem:[%s393] sm:$0x2] %vm390, %v389
    %v395 = vld [vmem:[#allocation0] sm:$0x3]
    %396 = vrot.lane.b32.xlu0 %v395, 79
    %v397 = vpop.permute.xlu0 %396
    %vm398 = vcmask 7168
    %s399 = scalar_lea.vmem %s1, 49
    %400 = vst.msk [vmem:[%s399] sm:$0x1] %vm398, %v397
    %s401 = scalar_lea.vmem %s1, 112
    %402 = vst.msk [vmem:[%s401] sm:$0x2] %vm398, %v397
    %v403 = vld [vmem:[#allocation0] sm:$0x3]
    %404 = vrot.lane.b32.xlu0 %v403, 78
    %v405 = vpop.permute.xlu0 %404
    %vm406 = vcmask 7168
    %s407 = scalar_lea.vmem %s1, 50
    %408 = vst.msk [vmem:[%s407] sm:$0x1] %vm406, %v405
    %s409 = scalar_lea.vmem %s1, 113
    %410 = vst.msk [vmem:[%s409] sm:$0x2] %vm406, %v405
    %v411 = vld [vmem:[#allocation0] sm:$0x3]
    %412 = vrot.lane.b32.xlu0 %v411, 77
    %v413 = vpop.permute.xlu0 %412
    %vm414 = vcmask 7168
    %s415 = scalar_lea.vmem %s1, 51
    %416 = vst.msk [vmem:[%s415] sm:$0x1] %vm414, %v413
    %s417 = scalar_lea.vmem %s1, 114
    %418 = vst.msk [vmem:[%s417] sm:$0x2] %vm414, %v413
    %v419 = vld [vmem:[#allocation0] sm:$0x3]
    %420 = vrot.lane.b32.xlu0 %v419, 76
    %v421 = vpop.permute.xlu0 %420
    %vm422 = vcmask 7168
    %s423 = scalar_lea.vmem %s1, 52
    %424 = vst.msk [vmem:[%s423] sm:$0x1] %vm422, %v421
    %s425 = scalar_lea.vmem %s1, 115
    %426 = vst.msk [vmem:[%s425] sm:$0x2] %vm422, %v421
    %v427 = vld [vmem:[#allocation0] sm:$0x3]
    %428 = vrot.lane.b32.xlu0 %v427, 75
    %v429 = vpop.permute.xlu0 %428
    %vm430 = vcmask 7168
    %s431 = scalar_lea.vmem %s1, 53
    %432 = vst.msk [vmem:[%s431] sm:$0x1] %vm430, %v429
    %s433 = scalar_lea.vmem %s1, 116
    %434 = vst.msk [vmem:[%s433] sm:$0x2] %vm430, %v429
    %v435 = vld [vmem:[#allocation0] sm:$0x3]
    %436 = vrot.lane.b32.xlu0 %v435, 74
    %v437 = vpop.permute.xlu0 %436
    %vm438 = vcmask 7168
    %s439 = scalar_lea.vmem %s1, 54
    %440 = vst.msk [vmem:[%s439] sm:$0x1] %vm438, %v437
    %s441 = scalar_lea.vmem %s1, 117
    %442 = vst.msk [vmem:[%s441] sm:$0x2] %vm438, %v437
    %v443 = vld [vmem:[#allocation0] sm:$0x3]
    %444 = vrot.lane.b32.xlu0 %v443, 73
    %v445 = vpop.permute.xlu0 %444
    %vm446 = vcmask 7168
    %s447 = scalar_lea.vmem %s1, 55
    %448 = vst.msk [vmem:[%s447] sm:$0x1] %vm446, %v445
    %s449 = scalar_lea.vmem %s1, 118
    %450 = vst.msk [vmem:[%s449] sm:$0x2] %vm446, %v445
    %v451 = vld [vmem:[#allocation0] sm:$0x3]
    %452 = vrot.lane.b32.xlu0 %v451, 72
    %v453 = vpop.permute.xlu0 %452
    %vm454 = vcmask 7168
    %s455 = scalar_lea.vmem %s1, 56
    %456 = vst.msk [vmem:[%s455] sm:$0x1] %vm454, %v453
    %s457 = scalar_lea.vmem %s1, 119
    %458 = vst.msk [vmem:[%s457] sm:$0x2] %vm454, %v453
    %v459 = vld [vmem:[#allocation0] sm:$0x3]
    %460 = vrot.lane.b32.xlu0 %v459, 71
    %v461 = vpop.permute.xlu0 %460
    %vm462 = vcmask 7168
    %s463 = scalar_lea.vmem %s1, 57
    %464 = vst.msk [vmem:[%s463] sm:$0x1] %vm462, %v461
    %s465 = scalar_lea.vmem %s1, 120
    %466 = vst.msk [vmem:[%s465] sm:$0x2] %vm462, %v461
    %v467 = vld [vmem:[#allocation0] sm:$0x3]
    %468 = vrot.lane.b32.xlu0 %v467, 70
    %v469 = vpop.permute.xlu0 %468
    %vm470 = vcmask 7168
    %s471 = scalar_lea.vmem %s1, 58
    %472 = vst.msk [vmem:[%s471] sm:$0x1] %vm470, %v469
    %s473 = scalar_lea.vmem %s1, 121
    %474 = vst.msk [vmem:[%s473] sm:$0x2] %vm470, %v469
    %v475 = vld [vmem:[#allocation0] sm:$0x3]
    %476 = vrot.lane.b32.xlu0 %v475, 69
    %v477 = vpop.permute.xlu0 %476
    %vm478 = vcmask 7168
    %s479 = scalar_lea.vmem %s1, 59
    %480 = vst.msk [vmem:[%s479] sm:$0x1] %vm478, %v477
    %s481 = scalar_lea.vmem %s1, 122
    %482 = vst.msk [vmem:[%s481] sm:$0x2] %vm478, %v477
    %v483 = vld [vmem:[#allocation0] sm:$0x3]
    %484 = vrot.lane.b32.xlu0 %v483, 68
    %v485 = vpop.permute.xlu0 %484
    %vm486 = vcmask 7168
    %s487 = scalar_lea.vmem %s1, 60
    %488 = vst.msk [vmem:[%s487] sm:$0x1] %vm486, %v485
    %s489 = scalar_lea.vmem %s1, 123
    %490 = vst.msk [vmem:[%s489] sm:$0x2] %vm486, %v485
    %v491 = vld [vmem:[#allocation0] sm:$0x3]
    %492 = vrot.lane.b32.xlu0 %v491, 67
    %v493 = vpop.permute.xlu0 %492
    %vm494 = vcmask 7168
    %s495 = scalar_lea.vmem %s1, 61
    %496 = vst.msk [vmem:[%s495] sm:$0x1] %vm494, %v493
    %s497 = scalar_lea.vmem %s1, 124
    %498 = vst.msk [vmem:[%s497] sm:$0x2] %vm494, %v493
    %v499 = vld [vmem:[#allocation0] sm:$0x3]
    %500 = vrot.lane.b32.xlu0 %v499, 66
    %v501 = vpop.permute.xlu0 %500
    %vm502 = vcmask 7168
    %s503 = scalar_lea.vmem %s1, 62
    %504 = vst.msk [vmem:[%s503] sm:$0x1] %vm502, %v501
    %s505 = scalar_lea.vmem %s1, 125
    %506 = vst.msk [vmem:[%s505] sm:$0x2] %vm502, %v501
    %v507 = vld [vmem:[#allocation0] sm:$0x3]
    %508 = vrot.lane.b32.xlu0 %v507, 65
    %v509 = vpop.permute.xlu0 %508
    %vm510 = vcmask 7168
    %s511 = scalar_lea.vmem %s1, 63
    %512 = vst.msk [vmem:[%s511] sm:$0x1] %vm510, %v509
    %s513 = scalar_lea.vmem %s1, 126
    %514 = vst.msk [vmem:[%s513] sm:$0x2] %vm510, %v509

// kernel: _scma_impl.2
$region0: #{_scma_impl.2}
  #allocation0 [shape = 'u32[]', space=smem, size = 0x4, offset = 0x4, fixed_abs, tag = 'smem constant byte address 0x4 - core index']
  #allocation1 [shape = 'u32[144,128]{1,0:T(1,128)}', space=vmem, size = 0x12000, scoped, tag = 'internal scratch']
  %s0 = inlined_call_operand.vmem [shape: f32[16,256], index: 0, kind: input, shape index: {}]
  %s1 = inlined_call_operand.vmem [shape: f32[16,256], index: 1, kind: input, shape index: {}]
  %s2 = inlined_call_operand.vmem [shape: f32[128,8], index: 2, kind: input, shape index: {}]
  %s3 = inlined_call_operand.vmem [shape: f32[128,1], index: 3, kind: input, shape index: {}]
  %s4 = inlined_call_operand.vmem [shape: f32[8,128], index: 4, kind: input, shape index: {}]
  %s5 = inlined_call_operand.vmem [shape: f32[128,8], index: 5, kind: input, shape index: {}]
  %s6 = inlined_call_operand.vmem [shape: f32[128,1], index: 6, kind: input, shape index: {}]
  %s7 = inlined_call_operand.vmem [shape: f32[8,128], index: 7, kind: input, shape index: {}]
  %s8 = inlined_call_operand.vmem [shape: f32[2], index: 8, kind: input, shape index: {}]
  %s9 = inlined_call_operand.vmem [shape: f32[16,1], index: 9, kind: output, shape index: {0}]
  %s10 = inlined_call_operand.vmem [shape: f32[16,1], index: 10, kind: output, shape index: {1}]
  %11 = xla_tuple %s9, %s10
  %s12 = sld [smem:[#allocation0]]
  $region85: #{_scma_impl.2} parent=0
    _
  %s14 = ssub.s32 1, %s12
  %s15 = scalar_select 0, %s14, %s12
  $region1: #{_scma_impl.2} parent=0
    #allocation2 [shape = 'u8[512]{0}', space=smem, size = 0x200, scoped, tag = 'input window, operand 8, single buffered']
    #allocation3 [shape = 's32[2]{0}', space=sflag, size = 0x8, scoped, tag = 'scoped memory for _scma_impl.2']
    %16 = vsyncpa [#allocation3], 0
    loop: start=0, step=1, limit=4
    $region2: #{_scma_impl.2} parent=1 // loop_pre_header
      _
    $region3: #{_scma_impl.2} parent=1 // loop_header
      %s18 = sphi 0, %s22
      %p19 = scmp.ge.s32.totalorder %s18, 4
      %s25 = sphi 0, %s37
      %s26 = sphi 0, %s33
      %s27 = sphi 0, %s25
      %s28 = sphi 0, %s26
      %s29 = sphi 0, %s27
      %s30 = sphi 0, %s28
      %s42 = sphi 0, %s44
      %s45 = sphi 0, %s42
      %s46 = sphi 0, %s45
      %s62 = sphi 0, %s46
      %s70 = sphi 0, %s72
      %s73 = sphi 0, %s70
      %s74 = sphi 0, %s73
      %s90 = sphi 0, %s74
      %s94 = sphi 0, %s94
      %s96 = sphi 0, %s94
      %s97 = sphi 0, %s96
      %s111 = sphi 0, %s97
      %s115 = sphi 0, %s115
      %s117 = sphi 0, %s115
      %s118 = sphi 0, %s117
      %s132 = sphi 0, %s118
      %s136 = sphi 0, %s136
      %s138 = sphi 0, %s136
      %s139 = sphi 0, %s138
      %s153 = sphi 0, %s139
      %s157 = sphi 0, %s157
      %s159 = sphi 0, %s157
      %s160 = sphi 0, %s159
      %s174 = sphi 0, %s160
      %s178 = sphi 0, %s178
      %s180 = sphi 0, %s178
      %s181 = sphi 0, %s180
      %s195 = sphi 0, %s181
      %s199 = sphi 0, %s199
      %s201 = sphi 0, %s199
      %s202 = sphi 0, %s201
      %s216 = sphi 0, %s202
      %s220 = sphi 0, %s220
      %s222 = sphi 0, %s220
      %s223 = sphi 0, %s222
      %s237 = sphi 0, %s223
      %s243 = sphi 0, %s245
      %s246 = sphi 0, %s243
      %s247 = sphi 0, %s246
      %s263 = sphi 0, %s247
      %s269 = sphi 0, %s271
      %s272 = sphi 0, %s269
      %s273 = sphi 0, %s272
      %s289 = sphi 0, %s273
    $region4: #{_scma_impl.2} parent=1 // loop_header_branch
      %21 = sbr.rel (%p19) target = $region8
    $region5: #{_scma_impl.2} parent=1 // loop_body
      %s23 = ssub.s32 %s18, 1
      %s24 = ssub.s32 %s18, 2
      %s31 = sadd.s32 1, %s26
      %p32 = scmp.ge.s32.totalorder %s31, 1
      %s33 = scalar_select %p32, 0, %s31
      %s34 = sadd.s32 1, %s25
      %s35 = scalar_select %p32, %s34, %s25
      %p36 = scmp.ge.s32.totalorder %s35, 2
      %s37 = scalar_select %p36, 0, %s35
      %s38 = ssub.s32 %s25, %s37
      %s39 = ssub.s32 %s26, %s33
      %s40 = sor.u32 %s38, %s39
      %p41 = scmp.eq.s32.totalorder %s40, 0
      %s43 = sadd.s32 %s42, 1
      %s44 = scalar_select %p41, %s42, %s43
      %p47 = pneg %p41
      %p48 = scmp.eq.s32.totalorder %s18, 1
      %p49 = por %p47, %p48
      %p50 = scmp.ne.s32.totalorder %s42, %s45
      %p51 = scmp.eq.s32.totalorder %s18, 0
      %p52 = por %p50, %p51
      %p53 = scmp.ne.s32.totalorder %s42, %s45
      %p54 = scmp.eq.s32.totalorder %s23, 1
      %p55 = por %p53, %p54
      %p56 = scmp.ne.s32.totalorder %s45, %s46
      %p57 = scmp.eq.s32.totalorder %s23, 0
      %p58 = por %p56, %p57
      %p59 = scmp.ne.s32.totalorder %s45, %s46
      %p60 = scmp.eq.s32.totalorder %s24, 1
      %p61 = por %p59, %p60
      %p63 = scmp.ne.s32.totalorder %s46, %s62
      %p64 = scmp.eq.s32.totalorder %s24, 0
      %p65 = por %p63, %p64
      %s66 = ssub.s32 %s25, %s37
      %s67 = ssub.s32 %s26, %s33
      %s68 = sor.u32 %s66, %s67
      %p69 = scmp.eq.s32.totalorder %s68, 0
      %s71 = sadd.s32 %s70, 1
      %s72 = scalar_select %p69, %s70, %s71
      %p75 = pneg %p69
      %p76 = scmp.eq.s32.totalorder %s18, 1
      %p77 = por %p75, %p76
      %p78 = scmp.ne.s32.totalorder %s70, %s73
      %p79 = scmp.eq.s32.totalorder %s18, 0
      %p80 = por %p78, %p79
      %p81 = scmp.ne.s32.totalorder %s70, %s73
      %p82 = scmp.eq.s32.totalorder %s23, 1
      %p83 = por %p81, %p82
      %p84 = scmp.ne.s32.totalorder %s73, %s74
      %p85 = scmp.eq.s32.totalorder %s23, 0
      %p86 = por %p84, %p85
      %p87 = scmp.ne.s32.totalorder %s73, %s74
      %p88 = scmp.eq.s32.totalorder %s24, 1
      %p89 = por %p87, %p88
      %p91 = scmp.ne.s32.totalorder %s74, %s90
      %p92 = scmp.eq.s32.totalorder %s24, 0
      %p93 = por %p91, %p92
      %s95 = sadd.s32 %s94, 1
      %p98 = scmp.eq.s32.totalorder %s18, 1
      %p99 = scmp.ne.s32.totalorder %s94, %s96
      %p100 = scmp.eq.s32.totalorder %s18, 0
      %p101 = por %p99, %p100
      %p102 = scmp.ne.s32.totalorder %s94, %s96
      %p103 = scmp.eq.s32.totalorder %s23, 1
      %p104 = por %p102, %p103
      %p105 = scmp.ne.s32.totalorder %s96, %s97
      %p106 = scmp.eq.s32.totalorder %s23, 0
      %p107 = por %p105, %p106
      %p108 = scmp.ne.s32.totalorder %s96, %s97
      %p109 = scmp.eq.s32.totalorder %s24, 1
      %p110 = por %p108, %p109
      %p112 = scmp.ne.s32.totalorder %s97, %s111
      %p113 = scmp.eq.s32.totalorder %s24, 0
      %p114 = por %p112, %p113
      %s116 = sadd.s32 %s115, 1
      %p119 = scmp.eq.s32.totalorder %s18, 1
      %p120 = scmp.ne.s32.totalorder %s115, %s117
      %p121 = scmp.eq.s32.totalorder %s18, 0
      %p122 = por %p120, %p121
      %p123 = scmp.ne.s32.totalorder %s115, %s117
      %p124 = scmp.eq.s32.totalorder %s23, 1
      %p125 = por %p123, %p124
      %p126 = scmp.ne.s32.totalorder %s117, %s118
      %p127 = scmp.eq.s32.totalorder %s23, 0
      %p128 = por %p126, %p127
      %p129 = scmp.ne.s32.totalorder %s117, %s118
      %p130 = scmp.eq.s32.totalorder %s24, 1
      %p131 = por %p129, %p130
      %p133 = scmp.ne.s32.totalorder %s118, %s132
      %p134 = scmp.eq.s32.totalorder %s24, 0
      %p135 = por %p133, %p134
      %s137 = sadd.s32 %s136, 1
      %p140 = scmp.eq.s32.totalorder %s18, 1
      %p141 = scmp.ne.s32.totalorder %s136, %s138
      %p142 = scmp.eq.s32.totalorder %s18, 0
      %p143 = por %p141, %p142
      %p144 = scmp.ne.s32.totalorder %s136, %s138
      %p145 = scmp.eq.s32.totalorder %s23, 1
      %p146 = por %p144, %p145
      %p147 = scmp.ne.s32.totalorder %s138, %s139
      %p148 = scmp.eq.s32.totalorder %s23, 0
      %p149 = por %p147, %p148
      %p150 = scmp.ne.s32.totalorder %s138, %s139
      %p151 = scmp.eq.s32.totalorder %s24, 1
      %p152 = por %p150, %p151
      %p154 = scmp.ne.s32.totalorder %s139, %s153
      %p155 = scmp.eq.s32.totalorder %s24, 0
      %p156 = por %p154, %p155
      %s158 = sadd.s32 %s157, 1
      %p161 = scmp.eq.s32.totalorder %s18, 1
      %p162 = scmp.ne.s32.totalorder %s157, %s159
      %p163 = scmp.eq.s32.totalorder %s18, 0
      %p164 = por %p162, %p163
      %p165 = scmp.ne.s32.totalorder %s157, %s159
      %p166 = scmp.eq.s32.totalorder %s23, 1
      %p167 = por %p165, %p166
      %p168 = scmp.ne.s32.totalorder %s159, %s160
      %p169 = scmp.eq.s32.totalorder %s23, 0
      %p170 = por %p168, %p169
      %p171 = scmp.ne.s32.totalorder %s159, %s160
      %p172 = scmp.eq.s32.totalorder %s24, 1
      %p173 = por %p171, %p172
      %p175 = scmp.ne.s32.totalorder %s160, %s174
      %p176 = scmp.eq.s32.totalorder %s24, 0
      %p177 = por %p175, %p176
      %s179 = sadd.s32 %s178, 1
      %p182 = scmp.eq.s32.totalorder %s18, 1
      %p183 = scmp.ne.s32.totalorder %s178, %s180
      %p184 = scmp.eq.s32.totalorder %s18, 0
      %p185 = por %p183, %p184
      %p186 = scmp.ne.s32.totalorder %s178, %s180
      %p187 = scmp.eq.s32.totalorder %s23, 1
      %p188 = por %p186, %p187
      %p189 = scmp.ne.s32.totalorder %s180, %s181
      %p190 = scmp.eq.s32.totalorder %s23, 0
      %p191 = por %p189, %p190
      %p192 = scmp.ne.s32.totalorder %s180, %s181
      %p193 = scmp.eq.s32.totalorder %s24, 1
      %p194 = por %p192, %p193
      %p196 = scmp.ne.s32.totalorder %s181, %s195
      %p197 = scmp.eq.s32.totalorder %s24, 0
      %p198 = por %p196, %p197
      %s200 = sadd.s32 %s199, 1
      %p203 = scmp.eq.s32.totalorder %s18, 1
      %p204 = scmp.ne.s32.totalorder %s199, %s201
      %p205 = scmp.eq.s32.totalorder %s18, 0
      %p206 = por %p204, %p205
      %p207 = scmp.ne.s32.totalorder %s199, %s201
      %p208 = scmp.eq.s32.totalorder %s23, 1
      %p209 = por %p207, %p208
      %p210 = scmp.ne.s32.totalorder %s201, %s202
      %p211 = scmp.eq.s32.totalorder %s23, 0
      %p212 = por %p210, %p211
      %p213 = scmp.ne.s32.totalorder %s201, %s202
      %p214 = scmp.eq.s32.totalorder %s24, 1
      %p215 = por %p213, %p214
      %p217 = scmp.ne.s32.totalorder %s202, %s216
      %p218 = scmp.eq.s32.totalorder %s24, 0
      %p219 = por %p217, %p218
      %s221 = sadd.s32 %s220, 1
      %p224 = scmp.eq.s32.totalorder %s18, 1
      %p225 = scmp.ne.s32.totalorder %s220, %s222
      %p226 = scmp.eq.s32.totalorder %s18, 0
      %p227 = por %p225, %p226
      %p228 = scmp.ne.s32.totalorder %s220, %s222
      %p229 = scmp.eq.s32.totalorder %s23, 1
      %p230 = por %p228, %p229
      %p231 = scmp.ne.s32.totalorder %s222, %s223
      %p232 = scmp.eq.s32.totalorder %s23, 0
      %p233 = por %p231, %p232
      %p234 = scmp.ne.s32.totalorder %s222, %s223
      %p235 = scmp.eq.s32.totalorder %s24, 1
      %p236 = por %p234, %p235
      %p238 = scmp.ne.s32.totalorder %s223, %s237
      %p239 = scmp.eq.s32.totalorder %s24, 0
      %p240 = por %p238, %p239
      %s241 = ssub.s32 %s25, %s37
      %p242 = scmp.eq.s32.totalorder %s241, 0
      %s244 = sadd.s32 %s243, 1
      %s245 = scalar_select %p242, %s243, %s244
      %p248 = pneg %p242
      %p249 = scmp.eq.s32.totalorder %s18, 1
      %p250 = por %p248, %p249
      %p251 = scmp.ne.s32.totalorder %s243, %s246
      %p252 = scmp.eq.s32.totalorder %s18, 0
      %p253 = por %p251, %p252
      %p254 = scmp.ne.s32.totalorder %s243, %s246
      %p255 = scmp.eq.s32.totalorder %s23, 1
      %p256 = por %p254, %p255
      %p257 = scmp.ne.s32.totalorder %s246, %s247
      %p258 = scmp.eq.s32.totalorder %s23, 0
      %p259 = por %p257, %p258
      %p260 = scmp.ne.s32.totalorder %s246, %s247
      %p261 = scmp.eq.s32.totalorder %s24, 1
      %p262 = por %p260, %p261
      %p264 = scmp.ne.s32.totalorder %s247, %s263
      %p265 = scmp.eq.s32.totalorder %s24, 0
      %p266 = por %p264, %p265
      %s267 = ssub.s32 %s25, %s37
      %p268 = scmp.eq.s32.totalorder %s267, 0
      %s270 = sadd.s32 %s269, 1
      %s271 = scalar_select %p268, %s269, %s270
      %p274 = pneg %p268
      %p275 = scmp.eq.s32.totalorder %s18, 1
      %p276 = por %p274, %p275
      %p277 = scmp.ne.s32.totalorder %s269, %s272
      %p278 = scmp.eq.s32.totalorder %s18, 0
      %p279 = por %p277, %p278
      %p280 = scmp.ne.s32.totalorder %s269, %s272
      %p281 = scmp.eq.s32.totalorder %s23, 1
      %p282 = por %p280, %p281
      %p283 = scmp.ne.s32.totalorder %s272, %s273
      %p284 = scmp.eq.s32.totalorder %s23, 0
      %p285 = por %p283, %p284
      %p286 = scmp.ne.s32.totalorder %s272, %s273
      %p287 = scmp.eq.s32.totalorder %s24, 1
      %p288 = por %p286, %p287
      %p290 = scmp.ne.s32.totalorder %s273, %s289
      %p291 = scmp.eq.s32.totalorder %s24, 0
      %p292 = por %p290, %p291
      %p293 = scmp.le.s32.totalorder 1, %s18
      %p294 = scmp.lt.s32.totalorder %s18, 3
      %p295 = pnand %p293, %p294
      %p296 = pneg %p295
      // Predicated region
      $region9: #{_scma_impl.2} parent=5 // pred_check
        _
      $region10: #{_scma_impl.2} parent=5 // pred_check_branch
        %298 = sbr.rel (%p295) target = $region12
      $region11: #{_scma_impl.2} parent=5 // pred_region
        %s299 = ssub.s32 %s18, 1
        // Predicated region
        $region13: #{_scma_impl.2} parent=11 // pred_check
          %p300 = pneg %p107
        $region14: #{_scma_impl.2} parent=11 // pred_check_branch
          %302 = sbr.rel (%p300) target = $region16
        $region15: #{_scma_impl.2} parent=11 // pred_region
          _
        $region16: #{_scma_impl.2} parent=11 // pred_fallthru
          _
        // Predicated region
        $region17: #{_scma_impl.2} parent=11 // pred_check
          %p303 = pneg %p128
        $region18: #{_scma_impl.2} parent=11 // pred_check_branch
          %305 = sbr.rel (%p303) target = $region20
        $region19: #{_scma_impl.2} parent=11 // pred_region
          _
        $region20: #{_scma_impl.2} parent=11 // pred_fallthru
          _
        // Predicated region
        $region21: #{_scma_impl.2} parent=11 // pred_check
          %p306 = pneg %p149
        $region22: #{_scma_impl.2} parent=11 // pred_check_branch
          %308 = sbr.rel (%p306) target = $region24
        $region23: #{_scma_impl.2} parent=11 // pred_region
          _
        $region24: #{_scma_impl.2} parent=11 // pred_fallthru
          _
        // Predicated region
        $region25: #{_scma_impl.2} parent=11 // pred_check
          %p309 = pneg %p170
        $region26: #{_scma_impl.2} parent=11 // pred_check_branch
          %311 = sbr.rel (%p309) target = $region28
        $region27: #{_scma_impl.2} parent=11 // pred_region
          _
        $region28: #{_scma_impl.2} parent=11 // pred_fallthru
          _
        // Predicated region
        $region29: #{_scma_impl.2} parent=11 // pred_check
          %p312 = pneg %p191
        $region30: #{_scma_impl.2} parent=11 // pred_check_branch
          %314 = sbr.rel (%p312) target = $region32
        $region31: #{_scma_impl.2} parent=11 // pred_region
          _
        $region32: #{_scma_impl.2} parent=11 // pred_fallthru
          _
        // Predicated region
        $region33: #{_scma_impl.2} parent=11 // pred_check
          %p315 = pneg %p212
        $region34: #{_scma_impl.2} parent=11 // pred_check_branch
          %317 = sbr.rel (%p315) target = $region36
        $region35: #{_scma_impl.2} parent=11 // pred_region
          _
        $region36: #{_scma_impl.2} parent=11 // pred_fallthru
          _
        // Predicated region
        $region37: #{_scma_impl.2} parent=11 // pred_check
          %p318 = pneg %p233
        $region38: #{_scma_impl.2} parent=11 // pred_check_branch
          %320 = sbr.rel (%p318) target = $region40
        $region39: #{_scma_impl.2} parent=11 // pred_region
          %s322 = ssub.s32 16, 16
          %323 = vsyncadd [#allocation3], %s322
          %s325 = sshll.u32 %s8, 4
          %s326 = int_to_ptr.vmem [resolvable:$true] %s325
          %328 = dma.vmem_to_smem %s326, 16, [#allocation2], [#allocation3]
        $region40: #{_scma_impl.2} parent=11 // pred_fallthru
          _
      $region12: #{_scma_impl.2} parent=5 // pred_fallthru
        _
      %p329 = scmp.lt.s32.totalorder %s18, 2
      // Predicated region
      $region41: #{_scma_impl.2} parent=5 // pred_check
        %p330 = pneg %p329
      $region42: #{_scma_impl.2} parent=5 // pred_check_branch
        %332 = sbr.rel (%p330) target = $region44
      $region43: #{_scma_impl.2} parent=5 // pred_region
        // Predicated region
        $region45: #{_scma_impl.2} parent=43 // pred_check
          %p333 = pneg %p52
        $region46: #{_scma_impl.2} parent=43 // pred_check_branch
          %335 = sbr.rel (%p333) target = $region48
        $region47: #{_scma_impl.2} parent=43 // pred_region
          %s336 = smul.u32 2, %s26
          %p337 = scmp.lt.s32.totalorder %s25, 1
          %s338 = scalar_select %p337, %s25, 1
          %p339 = scmp.lt.s32.totalorder %s336, 1
          %s340 = scalar_select %p339, %s336, 1
          %s341 = smul.addr %s338, 2
          %s342 = sadd.s32 %s340, %s341
          %s343 = smul.addr %s342, 8
          %s344 = scalar_lea.vmem %s0, %s343
          %s345 = smul.u32 2, %s26
        $region48: #{_scma_impl.2} parent=43 // pred_fallthru
          _
        // Predicated region
        $region49: #{_scma_impl.2} parent=43 // pred_check
          %p346 = pneg %p80
        $region50: #{_scma_impl.2} parent=43 // pred_check_branch
          %348 = sbr.rel (%p346) target = $region52
        $region51: #{_scma_impl.2} parent=43 // pred_region
          %s349 = smul.u32 2, %s26
          %p350 = scmp.lt.s32.totalorder %s25, 1
          %s351 = scalar_select %p350, %s25, 1
          %p352 = scmp.lt.s32.totalorder %s349, 1
          %s353 = scalar_select %p352, %s349, 1
          %s354 = smul.addr %s351, 2
          %s355 = sadd.s32 %s353, %s354
          %s356 = smul.addr %s355, 8
          %s357 = scalar_lea.vmem %s1, %s356
          %s358 = smul.u32 2, %s26
        $region52: #{_scma_impl.2} parent=43 // pred_fallthru
          _
      $region44: #{_scma_impl.2} parent=5 // pred_fallthru
        _
      %p359 = scmp.le.s32.totalorder 1, %s18
      %p360 = scmp.lt.s32.totalorder %s18, 3
      %p361 = pnand %p359, %p360
      %p362 = pneg %p361
      // Predicated region
      $region53: #{_scma_impl.2} parent=5 // pred_check
        _
      $region54: #{_scma_impl.2} parent=5 // pred_check_branch
        %364 = sbr.rel (%p361) target = $region56
      $region55: #{_scma_impl.2} parent=5 // pred_region
        %s365 = ssub.s32 %s18, 1
        // Predicated region
        $region57: #{_scma_impl.2} parent=55 // pred_check
          %p366 = pneg %p233
        $region58: #{_scma_impl.2} parent=55 // pred_check_branch
          %368 = sbr.rel (%p366) target = $region60
        $region59: #{_scma_impl.2} parent=55 // pred_region
          %369 = dma.done [#allocation3], 16
        $region60: #{_scma_impl.2} parent=55 // pred_fallthru
          _
        %370 = sfence
        %s371 = smul.u32 2, %s28
        %p372 = scmp.lt.s32.totalorder %s27, 1
        %s373 = scalar_select %p372, %s27, 1
        %p374 = scmp.lt.s32.totalorder %s371, 1
        %s375 = scalar_select %p374, %s371, 1
        %s376 = smul.addr %s373, 2
        %s377 = sadd.s32 %s375, %s376
        %s378 = smul.addr %s377, 8
        %s379 = scalar_lea.vmem %s0, %s378
        %p380 = pneg %p58
        %p381 = pneg %p55
        %s382 = smul.u32 2, %s28
        %p383 = scmp.lt.s32.totalorder %s27, 1
        %s384 = scalar_select %p383, %s27, 1
        %p385 = scmp.lt.s32.totalorder %s382, 1
        %s386 = scalar_select %p385, %s382, 1
        %s387 = smul.addr %s384, 2
        %s388 = sadd.s32 %s386, %s387
        %s389 = smul.addr %s388, 8
        %s390 = scalar_lea.vmem %s1, %s389
        %p391 = pneg %p86
        %p392 = pneg %p83
        %p393 = pneg %p107
        %p394 = pneg %p104
        %p395 = pneg %p128
        %p396 = pneg %p125
        %p397 = pneg %p149
        %p398 = pneg %p146
        %p399 = pneg %p170
        %p400 = pneg %p167
        %p401 = pneg %p191
        %p402 = pneg %p188
        %p403 = pneg %p212
        %p404 = pneg %p209
        %p405 = pneg %p233
        %p406 = pneg %p230
        %p407 = pneg %p259
        %p408 = pneg %p256
        %p409 = scmp.lt.s32.totalorder %s27, 1
        %s410 = scalar_select %p409, %s27, 1
        %s411 = smul.addr %s410, 8
        %s412 = scalar_lea.vmem %s9, %s411
        %p413 = pneg %p285
        %p414 = pneg %p282
        %p415 = scmp.lt.s32.totalorder %s27, 1
        %s416 = scalar_select %p415, %s27, 1
        %s417 = smul.addr %s416, 8
        %s418 = scalar_lea.vmem %s10, %s417
        %s419 = smul.u32 2, %s28
        %p420 = scmp.lt.s32.totalorder %s27, 1
        %s421 = scalar_select %p420, %s27, 1
        %p422 = scmp.lt.s32.totalorder %s419, 1
        %s423 = scalar_select %p422, %s419, 1
        %s424 = smul.addr %s421, 2
        %s425 = sadd.s32 %s423, %s424
        %s426 = smul.addr %s425, 8
        %s427 = scalar_lea.vmem %s0, %s426
        %s428 = smul.u32 2, %s28
        %s429 = smul.u32 2, %s28
        %p430 = scmp.lt.s32.totalorder %s27, 1
        %s431 = scalar_select %p430, %s27, 1
        %p432 = scmp.lt.s32.totalorder %s429, 1
        %s433 = scalar_select %p432, %s429, 1
        %s434 = smul.addr %s431, 2
        %s435 = sadd.s32 %s433, %s434
        %s436 = smul.addr %s435, 8
        %s437 = scalar_lea.vmem %s1, %s436
        %s438 = smul.u32 2, %s28
        %p439 = scmp.lt.s32.totalorder %s27, 1
        %s440 = scalar_select %p439, %s27, 1
        %s441 = smul.addr %s440, 8
        %s442 = scalar_lea.vmem %s9, %s441
        %p443 = scmp.lt.s32.totalorder %s27, 1
        %s444 = scalar_select %p443, %s27, 1
        %s445 = smul.addr %s444, 8
        %s446 = scalar_lea.vmem %s10, %s445
        %p447 = scmp.eq.s32.totalorder %s28, 0
        // Predicated region
        $region61: #{_scma_impl.2} parent=55 // pred_check
          %p448 = pneg %p447
        $region62: #{_scma_impl.2} parent=55 // pred_check_branch
          %450 = sbr.rel (%p448) target = $region64
        $region63: #{_scma_impl.2} parent=55 // pred_region
          %vm451 = vcmask 7168
          %452 = vst.msk [vmem:[%s442] sm:$0xff] %vm451, 0.0
          %453 = vst.msk [vmem:[%s446] sm:$0xff] %vm451, 0.0
        $region64: #{_scma_impl.2} parent=55 // pred_fallthru
          _
        %v454 = vld [vmem:[%s427] sm:$0xff]
        %v455 = vld [vmem:[%s427 + $0x8] sm:$0xff]
        %v456 = vld [vmem:[%s437] sm:$0xff]
        %v457 = vld [vmem:[%s437 + $0x8] sm:$0xff]
        %v458 = vld [vmem:[%s2] sm:$0xff]
        %v459 = vld [vmem:[%s2 + $0x8] sm:$0xff]
        %v460 = vld [vmem:[%s2 + $0x10] sm:$0xff]
        %v461 = vld [vmem:[%s2 + $0x18] sm:$0xff]
        %v462 = vld [vmem:[%s2 + $0x20] sm:$0xff]
        %v463 = vld [vmem:[%s2 + $0x28] sm:$0xff]
        %v464 = vld [vmem:[%s2 + $0x30] sm:$0xff]
        %v465 = vld [vmem:[%s2 + $0x38] sm:$0xff]
        %v466 = vld [vmem:[%s2 + $0x40] sm:$0xff]
        %v467 = vld [vmem:[%s2 + $0x48] sm:$0xff]
        %v468 = vld [vmem:[%s2 + $0x50] sm:$0xff]
        %v469 = vld [vmem:[%s2 + $0x58] sm:$0xff]
        %v470 = vld [vmem:[%s2 + $0x60] sm:$0xff]
        %v471 = vld [vmem:[%s2 + $0x68] sm:$0xff]
        %v472 = vld [vmem:[%s2 + $0x70] sm:$0xff]
        %v473 = vld [vmem:[%s2 + $0x78] sm:$0xff]
        %v474 = vld [vmem:[%s3] sm:$0xff]
        %v475 = vld [vmem:[%s3 + $0x8] sm:$0xff]
        %v476 = vld [vmem:[%s3 + $0x10] sm:$0xff]
        %v477 = vld [vmem:[%s3 + $0x18] sm:$0xff]
        %v478 = vld [vmem:[%s3 + $0x20] sm:$0xff]
        %v479 = vld [vmem:[%s3 + $0x28] sm:$0xff]
        %v480 = vld [vmem:[%s3 + $0x30] sm:$0xff]
        %v481 = vld [vmem:[%s3 + $0x38] sm:$0xff]
        %v482 = vld [vmem:[%s3 + $0x40] sm:$0xff]
        %v483 = vld [vmem:[%s3 + $0x48] sm:$0xff]
        %v484 = vld [vmem:[%s3 + $0x50] sm:$0xff]
        %v485 = vld [vmem:[%s3 + $0x58] sm:$0xff]
        %v486 = vld [vmem:[%s3 + $0x60] sm:$0xff]
        %v487 = vld [vmem:[%s3 + $0x68] sm:$0xff]
        %v488 = vld [vmem:[%s3 + $0x70] sm:$0xff]
        %v489 = vld [vmem:[%s3 + $0x78] sm:$0xff]
        %v490 = vld [vmem:[%s4] sm:$0xff]
        %s491 = sld [smem:[#allocation2]]
        %493 = vset.pattern.permute.xlu0 0
        %494 = vperm.xlu0 %493, %v474
        %v495 = vpop.permute.xlu0 %494
        %498 = vset.pattern.permute.xlu0 0
        %499 = vperm.xlu0 %498, %v475
        %v500 = vpop.permute.xlu0 %499
        %503 = vset.pattern.permute.xlu0 0
        %504 = vperm.xlu0 %503, %v476
        %v505 = vpop.permute.xlu0 %504
        %508 = vset.pattern.permute.xlu0 0
        %509 = vperm.xlu0 %508, %v477
        %v510 = vpop.permute.xlu0 %509
        %513 = vset.pattern.permute.xlu0 0
        %514 = vperm.xlu0 %513, %v478
        %v515 = vpop.permute.xlu0 %514
        %518 = vset.pattern.permute.xlu0 0
        %519 = vperm.xlu0 %518, %v479
        %v520 = vpop.permute.xlu0 %519
        %523 = vset.pattern.permute.xlu0 0
        %524 = vperm.xlu0 %523, %v480
        %v525 = vpop.permute.xlu0 %524
        %528 = vset.pattern.permute.xlu0 0
        %529 = vperm.xlu0 %528, %v481
        %v530 = vpop.permute.xlu0 %529
        %533 = vset.pattern.permute.xlu0 0
        %534 = vperm.xlu0 %533, %v482
        %v535 = vpop.permute.xlu0 %534
        %538 = vset.pattern.permute.xlu0 0
        %539 = vperm.xlu0 %538, %v483
        %v540 = vpop.permute.xlu0 %539
        %543 = vset.pattern.permute.xlu0 0
        %544 = vperm.xlu0 %543, %v484
        %v545 = vpop.permute.xlu0 %544
        %548 = vset.pattern.permute.xlu0 0
        %549 = vperm.xlu0 %548, %v485
        %v550 = vpop.permute.xlu0 %549
        %553 = vset.pattern.permute.xlu0 0
        %554 = vperm.xlu0 %553, %v486
        %v555 = vpop.permute.xlu0 %554
        %558 = vset.pattern.permute.xlu0 0
        %559 = vperm.xlu0 %558, %v487
        %v560 = vpop.permute.xlu0 %559
        %563 = vset.pattern.permute.xlu0 0
        %564 = vperm.xlu0 %563, %v488
        %v565 = vpop.permute.xlu0 %564
        %568 = vset.pattern.permute.xlu0 0
        %569 = vperm.xlu0 %568, %v489
        %v570 = vpop.permute.xlu0 %569
        %vm572 = vcmask 64512
        %v574 = vsel %vm572, %v458, 0
        %v577 = vsel %vm572, %v459, 0
        %v580 = vsel %vm572, %v460, 0
        %v583 = vsel %vm572, %v461, 0
        %v586 = vsel %vm572, %v462, 0
        %v589 = vsel %vm572, %v463, 0
        %v592 = vsel %vm572, %v464, 0
        %v595 = vsel %vm572, %v465, 0
        %v598 = vsel %vm572, %v466, 0
        %v601 = vsel %vm572, %v467, 0
        %v604 = vsel %vm572, %v468, 0
        %v607 = vsel %vm572, %v469, 0
        %v610 = vsel %vm572, %v470, 0
        %v613 = vsel %vm572, %v471, 0
        %v616 = vsel %vm572, %v472, 0
        %v619 = vsel %vm572, %v473, 0
        %621 = vmatprep.subr.mxu0 %v457
        %622 = vmatpush1.msra.mxu0 %v456
        %623 = vmatprep.subr.mxu0 0.0
        %624 = vmatpush1.msra.mxu0 0.0
        %625 = vmatprep.subr.mxu0 0.0
        %626 = vmatpush1.msra.mxu0 0.0
        %627 = vmatprep.subr.mxu0 0.0
        %628 = vmatpush1.msra.mxu0 0.0
        %629 = vmatprep.subr.mxu0 0.0
        %630 = vmatpush1.msra.mxu0 0.0
        %631 = vmatprep.subr.mxu0 0.0
        %632 = vmatpush1.msra.mxu0 0.0
        %633 = vmatprep.subr.mxu0 0.0
        %634 = vmatpush1.msra.mxu0 0.0
        %635 = vmatprep.subr.mxu0 0.0
        %636 = vmatpush1.msra.mxu0 0.0
        %637 = vmatprep.subr.mxu0 0.0
        %638 = vmatpush1.msra.mxu0 0.0
        %639 = vmatprep.subr.mxu0 0.0
        %640 = vmatpush1.msra.mxu0 0.0
        %641 = vmatprep.subr.mxu0 0.0
        %642 = vmatpush1.msra.mxu0 0.0
        %643 = vmatprep.subr.mxu0 0.0
        %644 = vmatpush1.msra.mxu0 0.0
        %645 = vmatprep.subr.mxu0 0.0
        %646 = vmatpush1.msra.mxu0 0.0
        %647 = vmatprep.subr.mxu0 0.0
        %648 = vmatpush1.msra.mxu0 0.0
        %649 = vmatprep.subr.mxu0 0.0
        %650 = vmatpush1.msra.mxu0 0.0
        %651 = vmatprep.subr.mxu0 0.0
        %652 = vmatpush1.msra.mxu0 0.0
        %653 = vmatprep.subr.mxu0 0.0
        %654 = vmatpush1.msra.mxu0 0.0
        %655 = vmatprep.subr.mxu0 0.0
        %656 = vmatpush1.msra.mxu0 0.0
        %657 = vmatprep.subr.mxu0 0.0
        %658 = vmatpush1.msra.mxu0 0.0
        %659 = vmatprep.subr.mxu0 0.0
        %660 = vmatpush1.msra.mxu0 0.0
        %661 = vmatprep.subr.mxu0 0.0
        %662 = vmatpush1.msra.mxu0 0.0
        %663 = vmatprep.subr.mxu0 0.0
        %664 = vmatpush1.msra.mxu0 0.0
        %665 = vmatprep.subr.mxu0 0.0
        %666 = vmatpush1.msra.mxu0 0.0
        %667 = vmatprep.subr.mxu0 0.0
        %668 = vmatpush1.msra.mxu0 0.0
        %669 = vmatprep.subr.mxu0 0.0
        %670 = vmatpush1.msra.mxu0 0.0
        %671 = vmatprep.subr.mxu0 0.0
        %672 = vmatpush1.msra.mxu0 0.0
        %673 = vmatprep.subr.mxu0 0.0
        %674 = vmatpush1.msra.mxu0 0.0
        %675 = vmatprep.subr.mxu0 0.0
        %676 = vmatpush1.msra.mxu0 0.0
        %677 = vmatprep.subr.mxu0 0.0
        %678 = vmatpush1.msra.mxu0 0.0
        %679 = vmatprep.subr.mxu0 0.0
        %680 = vmatpush1.msra.mxu0 0.0
        %681 = vmatprep.subr.mxu0 0.0
        %682 = vmatpush1.msra.mxu0 0.0
        %683 = vmatprep.subr.mxu0 0.0
        %684 = vmatpush1.msra.mxu0 0.0
        %685 = vmatprep.mubr.f32.mxu0 0.0
        %686 = vmatmul.mubr.f32.gmra.mrb[0].mxu0 %v574
        %v687 = vpop.f32.mrb[0].mxu0
        %v688 = vadd.f32 %v495, %v687
        %v689 = vpop.f32.mrb[0].mxu0
        %v690 = vadd.f32 %v495, %v689
        %691 = vmatprep.mubr.f32.mxu0 0.0
        %692 = vmatmul.mubr.f32.gmra.mrb[0].mxu0 %v577
        %v693 = vpop.f32.mrb[0].mxu0
        %v694 = vadd.f32 %v500, %v693
        %v695 = vpop.f32.mrb[0].mxu0
        %v696 = vadd.f32 %v500, %v695
        %697 = vmatprep.mubr.f32.mxu0 0.0
        %698 = vmatmul.mubr.f32.gmra.mrb[0].mxu0 %v580
        %v699 = vpop.f32.mrb[0].mxu0
        %v700 = vadd.f32 %v505, %v699
        %v701 = vpop.f32.mrb[0].mxu0
        %v702 = vadd.f32 %v505, %v701
        %703 = vmatprep.mubr.f32.mxu0 0.0
        %704 = vmatmul.mubr.f32.gmra.mrb[0].mxu0 %v583
        %v705 = vpop.f32.mrb[0].mxu0
        %v706 = vadd.f32 %v510, %v705
        %v707 = vpop.f32.mrb[0].mxu0
        %v708 = vadd.f32 %v510, %v707
        %709 = vmatprep.mubr.f32.mxu0 0.0
        %710 = vmatmul.mubr.f32.gmra.mrb[0].mxu0 %v586
        %v711 = vpop.f32.mrb[0].mxu0
        %v712 = vadd.f32 %v515, %v711
        %v713 = vpop.f32.mrb[0].mxu0
        %v714 = vadd.f32 %v515, %v713
        %715 = vmatprep.mubr.f32.mxu0 0.0
        %716 = vmatmul.mubr.f32.gmra.mrb[0].mxu0 %v589
        %v717 = vpop.f32.mrb[0].mxu0
        %v718 = vadd.f32 %v520, %v717
        %v719 = vpop.f32.mrb[0].mxu0
        %v720 = vadd.f32 %v520, %v719
        %721 = vmatprep.mubr.f32.mxu0 0.0
        %722 = vmatmul.mubr.f32.gmra.mrb[0].mxu0 %v592
        %v723 = vpop.f32.mrb[0].mxu0
        %v724 = vadd.f32 %v525, %v723
        %v725 = vpop.f32.mrb[0].mxu0
        %v726 = vadd.f32 %v525, %v725
        %727 = vmatprep.mubr.f32.mxu0 0.0
        %728 = vmatmul.mubr.f32.gmra.mrb[0].mxu0 %v595
        %v729 = vpop.f32.mrb[0].mxu0
        %v730 = vadd.f32 %v530, %v729
        %v731 = vpop.f32.mrb[0].mxu0
        %v732 = vadd.f32 %v530, %v731
        %733 = vmatprep.mubr.f32.mxu0 0.0
        %734 = vmatmul.mubr.f32.gmra.mrb[0].mxu0 %v598
        %v735 = vpop.f32.mrb[0].mxu0
        %v736 = vadd.f32 %v535, %v735
        %v737 = vpop.f32.mrb[0].mxu0
        %v738 = vadd.f32 %v535, %v737
        %739 = vmatprep.mubr.f32.mxu0 0.0
        %740 = vmatmul.mubr.f32.gmra.mrb[0].mxu0 %v601
        %v741 = vpop.f32.mrb[0].mxu0
        %v742 = vadd.f32 %v540, %v741
        %v743 = vpop.f32.mrb[0].mxu0
        %v744 = vadd.f32 %v540, %v743
        %745 = vmatprep.mubr.f32.mxu0 0.0
        %746 = vmatmul.mubr.f32.gmra.mrb[0].mxu0 %v604
        %v747 = vpop.f32.mrb[0].mxu0
        %v748 = vadd.f32 %v545, %v747
        %v749 = vpop.f32.mrb[0].mxu0
        %v750 = vadd.f32 %v545, %v749
        %751 = vmatprep.mubr.f32.mxu0 0.0
        %752 = vmatmul.mubr.f32.gmra.mrb[0].mxu0 %v607
        %v753 = vpop.f32.mrb[0].mxu0
        %v754 = vadd.f32 %v550, %v753
        %v755 = vpop.f32.mrb[0].mxu0
        %v756 = vadd.f32 %v550, %v755
        %757 = vmatprep.mubr.f32.mxu0 0.0
        %758 = vmatmul.mubr.f32.gmra.mrb[0].mxu0 %v610
        %v759 = vpop.f32.mrb[0].mxu0
        %v760 = vadd.f32 %v555, %v759
        %v761 = vpop.f32.mrb[0].mxu0
        %v762 = vadd.f32 %v555, %v761
        %763 = vmatprep.mubr.f32.mxu0 0.0
        %764 = vmatmul.mubr.f32.gmra.mrb[0].mxu0 %v613
        %v765 = vpop.f32.mrb[0].mxu0
        %v766 = vadd.f32 %v560, %v765
        %v767 = vpop.f32.mrb[0].mxu0
        %v768 = vadd.f32 %v560, %v767
        %769 = vmatprep.mubr.f32.mxu0 0.0
        %770 = vmatmul.mubr.f32.gmra.mrb[0].mxu0 %v616
        %v771 = vpop.f32.mrb[0].mxu0
        %v772 = vadd.f32 %v565, %v771
        %v773 = vpop.f32.mrb[0].mxu0
        %v774 = vadd.f32 %v565, %v773
        %775 = vmatprep.mubr.f32.mxu0 0.0
        %776 = vmatmul.mubr.f32.gmra.mrb[0].mxu0 %v619
        %v777 = vpop.f32.mrb[0].mxu0
        %v778 = vadd.f32 %v570, %v777
        %v779 = vpop.f32.mrb[0].mxu0
        %v780 = vadd.f32 %v570, %v779
        %781 = vdwg.mxu0
        %v782 = vmax.f32 %v688, 0.0
        %v783 = vmax.f32 %v690, 0.0
        %v784 = vmax.f32 %v694, 0.0
        %v785 = vmax.f32 %v696, 0.0
        %v786 = vmax.f32 %v700, 0.0
        %v787 = vmax.f32 %v702, 0.0
        %v788 = vmax.f32 %v706, 0.0
        %v789 = vmax.f32 %v708, 0.0
        %v790 = vmax.f32 %v712, 0.0
        %v791 = vmax.f32 %v714, 0.0
        %v792 = vmax.f32 %v718, 0.0
        %v793 = vmax.f32 %v720, 0.0
        %v794 = vmax.f32 %v724, 0.0
        %v795 = vmax.f32 %v726, 0.0
        %v796 = vmax.f32 %v730, 0.0
        %v797 = vmax.f32 %v732, 0.0
        %v798 = vmax.f32 %v736, 0.0
        %v799 = vmax.f32 %v738, 0.0
        %v800 = vmax.f32 %v742, 0.0
        %v801 = vmax.f32 %v744, 0.0
        %v802 = vmax.f32 %v748, 0.0
        %v803 = vmax.f32 %v750, 0.0
        %v804 = vmax.f32 %v754, 0.0
        %v805 = vmax.f32 %v756, 0.0
        %v806 = vmax.f32 %v760, 0.0
        %v807 = vmax.f32 %v762, 0.0
        %v808 = vmax.f32 %v766, 0.0
        %v809 = vmax.f32 %v768, 0.0
        %v810 = vmax.f32 %v772, 0.0
        %v811 = vmax.f32 %v774, 0.0
        %v812 = vmax.f32 %v778, 0.0
        %v813 = vmax.f32 %v780, 0.0
        %v814 = vstv %s491
        %815 = vmatprep.subr.mxu0 %v783
        %816 = vmatpush1.msra.mxu0 %v782
        %817 = vmatprep.subr.mxu0 %v785
        %818 = vmatpush1.msra.mxu0 %v784
        %819 = vmatprep.subr.mxu0 %v787
        %820 = vmatpush1.msra.mxu0 %v786
        %821 = vmatprep.subr.mxu0 %v789
        %822 = vmatpush1.msra.mxu0 %v788
        %823 = vmatprep.subr.mxu0 %v791
        %824 = vmatpush1.msra.mxu0 %v790
        %825 = vmatprep.subr.mxu0 %v793
        %826 = vmatpush1.msra.mxu0 %v792
        %827 = vmatprep.subr.mxu0 %v795
        %828 = vmatpush1.msra.mxu0 %v794
        %829 = vmatprep.subr.mxu0 %v797
        %830 = vmatpush1.msra.mxu0 %v796
        %831 = vmatprep.subr.mxu0 %v799
        %832 = vmatpush1.msra.mxu0 %v798
        %833 = vmatprep.subr.mxu0 %v801
        %834 = vmatpush1.msra.mxu0 %v800
        %835 = vmatprep.subr.mxu0 %v803
        %836 = vmatpush1.msra.mxu0 %v802
        %837 = vmatprep.subr.mxu0 %v805
        %838 = vmatpush1.msra.mxu0 %v804
        %839 = vmatprep.subr.mxu0 %v807
        %840 = vmatpush1.msra.mxu0 %v806
        %841 = vmatprep.subr.mxu0 %v809
        %842 = vmatpush1.msra.mxu0 %v808
        %843 = vmatprep.subr.mxu0 %v811
        %844 = vmatpush1.msra.mxu0 %v810
        %845 = vmatprep.subr.mxu0 %v813
        %846 = vmatpush1.msra.mxu0 %v812
        %847 = vmatprep.subr.mxu0 0.0
        %848 = vmatpush1.msra.mxu0 0.0
        %849 = vmatprep.subr.mxu0 0.0
        %850 = vmatpush1.msra.mxu0 0.0
        %851 = vmatprep.subr.mxu0 0.0
        %852 = vmatpush1.msra.mxu0 0.0
        %853 = vmatprep.subr.mxu0 0.0
        %854 = vmatpush1.msra.mxu0 0.0
        %855 = vmatprep.subr.mxu0 0.0
        %856 = vmatpush1.msra.mxu0 0.0
        %857 = vmatprep.subr.mxu0 0.0
        %858 = vmatpush1.msra.mxu0 0.0
        %859 = vmatprep.subr.mxu0 0.0
        %860 = vmatpush1.msra.mxu0 0.0
        %861 = vmatprep.subr.mxu0 0.0
        %862 = vmatpush1.msra.mxu0 0.0
        %863 = vmatprep.subr.mxu0 0.0
        %864 = vmatpush1.msra.mxu0 0.0
        %865 = vmatprep.subr.mxu0 0.0
        %866 = vmatpush1.msra.mxu0 0.0
        %867 = vmatprep.subr.mxu0 0.0
        %868 = vmatpush1.msra.mxu0 0.0
        %869 = vmatprep.subr.mxu0 0.0
        %870 = vmatpush1.msra.mxu0 0.0
        %871 = vmatprep.subr.mxu0 0.0
        %872 = vmatpush1.msra.mxu0 0.0
        %873 = vmatprep.subr.mxu0 0.0
        %874 = vmatpush1.msra.mxu0 0.0
        %875 = vmatprep.subr.mxu0 0.0
        %876 = vmatpush1.msra.mxu0 0.0
        %877 = vmatprep.subr.mxu0 0.0
        %878 = vmatpush1.msra.mxu0 0.0
        %879 = vmatprep.mubr.f32.mxu0 0.0
        %880 = vmatmul.mubr.f32.gmra.mrb[0].mxu0 %v490
        %v881 = vpop.f32.mrb[0].mxu0
        %v882 = vadd.f32 %v814, %v881
        %v883 = vpop.f32.mrb[0].mxu0
        %v884 = vadd.f32 %v814, %v883
        %885 = vdwg.mxu0
        %v886 = vxor.u32 %v882, 2147483648
        %v887 = vxor.u32 %v884, 2147483648
        %v888 = vmul.f32 %v886, 1.442695
        %v889 = vpow.pop %v888
        %v890 = vmul.f32 %v887, 1.442695
        %v891 = vpow.pop %v890
        %v892 = vadd.f32 %v889, 1.0
        %v893 = vadd.f32 %v891, 1.0
        %v894 = vrcp.pop %v892
        %v895 = vmul.f32 1.0, %v894
        %v896 = vrcp.pop %v893
        %v897 = vmul.f32 1.0, %v896
        %v898 = vld [vmem:[%s442] sm:$0xff]
        %v899 = vmul.f32 %v454, %v895
        %v900 = vmul.f32 %v455, %v897
        %v901 = vadd.f32 %v899, %v900
        %902 = vadd.xlane.f32.xlu0 %v901
        %v903 = vpop.xlane.xlu0 %902
        %v904 = vadd.f32 %v898, %v903
        %vm905 = vcmask 7168
        %906 = vst.msk [vmem:[%s442] sm:$0xff] %vm905, %v904
        %v907 = vld [vmem:[%s5] sm:$0xff]
        %v908 = vld [vmem:[%s5 + $0x8] sm:$0xff]
        %v909 = vld [vmem:[%s5 + $0x10] sm:$0xff]
        %v910 = vld [vmem:[%s5 + $0x18] sm:$0xff]
        %v911 = vld [vmem:[%s5 + $0x20] sm:$0xff]
        %v912 = vld [vmem:[%s5 + $0x28] sm:$0xff]
        %v913 = vld [vmem:[%s5 + $0x30] sm:$0xff]
        %v914 = vld [vmem:[%s5 + $0x38] sm:$0xff]
        %v915 = vld [vmem:[%s5 + $0x40] sm:$0xff]
        %v916 = vld [vmem:[%s5 + $0x48] sm:$0xff]
        %v917 = vld [vmem:[%s5 + $0x50] sm:$0xff]
        %v918 = vld [vmem:[%s5 + $0x58] sm:$0xff]
        %v919 = vld [vmem:[%s5 + $0x60] sm:$0xff]
        %v920 = vld [vmem:[%s5 + $0x68] sm:$0xff]
        %v921 = vld [vmem:[%s5 + $0x70] sm:$0xff]
        %v922 = vld [vmem:[%s5 + $0x78] sm:$0xff]
        %v923 = vld [vmem:[%s6] sm:$0xff]
        %v924 = vld [vmem:[%s6 + $0x8] sm:$0xff]
        %v925 = vld [vmem:[%s6 + $0x10] sm:$0xff]
        %v926 = vld [vmem:[%s6 + $0x18] sm:$0xff]
        %v927 = vld [vmem:[%s6 + $0x20] sm:$0xff]
        %v928 = vld [vmem:[%s6 + $0x28] sm:$0xff]
        %v929 = vld [vmem:[%s6 + $0x30] sm:$0xff]
        %v930 = vld [vmem:[%s6 + $0x38] sm:$0xff]
        %v931 = vld [vmem:[%s6 + $0x40] sm:$0xff]
        %v932 = vld [vmem:[%s6 + $0x48] sm:$0xff]
        %v933 = vld [vmem:[%s6 + $0x50] sm:$0xff]
        %v934 = vld [vmem:[%s6 + $0x58] sm:$0xff]
        %v935 = vld [vmem:[%s6 + $0x60] sm:$0xff]
        %v936 = vld [vmem:[%s6 + $0x68] sm:$0xff]
        %v937 = vld [vmem:[%s6 + $0x70] sm:$0xff]
        %v938 = vld [vmem:[%s6 + $0x78] sm:$0xff]
        %v939 = vld [vmem:[%s7] sm:$0xff]
        %s940 = sld [smem:[#allocation2 + $0x1]]
        %942 = vset.pattern.permute.xlu0 0
        %943 = vperm.xlu0 %942, %v923
        %v944 = vpop.permute.xlu0 %943
        %947 = vset.pattern.permute.xlu0 0
        %948 = vperm.xlu0 %947, %v924
        %v949 = vpop.permute.xlu0 %948
        %952 = vset.pattern.permute.xlu0 0
        %953 = vperm.xlu0 %952, %v925
        %v954 = vpop.permute.xlu0 %953
        %957 = vset.pattern.permute.xlu0 0
        %958 = vperm.xlu0 %957, %v926
        %v959 = vpop.permute.xlu0 %958
        %962 = vset.pattern.permute.xlu0 0
        %963 = vperm.xlu0 %962, %v927
        %v964 = vpop.permute.xlu0 %963
        %967 = vset.pattern.permute.xlu0 0
        %968 = vperm.xlu0 %967, %v928
        %v969 = vpop.permute.xlu0 %968
        %972 = vset.pattern.permute.xlu0 0
        %973 = vperm.xlu0 %972, %v929
        %v974 = vpop.permute.xlu0 %973
        %977 = vset.pattern.permute.xlu0 0
        %978 = vperm.xlu0 %977, %v930
        %v979 = vpop.permute.xlu0 %978
        %982 = vset.pattern.permute.xlu0 0
        %983 = vperm.xlu0 %982, %v931
        %v984 = vpop.permute.xlu0 %983
        %987 = vset.pattern.permute.xlu0 0
        %988 = vperm.xlu0 %987, %v932
        %v989 = vpop.permute.xlu0 %988
        %992 = vset.pattern.permute.xlu0 0
        %993 = vperm.xlu0 %992, %v933
        %v994 = vpop.permute.xlu0 %993
        %997 = vset.pattern.permute.xlu0 0
        %998 = vperm.xlu0 %997, %v934
        %v999 = vpop.permute.xlu0 %998
        %1002 = vset.pattern.permute.xlu0 0
        %1003 = vperm.xlu0 %1002, %v935
        %v1004 = vpop.permute.xlu0 %1003
        %1007 = vset.pattern.permute.xlu0 0
        %1008 = vperm.xlu0 %1007, %v936
        %v1009 = vpop.permute.xlu0 %1008
        %1012 = vset.pattern.permute.xlu0 0
        %1013 = vperm.xlu0 %1012, %v937
        %v1014 = vpop.permute.xlu0 %1013
        %1017 = vset.pattern.permute.xlu0 0
        %1018 = vperm.xlu0 %1017, %v938
        %v1019 = vpop.permute.xlu0 %1018
        %v1022 = vsel %vm572, %v907, 0
        %v1025 = vsel %vm572, %v908, 0
        %v1028 = vsel %vm572, %v909, 0
        %v1031 = vsel %vm572, %v910, 0
        %v1034 = vsel %vm572, %v911, 0
        %v1037 = vsel %vm572, %v912, 0
        %v1040 = vsel %vm572, %v913, 0
        %v1043 = vsel %vm572, %v914, 0
        %v1046 = vsel %vm572, %v915, 0
        %v1049 = vsel %vm572, %v916, 0
        %v1052 = vsel %vm572, %v917, 0
        %v1055 = vsel %vm572, %v918, 0
        %v1058 = vsel %vm572, %v919, 0
        %v1061 = vsel %vm572, %v920, 0
        %v1064 = vsel %vm572, %v921, 0
        %v1067 = vsel %vm572, %v922, 0
        %1069 = vmatprep.subr.mxu0 %v455
        %1070 = vmatpush1.msra.mxu0 %v454
        %1071 = vmatprep.subr.mxu0 0.0
        %1072 = vmatpush1.msra.mxu0 0.0
        %1073 = vmatprep.subr.mxu0 0.0
        %1074 = vmatpush1.msra.mxu0 0.0
        %1075 = vmatprep.subr.mxu0 0.0
        %1076 = vmatpush1.msra.mxu0 0.0
        %1077 = vmatprep.subr.mxu0 0.0
        %1078 = vmatpush1.msra.mxu0 0.0
        %1079 = vmatprep.subr.mxu0 0.0
        %1080 = vmatpush1.msra.mxu0 0.0
        %1081 = vmatprep.subr.mxu0 0.0
        %1082 = vmatpush1.msra.mxu0 0.0
        %1083 = vmatprep.subr.mxu0 0.0
        %1084 = vmatpush1.msra.mxu0 0.0
        %1085 = vmatprep.subr.mxu0 0.0
        %1086 = vmatpush1.msra.mxu0 0.0
        %1087 = vmatprep.subr.mxu0 0.0
        %1088 = vmatpush1.msra.mxu0 0.0
        %1089 = vmatprep.subr.mxu0 0.0
        %1090 = vmatpush1.msra.mxu0 0.0
        %1091 = vmatprep.subr.mxu0 0.0
        %1092 = vmatpush1.msra.mxu0 0.0
        %1093 = vmatprep.subr.mxu0 0.0
        %1094 = vmatpush1.msra.mxu0 0.0
        %1095 = vmatprep.subr.mxu0 0.0
        %1096 = vmatpush1.msra.mxu0 0.0
        %1097 = vmatprep.subr.mxu0 0.0
        %1098 = vmatpush1.msra.mxu0 0.0
        %1099 = vmatprep.subr.mxu0 0.0
        %1100 = vmatpush1.msra.mxu0 0.0
        %1101 = vmatprep.subr.mxu0 0.0
        %1102 = vmatpush1.msra.mxu0 0.0
        %1103 = vmatprep.subr.mxu0 0.0
        %1104 = vmatpush1.msra.mxu0 0.0
        %1105 = vmatprep.subr.mxu0 0.0
        %1106 = vmatpush1.msra.mxu0 0.0
        %1107 = vmatprep.subr.mxu0 0.0
        %1108 = vmatpush1.msra.mxu0 0.0
        %1109 = vmatprep.subr.mxu0 0.0
        %1110 = vmatpush1.msra.mxu0 0.0
        %1111 = vmatprep.subr.mxu0 0.0
        %1112 = vmatpush1.msra.mxu0 0.0
        %1113 = vmatprep.subr.mxu0 0.0
        %1114 = vmatpush1.msra.mxu0 0.0
        %1115 = vmatprep.subr.mxu0 0.0
        %1116 = vmatpush1.msra.mxu0 0.0
        %1117 = vmatprep.subr.mxu0 0.0
        %1118 = vmatpush1.msra.mxu0 0.0
        %1119 = vmatprep.subr.mxu0 0.0
        %1120 = vmatpush1.msra.mxu0 0.0
        %1121 = vmatprep.subr.mxu0 0.0
        %1122 = vmatpush1.msra.mxu0 0.0
        %1123 = vmatprep.subr.mxu0 0.0
        %1124 = vmatpush1.msra.mxu0 0.0
        %1125 = vmatprep.subr.mxu0 0.0
        %1126 = vmatpush1.msra.mxu0 0.0
        %1127 = vmatprep.subr.mxu0 0.0
        %1128 = vmatpush1.msra.mxu0 0.0
        %1129 = vmatprep.subr.mxu0 0.0
        %1130 = vmatpush1.msra.mxu0 0.0
        %1131 = vmatprep.subr.mxu0 0.0
        %1132 = vmatpush1.msra.mxu0 0.0
        %1133 = vmatprep.mubr.f32.mxu0 0.0
        %1134 = vmatmul.mubr.f32.gmra.mrb[0].mxu0 %v1022
        %v1135 = vpop.f32.mrb[0].mxu0
        %v1136 = vadd.f32 %v944, %v1135
        %v1137 = vpop.f32.mrb[0].mxu0
        %v1138 = vadd.f32 %v944, %v1137
        %1139 = vmatprep.mubr.f32.mxu0 0.0
        %1140 = vmatmul.mubr.f32.gmra.mrb[0].mxu0 %v1025
        %v1141 = vpop.f32.mrb[0].mxu0
        %v1142 = vadd.f32 %v949, %v1141
        %v1143 = vpop.f32.mrb[0].mxu0
        %v1144 = vadd.f32 %v949, %v1143
        %1145 = vmatprep.mubr.f32.mxu0 0.0
        %1146 = vmatmul.mubr.f32.gmra.mrb[0].mxu0 %v1028
        %v1147 = vpop.f32.mrb[0].mxu0
        %v1148 = vadd.f32 %v954, %v1147
        %v1149 = vpop.f32.mrb[0].mxu0
        %v1150 = vadd.f32 %v954, %v1149
        %1151 = vmatprep.mubr.f32.mxu0 0.0
        %1152 = vmatmul.mubr.f32.gmra.mrb[0].mxu0 %v1031
        %v1153 = vpop.f32.mrb[0].mxu0
        %v1154 = vadd.f32 %v959, %v1153
        %v1155 = vpop.f32.mrb[0].mxu0
        %v1156 = vadd.f32 %v959, %v1155
        %1157 = vmatprep.mubr.f32.mxu0 0.0
        %1158 = vmatmul.mubr.f32.gmra.mrb[0].mxu0 %v1034
        %v1159 = vpop.f32.mrb[0].mxu0
        %v1160 = vadd.f32 %v964, %v1159
        %v1161 = vpop.f32.mrb[0].mxu0
        %v1162 = vadd.f32 %v964, %v1161
        %1163 = vmatprep.mubr.f32.mxu0 0.0
        %1164 = vmatmul.mubr.f32.gmra.mrb[0].mxu0 %v1037
        %v1165 = vpop.f32.mrb[0].mxu0
        %v1166 = vadd.f32 %v969, %v1165
        %v1167 = vpop.f32.mrb[0].mxu0
        %v1168 = vadd.f32 %v969, %v1167
        %1169 = vmatprep.mubr.f32.mxu0 0.0
        %1170 = vmatmul.mubr.f32.gmra.mrb[0].mxu0 %v1040
        %v1171 = vpop.f32.mrb[0].mxu0
        %v1172 = vadd.f32 %v974, %v1171
        %v1173 = vpop.f32.mrb[0].mxu0
        %v1174 = vadd.f32 %v974, %v1173
        %1175 = vmatprep.mubr.f32.mxu0 0.0
        %1176 = vmatmul.mubr.f32.gmra.mrb[0].mxu0 %v1043
        %v1177 = vpop.f32.mrb[0].mxu0
        %v1178 = vadd.f32 %v979, %v1177
        %v1179 = vpop.f32.mrb[0].mxu0
        %v1180 = vadd.f32 %v979, %v1179
        %1181 = vmatprep.mubr.f32.mxu0 0.0
        %1182 = vmatmul.mubr.f32.gmra.mrb[0].mxu0 %v1046
        %v1183 = vpop.f32.mrb[0].mxu0
        %v1184 = vadd.f32 %v984, %v1183
        %v1185 = vpop.f32.mrb[0].mxu0
        %v1186 = vadd.f32 %v984, %v1185
        %1187 = vmatprep.mubr.f32.mxu0 0.0
        %1188 = vmatmul.mubr.f32.gmra.mrb[0].mxu0 %v1049
        %v1189 = vpop.f32.mrb[0].mxu0
        %v1190 = vadd.f32 %v989, %v1189
        %v1191 = vpop.f32.mrb[0].mxu0
        %v1192 = vadd.f32 %v989, %v1191
        %1193 = vmatprep.mubr.f32.mxu0 0.0
        %1194 = vmatmul.mubr.f32.gmra.mrb[0].mxu0 %v1052
        %v1195 = vpop.f32.mrb[0].mxu0
        %v1196 = vadd.f32 %v994, %v1195
        %v1197 = vpop.f32.mrb[0].mxu0
        %v1198 = vadd.f32 %v994, %v1197
        %1199 = vmatprep.mubr.f32.mxu0 0.0
        %1200 = vmatmul.mubr.f32.gmra.mrb[0].mxu0 %v1055
        %v1201 = vpop.f32.mrb[0].mxu0
        %v1202 = vadd.f32 %v999, %v1201
        %v1203 = vpop.f32.mrb[0].mxu0
        %v1204 = vadd.f32 %v999, %v1203
        %1205 = vmatprep.mubr.f32.mxu0 0.0
        %1206 = vmatmul.mubr.f32.gmra.mrb[0].mxu0 %v1058
        %v1207 = vpop.f32.mrb[0].mxu0
        %v1208 = vadd.f32 %v1004, %v1207
        %v1209 = vpop.f32.mrb[0].mxu0
        %v1210 = vadd.f32 %v1004, %v1209
        %1211 = vmatprep.mubr.f32.mxu0 0.0
        %1212 = vmatmul.mubr.f32.gmra.mrb[0].mxu0 %v1061
        %v1213 = vpop.f32.mrb[0].mxu0
        %v1214 = vadd.f32 %v1009, %v1213
        %v1215 = vpop.f32.mrb[0].mxu0
        %v1216 = vadd.f32 %v1009, %v1215
        %1217 = vmatprep.mubr.f32.mxu0 0.0
        %1218 = vmatmul.mubr.f32.gmra.mrb[0].mxu0 %v1064
        %v1219 = vpop.f32.mrb[0].mxu0
        %v1220 = vadd.f32 %v1014, %v1219
        %v1221 = vpop.f32.mrb[0].mxu0
        %v1222 = vadd.f32 %v1014, %v1221
        %1223 = vmatprep.mubr.f32.mxu0 0.0
        %1224 = vmatmul.mubr.f32.gmra.mrb[0].mxu0 %v1067
        %v1225 = vpop.f32.mrb[0].mxu0
        %v1226 = vadd.f32 %v1019, %v1225
        %v1227 = vpop.f32.mrb[0].mxu0
        %v1228 = vadd.f32 %v1019, %v1227
        %1229 = vdwg.mxu0
        %v1230 = vmax.f32 %v1136, 0.0
        %v1231 = vmax.f32 %v1138, 0.0
        %v1232 = vmax.f32 %v1142, 0.0
        %v1233 = vmax.f32 %v1144, 0.0
        %v1234 = vmax.f32 %v1148, 0.0
        %v1235 = vmax.f32 %v1150, 0.0
        %v1236 = vmax.f32 %v1154, 0.0
        %v1237 = vmax.f32 %v1156, 0.0
        %v1238 = vmax.f32 %v1160, 0.0
        %v1239 = vmax.f32 %v1162, 0.0
        %v1240 = vmax.f32 %v1166, 0.0
        %v1241 = vmax.f32 %v1168, 0.0
        %v1242 = vmax.f32 %v1172, 0.0
        %v1243 = vmax.f32 %v1174, 0.0
        %v1244 = vmax.f32 %v1178, 0.0
        %v1245 = vmax.f32 %v1180, 0.0
        %v1246 = vmax.f32 %v1184, 0.0
        %v1247 = vmax.f32 %v1186, 0.0
        %v1248 = vmax.f32 %v1190, 0.0
        %v1249 = vmax.f32 %v1192, 0.0
        %v1250 = vmax.f32 %v1196, 0.0
        %v1251 = vmax.f32 %v1198, 0.0
        %v1252 = vmax.f32 %v1202, 0.0
        %v1253 = vmax.f32 %v1204, 0.0
        %v1254 = vmax.f32 %v1208, 0.0
        %v1255 = vmax.f32 %v1210, 0.0
        %v1256 = vmax.f32 %v1214, 0.0
        %v1257 = vmax.f32 %v1216, 0.0
        %v1258 = vmax.f32 %v1220, 0.0
        %v1259 = vmax.f32 %v1222, 0.0
        %v1260 = vmax.f32 %v1226, 0.0
        %v1261 = vmax.f32 %v1228, 0.0
        %v1262 = vstv %s940
        %1263 = vmatprep.subr.mxu0 %v1231
        %1264 = vmatpush1.msra.mxu0 %v1230
        %1265 = vmatprep.subr.mxu0 %v1233
        %1266 = vmatpush1.msra.mxu0 %v1232
        %1267 = vmatprep.subr.mxu0 %v1235
        %1268 = vmatpush1.msra.mxu0 %v1234
        %1269 = vmatprep.subr.mxu0 %v1237
        %1270 = vmatpush1.msra.mxu0 %v1236
        %1271 = vmatprep.subr.mxu0 %v1239
        %1272 = vmatpush1.msra.mxu0 %v1238
        %1273 = vmatprep.subr.mxu0 %v1241
        %1274 = vmatpush1.msra.mxu0 %v1240
        %1275 = vmatprep.subr.mxu0 %v1243
        %1276 = vmatpush1.msra.mxu0 %v1242
        %1277 = vmatprep.subr.mxu0 %v1245
        %1278 = vmatpush1.msra.mxu0 %v1244
        %1279 = vmatprep.subr.mxu0 %v1247
        %1280 = vmatpush1.msra.mxu0 %v1246
        %1281 = vmatprep.subr.mxu0 %v1249
        %1282 = vmatpush1.msra.mxu0 %v1248
        %1283 = vmatprep.subr.mxu0 %v1251
        %1284 = vmatpush1.msra.mxu0 %v1250
        %1285 = vmatprep.subr.mxu0 %v1253
        %1286 = vmatpush1.msra.mxu0 %v1252
        %1287 = vmatprep.subr.mxu0 %v1255
        %1288 = vmatpush1.msra.mxu0 %v1254
        %1289 = vmatprep.subr.mxu0 %v1257
        %1290 = vmatpush1.msra.mxu0 %v1256
        %1291 = vmatprep.subr.mxu0 %v1259
        %1292 = vmatpush1.msra.mxu0 %v1258
        %1293 = vmatprep.subr.mxu0 %v1261
        %1294 = vmatpush1.msra.mxu0 %v1260
        %1295 = vmatprep.subr.mxu0 0.0
        %1296 = vmatpush1.msra.mxu0 0.0
        %1297 = vmatprep.subr.mxu0 0.0
        %1298 = vmatpush1.msra.mxu0 0.0
        %1299 = vmatprep.subr.mxu0 0.0
        %1300 = vmatpush1.msra.mxu0 0.0
        %1301 = vmatprep.subr.mxu0 0.0
        %1302 = vmatpush1.msra.mxu0 0.0
        %1303 = vmatprep.subr.mxu0 0.0
        %1304 = vmatpush1.msra.mxu0 0.0
        %1305 = vmatprep.subr.mxu0 0.0
        %1306 = vmatpush1.msra.mxu0 0.0
        %1307 = vmatprep.subr.mxu0 0.0
        %1308 = vmatpush1.msra.mxu0 0.0
        %1309 = vmatprep.subr.mxu0 0.0
        %1310 = vmatpush1.msra.mxu0 0.0
        %1311 = vmatprep.subr.mxu0 0.0
        %1312 = vmatpush1.msra.mxu0 0.0
        %1313 = vmatprep.subr.mxu0 0.0
        %1314 = vmatpush1.msra.mxu0 0.0
        %1315 = vmatprep.subr.mxu0 0.0
        %1316 = vmatpush1.msra.mxu0 0.0
        %1317 = vmatprep.subr.mxu0 0.0
        %1318 = vmatpush1.msra.mxu0 0.0
        %1319 = vmatprep.subr.mxu0 0.0
        %1320 = vmatpush1.msra.mxu0 0.0
        %1321 = vmatprep.subr.mxu0 0.0
        %1322 = vmatpush1.msra.mxu0 0.0
        %1323 = vmatprep.subr.mxu0 0.0
        %1324 = vmatpush1.msra.mxu0 0.0
        %1325 = vmatprep.subr.mxu0 0.0
        %1326 = vmatpush1.msra.mxu0 0.0
        %1327 = vmatprep.mubr.f32.mxu0 0.0
        %1328 = vmatmul.mubr.f32.gmra.mrb[0].mxu0 %v939
        %v1329 = vpop.f32.mrb[0].mxu0
        %v1330 = vadd.f32 %v1262, %v1329
        %v1331 = vpop.f32.mrb[0].mxu0
        %v1332 = vadd.f32 %v1262, %v1331
        %1333 = vdwg.mxu0
        %v1334 = vxor.u32 %v1330, 2147483648
        %v1335 = vxor.u32 %v1332, 2147483648
        %v1336 = vmul.f32 %v1334, 1.442695
        %v1337 = vpow.pop %v1336
        %v1338 = vmul.f32 %v1335, 1.442695
        %v1339 = vpow.pop %v1338
        %v1340 = vadd.f32 %v1337, 1.0
        %v1341 = vadd.f32 %v1339, 1.0
        %v1342 = vrcp.pop %v1340
        %v1343 = vmul.f32 1.0, %v1342
        %v1344 = vrcp.pop %v1341
        %v1345 = vmul.f32 1.0, %v1344
        %v1346 = vld [vmem:[%s446] sm:$0xff]
        %v1347 = vmul.f32 %v456, %v1343
        %v1348 = vmul.f32 %v457, %v1345
        %v1349 = vadd.f32 %v1347, %v1348
        %1350 = vadd.xlane.f32.xlu0 %v1349
        %v1351 = vpop.xlane.xlu0 %1350
        %v1352 = vadd.f32 %v1346, %v1351
        %1353 = vst.msk [vmem:[%s446] sm:$0xff] %vm905, %v1352
        %p1354 = scmp.lt.s32.totalorder %s27, 1
        %s1355 = scalar_select %p1354, %s27, 1
        %s1356 = smul.addr %s1355, 8
        %s1357 = scalar_lea.vmem %s9, %s1356
        %p1358 = scmp.lt.s32.totalorder %s27, 1
        %s1359 = scalar_select %p1358, %s27, 1
        %s1360 = smul.addr %s1359, 8
        %s1361 = scalar_lea.vmem %s10, %s1360
        // Predicated region
        $region65: #{_scma_impl.2} parent=55 // pred_check
          %p1362 = pneg %p256
        $region66: #{_scma_impl.2} parent=55 // pred_check_branch
          %1364 = sbr.rel (%p1362) target = $region68
        $region67: #{_scma_impl.2} parent=55 // pred_region
          _
        $region68: #{_scma_impl.2} parent=55 // pred_fallthru
          _
        // Predicated region
        $region69: #{_scma_impl.2} parent=55 // pred_check
          %p1365 = pneg %p282
        $region70: #{_scma_impl.2} parent=55 // pred_check_branch
          %1367 = sbr.rel (%p1365) target = $region72
        $region71: #{_scma_impl.2} parent=55 // pred_region
          _
        $region72: #{_scma_impl.2} parent=55 // pred_fallthru
          _
      $region56: #{_scma_impl.2} parent=5 // pred_fallthru
        _
      %p1368 = scmp.le.s32.totalorder 2, %s18
      // Predicated region
      $region73: #{_scma_impl.2} parent=5 // pred_check
        %p1369 = pneg %p1368
      $region74: #{_scma_impl.2} parent=5 // pred_check_branch
        %1371 = sbr.rel (%p1369) target = $region76
      $region75: #{_scma_impl.2} parent=5 // pred_region
        %s1372 = ssub.s32 %s18, 2
        // Predicated region
        $region77: #{_scma_impl.2} parent=75 // pred_check
          %p1373 = pneg %p262
        $region78: #{_scma_impl.2} parent=75 // pred_check_branch
          %1375 = sbr.rel (%p1373) target = $region80
        $region79: #{_scma_impl.2} parent=75 // pred_region
          %p1376 = scmp.lt.s32.totalorder %s29, 1
          %s1377 = scalar_select %p1376, %s29, 1
          %s1378 = smul.addr %s1377, 8
          %s1379 = scalar_lea.vmem %s9, %s1378
        $region80: #{_scma_impl.2} parent=75 // pred_fallthru
          _
        // Predicated region
        $region81: #{_scma_impl.2} parent=75 // pred_check
          %p1380 = pneg %p288
        $region82: #{_scma_impl.2} parent=75 // pred_check_branch
          %1382 = sbr.rel (%p1380) target = $region84
        $region83: #{_scma_impl.2} parent=75 // pred_region
          %p1383 = scmp.lt.s32.totalorder %s29, 1
          %s1384 = scalar_select %p1383, %s29, 1
          %s1385 = smul.addr %s1384, 8
          %s1386 = scalar_lea.vmem %s10, %s1385
        $region84: #{_scma_impl.2} parent=75 // pred_fallthru
          _
      $region76: #{_scma_impl.2} parent=5 // pred_fallthru
        _
    $region6: #{_scma_impl.2} parent=1 // loop_footer
      %s22 = sadd.s32 1, %s18
    $region7: #{_scma_impl.2} parent=1 // loop_footer_branch
      %17 = sbr.rel target = $region3
    $region8: #{_scma_impl.2} parent=1 // loop_exit
      _
    %1387 = vsyncpa [#allocation3], 1
    %s1388 = scalar_lea.sflag [#allocation3], 1
    %1389 = vsyncpa %s1388, 1

// kernel: _scma_impl.3
$region0: #{_scma_impl.3}
  #allocation0 [shape = 'u32[]', space=smem, size = 0x4, offset = 0x4, fixed_abs, tag = 'smem constant byte address 0x4 - core index']
  #allocation1 [shape = 'u32[144,128]{1,0:T(1,128)}', space=vmem, size = 0x12000, scoped, tag = 'internal scratch']
  %s0 = inlined_call_operand.vmem [shape: f32[16,256], index: 0, kind: input, shape index: {}]
  %s1 = inlined_call_operand.vmem [shape: f32[16,256], index: 1, kind: input, shape index: {}]
  %s2 = inlined_call_operand.vmem [shape: f32[128,8], index: 2, kind: input, shape index: {}]
  %s3 = inlined_call_operand.vmem [shape: f32[128,1], index: 3, kind: input, shape index: {}]
  %s4 = inlined_call_operand.vmem [shape: f32[8,128], index: 4, kind: input, shape index: {}]
  %s5 = inlined_call_operand.vmem [shape: f32[128,8], index: 5, kind: input, shape index: {}]
  %s6 = inlined_call_operand.vmem [shape: f32[128,1], index: 6, kind: input, shape index: {}]
  %s7 = inlined_call_operand.vmem [shape: f32[8,128], index: 7, kind: input, shape index: {}]
  %s8 = inlined_call_operand.vmem [shape: f32[2], index: 8, kind: input, shape index: {}]
  %s9 = inlined_call_operand.vmem [shape: f32[16,1], index: 9, kind: input, shape index: {}]
  %s10 = inlined_call_operand.vmem [shape: f32[16,1], index: 10, kind: input, shape index: {}]
  %s11 = inlined_call_operand.vmem [shape: f32[16,256], index: 11, kind: output, shape index: {0}]
  %s12 = inlined_call_operand.vmem [shape: f32[16,256], index: 12, kind: output, shape index: {1}]
  %13 = xla_tuple %s11, %s12
  %s14 = sld [smem:[#allocation0]]
  $region89: #{_scma_impl.3} parent=0
    _
  %s16 = ssub.s32 1, %s14
  %s17 = scalar_select 0, %s16, %s14
  $region1: #{_scma_impl.3} parent=0
    #allocation2 [shape = 'u8[512]{0}', space=smem, size = 0x200, scoped, tag = 'input window, operand 8, single buffered']
    #allocation3 [shape = 's32[2]{0}', space=sflag, size = 0x8, scoped, tag = 'scoped memory for _scma_impl.3']
    %18 = vsyncpa [#allocation3], 0
    loop: start=0, step=1, limit=4
    $region2: #{_scma_impl.3} parent=1 // loop_pre_header
      _
    $region3: #{_scma_impl.3} parent=1 // loop_header
      %s20 = sphi 0, %s24
      %p21 = scmp.ge.s32.totalorder %s20, 4
      %s27 = sphi 0, %s39
      %s28 = sphi 0, %s35
      %s29 = sphi 0, %s27
      %s30 = sphi 0, %s28
      %s31 = sphi 0, %s29
      %s32 = sphi 0, %s30
      %s44 = sphi 0, %s46
      %s47 = sphi 0, %s44
      %s48 = sphi 0, %s47
      %s64 = sphi 0, %s48
      %s72 = sphi 0, %s74
      %s75 = sphi 0, %s72
      %s76 = sphi 0, %s75
      %s92 = sphi 0, %s76
      %s96 = sphi 0, %s96
      %s98 = sphi 0, %s96
      %s99 = sphi 0, %s98
      %s113 = sphi 0, %s99
      %s117 = sphi 0, %s117
      %s119 = sphi 0, %s117
      %s120 = sphi 0, %s119
      %s134 = sphi 0, %s120
      %s138 = sphi 0, %s138
      %s140 = sphi 0, %s138
      %s141 = sphi 0, %s140
      %s155 = sphi 0, %s141
      %s159 = sphi 0, %s159
      %s161 = sphi 0, %s159
      %s162 = sphi 0, %s161
      %s176 = sphi 0, %s162
      %s180 = sphi 0, %s180
      %s182 = sphi 0, %s180
      %s183 = sphi 0, %s182
      %s197 = sphi 0, %s183
      %s201 = sphi 0, %s201
      %s203 = sphi 0, %s201
      %s204 = sphi 0, %s203
      %s218 = sphi 0, %s204
      %s222 = sphi 0, %s222
      %s224 = sphi 0, %s222
      %s225 = sphi 0, %s224
      %s239 = sphi 0, %s225
      %s245 = sphi 0, %s247
      %s248 = sphi 0, %s245
      %s249 = sphi 0, %s248
      %s265 = sphi 0, %s249
      %s271 = sphi 0, %s273
      %s274 = sphi 0, %s271
      %s275 = sphi 0, %s274
      %s291 = sphi 0, %s275
      %s299 = sphi 0, %s301
      %s302 = sphi 0, %s299
      %s303 = sphi 0, %s302
      %s319 = sphi 0, %s303
      %s327 = sphi 0, %s329
      %s330 = sphi 0, %s327
      %s331 = sphi 0, %s330
      %s347 = sphi 0, %s331
    $region4: #{_scma_impl.3} parent=1 // loop_header_branch
      %23 = sbr.rel (%p21) target = $region8
    $region5: #{_scma_impl.3} parent=1 // loop_body
      %s25 = ssub.s32 %s20, 1
      %s26 = ssub.s32 %s20, 2
      %s33 = sadd.s32 1, %s28
      %p34 = scmp.ge.s32.totalorder %s33, 1
      %s35 = scalar_select %p34, 0, %s33
      %s36 = sadd.s32 1, %s27
      %s37 = scalar_select %p34, %s36, %s27
      %p38 = scmp.ge.s32.totalorder %s37, 2
      %s39 = scalar_select %p38, 0, %s37
      %s40 = ssub.s32 %s27, %s39
      %s41 = ssub.s32 %s28, %s35
      %s42 = sor.u32 %s40, %s41
      %p43 = scmp.eq.s32.totalorder %s42, 0
      %s45 = sadd.s32 %s44, 1
      %s46 = scalar_select %p43, %s44, %s45
      %p49 = pneg %p43
      %p50 = scmp.eq.s32.totalorder %s20, 1
      %p51 = por %p49, %p50
      %p52 = scmp.ne.s32.totalorder %s44, %s47
      %p53 = scmp.eq.s32.totalorder %s20, 0
      %p54 = por %p52, %p53
      %p55 = scmp.ne.s32.totalorder %s44, %s47
      %p56 = scmp.eq.s32.totalorder %s25, 1
      %p57 = por %p55, %p56
      %p58 = scmp.ne.s32.totalorder %s47, %s48
      %p59 = scmp.eq.s32.totalorder %s25, 0
      %p60 = por %p58, %p59
      %p61 = scmp.ne.s32.totalorder %s47, %s48
      %p62 = scmp.eq.s32.totalorder %s26, 1
      %p63 = por %p61, %p62
      %p65 = scmp.ne.s32.totalorder %s48, %s64
      %p66 = scmp.eq.s32.totalorder %s26, 0
      %p67 = por %p65, %p66
      %s68 = ssub.s32 %s27, %s39
      %s69 = ssub.s32 %s28, %s35
      %s70 = sor.u32 %s68, %s69
      %p71 = scmp.eq.s32.totalorder %s70, 0
      %s73 = sadd.s32 %s72, 1
      %s74 = scalar_select %p71, %s72, %s73
      %p77 = pneg %p71
      %p78 = scmp.eq.s32.totalorder %s20, 1
      %p79 = por %p77, %p78
      %p80 = scmp.ne.s32.totalorder %s72, %s75
      %p81 = scmp.eq.s32.totalorder %s20, 0
      %p82 = por %p80, %p81
      %p83 = scmp.ne.s32.totalorder %s72, %s75
      %p84 = scmp.eq.s32.totalorder %s25, 1
      %p85 = por %p83, %p84
      %p86 = scmp.ne.s32.totalorder %s75, %s76
      %p87 = scmp.eq.s32.totalorder %s25, 0
      %p88 = por %p86, %p87
      %p89 = scmp.ne.s32.totalorder %s75, %s76
      %p90 = scmp.eq.s32.totalorder %s26, 1
      %p91 = por %p89, %p90
      %p93 = scmp.ne.s32.totalorder %s76, %s92
      %p94 = scmp.eq.s32.totalorder %s26, 0
      %p95 = por %p93, %p94
      %s97 = sadd.s32 %s96, 1
      %p100 = scmp.eq.s32.totalorder %s20, 1
      %p101 = scmp.ne.s32.totalorder %s96, %s98
      %p102 = scmp.eq.s32.totalorder %s20, 0
      %p103 = por %p101, %p102
      %p104 = scmp.ne.s32.totalorder %s96, %s98
      %p105 = scmp.eq.s32.totalorder %s25, 1
      %p106 = por %p104, %p105
      %p107 = scmp.ne.s32.totalorder %s98, %s99
      %p108 = scmp.eq.s32.totalorder %s25, 0
      %p109 = por %p107, %p108
      %p110 = scmp.ne.s32.totalorder %s98, %s99
      %p111 = scmp.eq.s32.totalorder %s26, 1
      %p112 = por %p110, %p111
      %p114 = scmp.ne.s32.totalorder %s99, %s113
      %p115 = scmp.eq.s32.totalorder %s26, 0
      %p116 = por %p114, %p115
      %s118 = sadd.s32 %s117, 1
      %p121 = scmp.eq.s32.totalorder %s20, 1
      %p122 = scmp.ne.s32.totalorder %s117, %s119
      %p123 = scmp.eq.s32.totalorder %s20, 0
      %p124 = por %p122, %p123
      %p125 = scmp.ne.s32.totalorder %s117, %s119
      %p126 = scmp.eq.s32.totalorder %s25, 1
      %p127 = por %p125, %p126
      %p128 = scmp.ne.s32.totalorder %s119, %s120
      %p129 = scmp.eq.s32.totalorder %s25, 0
      %p130 = por %p128, %p129
      %p131 = scmp.ne.s32.totalorder %s119, %s120
      %p132 = scmp.eq.s32.totalorder %s26, 1
      %p133 = por %p131, %p132
      %p135 = scmp.ne.s32.totalorder %s120, %s134
      %p136 = scmp.eq.s32.totalorder %s26, 0
      %p137 = por %p135, %p136
      %s139 = sadd.s32 %s138, 1
      %p142 = scmp.eq.s32.totalorder %s20, 1
      %p143 = scmp.ne.s32.totalorder %s138, %s140
      %p144 = scmp.eq.s32.totalorder %s20, 0
      %p145 = por %p143, %p144
      %p146 = scmp.ne.s32.totalorder %s138, %s140
      %p147 = scmp.eq.s32.totalorder %s25, 1
      %p148 = por %p146, %p147
      %p149 = scmp.ne.s32.totalorder %s140, %s141
      %p150 = scmp.eq.s32.totalorder %s25, 0
      %p151 = por %p149, %p150
      %p152 = scmp.ne.s32.totalorder %s140, %s141
      %p153 = scmp.eq.s32.totalorder %s26, 1
      %p154 = por %p152, %p153
      %p156 = scmp.ne.s32.totalorder %s141, %s155
      %p157 = scmp.eq.s32.totalorder %s26, 0
      %p158 = por %p156, %p157
      %s160 = sadd.s32 %s159, 1
      %p163 = scmp.eq.s32.totalorder %s20, 1
      %p164 = scmp.ne.s32.totalorder %s159, %s161
      %p165 = scmp.eq.s32.totalorder %s20, 0
      %p166 = por %p164, %p165
      %p167 = scmp.ne.s32.totalorder %s159, %s161
      %p168 = scmp.eq.s32.totalorder %s25, 1
      %p169 = por %p167, %p168
      %p170 = scmp.ne.s32.totalorder %s161, %s162
      %p171 = scmp.eq.s32.totalorder %s25, 0
      %p172 = por %p170, %p171
      %p173 = scmp.ne.s32.totalorder %s161, %s162
      %p174 = scmp.eq.s32.totalorder %s26, 1
      %p175 = por %p173, %p174
      %p177 = scmp.ne.s32.totalorder %s162, %s176
      %p178 = scmp.eq.s32.totalorder %s26, 0
      %p179 = por %p177, %p178
      %s181 = sadd.s32 %s180, 1
      %p184 = scmp.eq.s32.totalorder %s20, 1
      %p185 = scmp.ne.s32.totalorder %s180, %s182
      %p186 = scmp.eq.s32.totalorder %s20, 0
      %p187 = por %p185, %p186
      %p188 = scmp.ne.s32.totalorder %s180, %s182
      %p189 = scmp.eq.s32.totalorder %s25, 1
      %p190 = por %p188, %p189
      %p191 = scmp.ne.s32.totalorder %s182, %s183
      %p192 = scmp.eq.s32.totalorder %s25, 0
      %p193 = por %p191, %p192
      %p194 = scmp.ne.s32.totalorder %s182, %s183
      %p195 = scmp.eq.s32.totalorder %s26, 1
      %p196 = por %p194, %p195
      %p198 = scmp.ne.s32.totalorder %s183, %s197
      %p199 = scmp.eq.s32.totalorder %s26, 0
      %p200 = por %p198, %p199
      %s202 = sadd.s32 %s201, 1
      %p205 = scmp.eq.s32.totalorder %s20, 1
      %p206 = scmp.ne.s32.totalorder %s201, %s203
      %p207 = scmp.eq.s32.totalorder %s20, 0
      %p208 = por %p206, %p207
      %p209 = scmp.ne.s32.totalorder %s201, %s203
      %p210 = scmp.eq.s32.totalorder %s25, 1
      %p211 = por %p209, %p210
      %p212 = scmp.ne.s32.totalorder %s203, %s204
      %p213 = scmp.eq.s32.totalorder %s25, 0
      %p214 = por %p212, %p213
      %p215 = scmp.ne.s32.totalorder %s203, %s204
      %p216 = scmp.eq.s32.totalorder %s26, 1
      %p217 = por %p215, %p216
      %p219 = scmp.ne.s32.totalorder %s204, %s218
      %p220 = scmp.eq.s32.totalorder %s26, 0
      %p221 = por %p219, %p220
      %s223 = sadd.s32 %s222, 1
      %p226 = scmp.eq.s32.totalorder %s20, 1
      %p227 = scmp.ne.s32.totalorder %s222, %s224
      %p228 = scmp.eq.s32.totalorder %s20, 0
      %p229 = por %p227, %p228
      %p230 = scmp.ne.s32.totalorder %s222, %s224
      %p231 = scmp.eq.s32.totalorder %s25, 1
      %p232 = por %p230, %p231
      %p233 = scmp.ne.s32.totalorder %s224, %s225
      %p234 = scmp.eq.s32.totalorder %s25, 0
      %p235 = por %p233, %p234
      %p236 = scmp.ne.s32.totalorder %s224, %s225
      %p237 = scmp.eq.s32.totalorder %s26, 1
      %p238 = por %p236, %p237
      %p240 = scmp.ne.s32.totalorder %s225, %s239
      %p241 = scmp.eq.s32.totalorder %s26, 0
      %p242 = por %p240, %p241
      %s243 = ssub.s32 %s27, %s39
      %p244 = scmp.eq.s32.totalorder %s243, 0
      %s246 = sadd.s32 %s245, 1
      %s247 = scalar_select %p244, %s245, %s246
      %p250 = pneg %p244
      %p251 = scmp.eq.s32.totalorder %s20, 1
      %p252 = por %p250, %p251
      %p253 = scmp.ne.s32.totalorder %s245, %s248
      %p254 = scmp.eq.s32.totalorder %s20, 0
      %p255 = por %p253, %p254
      %p256 = scmp.ne.s32.totalorder %s245, %s248
      %p257 = scmp.eq.s32.totalorder %s25, 1
      %p258 = por %p256, %p257
      %p259 = scmp.ne.s32.totalorder %s248, %s249
      %p260 = scmp.eq.s32.totalorder %s25, 0
      %p261 = por %p259, %p260
      %p262 = scmp.ne.s32.totalorder %s248, %s249
      %p263 = scmp.eq.s32.totalorder %s26, 1
      %p264 = por %p262, %p263
      %p266 = scmp.ne.s32.totalorder %s249, %s265
      %p267 = scmp.eq.s32.totalorder %s26, 0
      %p268 = por %p266, %p267
      %s269 = ssub.s32 %s27, %s39
      %p270 = scmp.eq.s32.totalorder %s269, 0
      %s272 = sadd.s32 %s271, 1
      %s273 = scalar_select %p270, %s271, %s272
      %p276 = pneg %p270
      %p277 = scmp.eq.s32.totalorder %s20, 1
      %p278 = por %p276, %p277
      %p279 = scmp.ne.s32.totalorder %s271, %s274
      %p280 = scmp.eq.s32.totalorder %s20, 0
      %p281 = por %p279, %p280
      %p282 = scmp.ne.s32.totalorder %s271, %s274
      %p283 = scmp.eq.s32.totalorder %s25, 1
      %p284 = por %p282, %p283
      %p285 = scmp.ne.s32.totalorder %s274, %s275
      %p286 = scmp.eq.s32.totalorder %s25, 0
      %p287 = por %p285, %p286
      %p288 = scmp.ne.s32.totalorder %s274, %s275
      %p289 = scmp.eq.s32.totalorder %s26, 1
      %p290 = por %p288, %p289
      %p292 = scmp.ne.s32.totalorder %s275, %s291
      %p293 = scmp.eq.s32.totalorder %s26, 0
      %p294 = por %p292, %p293
      %s295 = ssub.s32 %s27, %s39
      %s296 = ssub.s32 %s28, %s35
      %s297 = sor.u32 %s295, %s296
      %p298 = scmp.eq.s32.totalorder %s297, 0
      %s300 = sadd.s32 %s299, 1
      %s301 = scalar_select %p298, %s299, %s300
      %p304 = pneg %p298
      %p305 = scmp.eq.s32.totalorder %s20, 1
      %p306 = por %p304, %p305
      %p307 = scmp.ne.s32.totalorder %s299, %s302
      %p308 = scmp.eq.s32.totalorder %s20, 0
      %p309 = por %p307, %p308
      %p310 = scmp.ne.s32.totalorder %s299, %s302
      %p311 = scmp.eq.s32.totalorder %s25, 1
      %p312 = por %p310, %p311
      %p313 = scmp.ne.s32.totalorder %s302, %s303
      %p314 = scmp.eq.s32.totalorder %s25, 0
      %p315 = por %p313, %p314
      %p316 = scmp.ne.s32.totalorder %s302, %s303
      %p317 = scmp.eq.s32.totalorder %s26, 1
      %p318 = por %p316, %p317
      %p320 = scmp.ne.s32.totalorder %s303, %s319
      %p321 = scmp.eq.s32.totalorder %s26, 0
      %p322 = por %p320, %p321
      %s323 = ssub.s32 %s27, %s39
      %s324 = ssub.s32 %s28, %s35
      %s325 = sor.u32 %s323, %s324
      %p326 = scmp.eq.s32.totalorder %s325, 0
      %s328 = sadd.s32 %s327, 1
      %s329 = scalar_select %p326, %s327, %s328
      %p332 = pneg %p326
      %p333 = scmp.eq.s32.totalorder %s20, 1
      %p334 = por %p332, %p333
      %p335 = scmp.ne.s32.totalorder %s327, %s330
      %p336 = scmp.eq.s32.totalorder %s20, 0
      %p337 = por %p335, %p336
      %p338 = scmp.ne.s32.totalorder %s327, %s330
      %p339 = scmp.eq.s32.totalorder %s25, 1
      %p340 = por %p338, %p339
      %p341 = scmp.ne.s32.totalorder %s330, %s331
      %p342 = scmp.eq.s32.totalorder %s25, 0
      %p343 = por %p341, %p342
      %p344 = scmp.ne.s32.totalorder %s330, %s331
      %p345 = scmp.eq.s32.totalorder %s26, 1
      %p346 = por %p344, %p345
      %p348 = scmp.ne.s32.totalorder %s331, %s347
      %p349 = scmp.eq.s32.totalorder %s26, 0
      %p350 = por %p348, %p349
      %p351 = scmp.le.s32.totalorder 1, %s20
      %p352 = scmp.lt.s32.totalorder %s20, 3
      %p353 = pnand %p351, %p352
      %p354 = pneg %p353
      // Predicated region
      $region9: #{_scma_impl.3} parent=5 // pred_check
        _
      $region10: #{_scma_impl.3} parent=5 // pred_check_branch
        %356 = sbr.rel (%p353) target = $region12
      $region11: #{_scma_impl.3} parent=5 // pred_region
        %s357 = ssub.s32 %s20, 1
        // Predicated region
        $region13: #{_scma_impl.3} parent=11 // pred_check
          %p358 = pneg %p109
        $region14: #{_scma_impl.3} parent=11 // pred_check_branch
          %360 = sbr.rel (%p358) target = $region16
        $region15: #{_scma_impl.3} parent=11 // pred_region
          _
        $region16: #{_scma_impl.3} parent=11 // pred_fallthru
          _
        // Predicated region
        $region17: #{_scma_impl.3} parent=11 // pred_check
          %p361 = pneg %p130
        $region18: #{_scma_impl.3} parent=11 // pred_check_branch
          %363 = sbr.rel (%p361) target = $region20
        $region19: #{_scma_impl.3} parent=11 // pred_region
          _
        $region20: #{_scma_impl.3} parent=11 // pred_fallthru
          _
        // Predicated region
        $region21: #{_scma_impl.3} parent=11 // pred_check
          %p364 = pneg %p151
        $region22: #{_scma_impl.3} parent=11 // pred_check_branch
          %366 = sbr.rel (%p364) target = $region24
        $region23: #{_scma_impl.3} parent=11 // pred_region
          _
        $region24: #{_scma_impl.3} parent=11 // pred_fallthru
          _
        // Predicated region
        $region25: #{_scma_impl.3} parent=11 // pred_check
          %p367 = pneg %p172
        $region26: #{_scma_impl.3} parent=11 // pred_check_branch
          %369 = sbr.rel (%p367) target = $region28
        $region27: #{_scma_impl.3} parent=11 // pred_region
          _
        $region28: #{_scma_impl.3} parent=11 // pred_fallthru
          _
        // Predicated region
        $region29: #{_scma_impl.3} parent=11 // pred_check
          %p370 = pneg %p193
        $region30: #{_scma_impl.3} parent=11 // pred_check_branch
          %372 = sbr.rel (%p370) target = $region32
        $region31: #{_scma_impl.3} parent=11 // pred_region
          _
        $region32: #{_scma_impl.3} parent=11 // pred_fallthru
          _
        // Predicated region
        $region33: #{_scma_impl.3} parent=11 // pred_check
          %p373 = pneg %p214
        $region34: #{_scma_impl.3} parent=11 // pred_check_branch
          %375 = sbr.rel (%p373) target = $region36
        $region35: #{_scma_impl.3} parent=11 // pred_region
          _
        $region36: #{_scma_impl.3} parent=11 // pred_fallthru
          _
        // Predicated region
        $region37: #{_scma_impl.3} parent=11 // pred_check
          %p376 = pneg %p235
        $region38: #{_scma_impl.3} parent=11 // pred_check_branch
          %378 = sbr.rel (%p376) target = $region40
        $region39: #{_scma_impl.3} parent=11 // pred_region
          %s380 = ssub.s32 16, 16
          %381 = vsyncadd [#allocation3], %s380
          %s383 = sshll.u32 %s8, 4
          %s384 = int_to_ptr.vmem [resolvable:$true] %s383
          %386 = dma.vmem_to_smem %s384, 16, [#allocation2], [#allocation3]
        $region40: #{_scma_impl.3} parent=11 // pred_fallthru
          _
      $region12: #{_scma_impl.3} parent=5 // pred_fallthru
        _
      %p387 = scmp.lt.s32.totalorder %s20, 2
      // Predicated region
      $region41: #{_scma_impl.3} parent=5 // pred_check
        %p388 = pneg %p387
      $region42: #{_scma_impl.3} parent=5 // pred_check_branch
        %390 = sbr.rel (%p388) target = $region44
      $region43: #{_scma_impl.3} parent=5 // pred_region
        // Predicated region
        $region45: #{_scma_impl.3} parent=43 // pred_check
          %p391 = pneg %p54
        $region46: #{_scma_impl.3} parent=43 // pred_check_branch
          %393 = sbr.rel (%p391) target = $region48
        $region47: #{_scma_impl.3} parent=43 // pred_region
          %s394 = smul.u32 2, %s28
          %p395 = scmp.lt.s32.totalorder %s27, 1
          %s396 = scalar_select %p395, %s27, 1
          %p397 = scmp.lt.s32.totalorder %s394, 1
          %s398 = scalar_select %p397, %s394, 1
          %s399 = smul.addr %s396, 2
          %s400 = sadd.s32 %s398, %s399
          %s401 = smul.addr %s400, 8
          %s402 = scalar_lea.vmem %s0, %s401
          %s403 = smul.u32 2, %s28
        $region48: #{_scma_impl.3} parent=43 // pred_fallthru
          _
        // Predicated region
        $region49: #{_scma_impl.3} parent=43 // pred_check
          %p404 = pneg %p82
        $region50: #{_scma_impl.3} parent=43 // pred_check_branch
          %406 = sbr.rel (%p404) target = $region52
        $region51: #{_scma_impl.3} parent=43 // pred_region
          %s407 = smul.u32 2, %s28
          %p408 = scmp.lt.s32.totalorder %s27, 1
          %s409 = scalar_select %p408, %s27, 1
          %p410 = scmp.lt.s32.totalorder %s407, 1
          %s411 = scalar_select %p410, %s407, 1
          %s412 = smul.addr %s409, 2
          %s413 = sadd.s32 %s411, %s412
          %s414 = smul.addr %s413, 8
          %s415 = scalar_lea.vmem %s1, %s414
          %s416 = smul.u32 2, %s28
        $region52: #{_scma_impl.3} parent=43 // pred_fallthru
          _
        // Predicated region
        $region53: #{_scma_impl.3} parent=43 // pred_check
          %p417 = pneg %p255
        $region54: #{_scma_impl.3} parent=43 // pred_check_branch
          %419 = sbr.rel (%p417) target = $region56
        $region55: #{_scma_impl.3} parent=43 // pred_region
          %p420 = scmp.lt.s32.totalorder %s27, 1
          %s421 = scalar_select %p420, %s27, 1
          %s422 = smul.addr %s421, 8
          %s423 = scalar_lea.vmem %s9, %s422
        $region56: #{_scma_impl.3} parent=43 // pred_fallthru
          _
        // Predicated region
        $region57: #{_scma_impl.3} parent=43 // pred_check
          %p424 = pneg %p281
        $region58: #{_scma_impl.3} parent=43 // pred_check_branch
          %426 = sbr.rel (%p424) target = $region60
        $region59: #{_scma_impl.3} parent=43 // pred_region
          %p427 = scmp.lt.s32.totalorder %s27, 1
          %s428 = scalar_select %p427, %s27, 1
          %s429 = smul.addr %s428, 8
          %s430 = scalar_lea.vmem %s10, %s429
        $region60: #{_scma_impl.3} parent=43 // pred_fallthru
          _
      $region44: #{_scma_impl.3} parent=5 // pred_fallthru
        _
      %p431 = scmp.le.s32.totalorder 1, %s20
      %p432 = scmp.lt.s32.totalorder %s20, 3
      %p433 = pnand %p431, %p432
      %p434 = pneg %p433
      // Predicated region
      $region61: #{_scma_impl.3} parent=5 // pred_check
        _
      $region62: #{_scma_impl.3} parent=5 // pred_check_branch
        %436 = sbr.rel (%p433) target = $region64
      $region63: #{_scma_impl.3} parent=5 // pred_region
        %s437 = ssub.s32 %s20, 1
        // Predicated region
        $region65: #{_scma_impl.3} parent=63 // pred_check
          %p438 = pneg %p235
        $region66: #{_scma_impl.3} parent=63 // pred_check_branch
          %440 = sbr.rel (%p438) target = $region68
        $region67: #{_scma_impl.3} parent=63 // pred_region
          %441 = dma.done [#allocation3], 16
        $region68: #{_scma_impl.3} parent=63 // pred_fallthru
          _
        %442 = sfence
        %s443 = smul.u32 2, %s30
        %p444 = scmp.lt.s32.totalorder %s29, 1
        %s445 = scalar_select %p444, %s29, 1
        %p446 = scmp.lt.s32.totalorder %s443, 1
        %s447 = scalar_select %p446, %s443, 1
        %s448 = smul.addr %s445, 2
        %s449 = sadd.s32 %s447, %s448
        %s450 = smul.addr %s449, 8
        %s451 = scalar_lea.vmem %s0, %s450
        %p452 = pneg %p60
        %p453 = pneg %p57
        %s454 = smul.u32 2, %s30
        %p455 = scmp.lt.s32.totalorder %s29, 1
        %s456 = scalar_select %p455, %s29, 1
        %p457 = scmp.lt.s32.totalorder %s454, 1
        %s458 = scalar_select %p457, %s454, 1
        %s459 = smul.addr %s456, 2
        %s460 = sadd.s32 %s458, %s459
        %s461 = smul.addr %s460, 8
        %s462 = scalar_lea.vmem %s1, %s461
        %p463 = pneg %p88
        %p464 = pneg %p85
        %p465 = pneg %p109
        %p466 = pneg %p106
        %p467 = pneg %p130
        %p468 = pneg %p127
        %p469 = pneg %p151
        %p470 = pneg %p148
        %p471 = pneg %p172
        %p472 = pneg %p169
        %p473 = pneg %p193
        %p474 = pneg %p190
        %p475 = pneg %p214
        %p476 = pneg %p211
        %p477 = pneg %p235
        %p478 = pneg %p232
        %p479 = scmp.lt.s32.totalorder %s29, 1
        %s480 = scalar_select %p479, %s29, 1
        %s481 = smul.addr %s480, 8
        %s482 = scalar_lea.vmem %s9, %s481
        %p483 = pneg %p261
        %p484 = pneg %p258
        %p485 = scmp.lt.s32.totalorder %s29, 1
        %s486 = scalar_select %p485, %s29, 1
        %s487 = smul.addr %s486, 8
        %s488 = scalar_lea.vmem %s10, %s487
        %p489 = pneg %p287
        %p490 = pneg %p284
        %p491 = pneg %p315
        %p492 = pneg %p312
        %s493 = smul.u32 2, %s30
        %p494 = scmp.lt.s32.totalorder %s29, 1
        %s495 = scalar_select %p494, %s29, 1
        %p496 = scmp.lt.s32.totalorder %s493, 1
        %s497 = scalar_select %p496, %s493, 1
        %s498 = smul.addr %s495, 2
        %s499 = sadd.s32 %s497, %s498
        %s500 = smul.addr %s499, 8
        %s501 = scalar_lea.vmem %s11, %s500
        %p502 = pneg %p343
        %p503 = pneg %p340
        %s504 = smul.u32 2, %s30
        %p505 = scmp.lt.s32.totalorder %s29, 1
        %s506 = scalar_select %p505, %s29, 1
        %p507 = scmp.lt.s32.totalorder %s504, 1
        %s508 = scalar_select %p507, %s504, 1
        %s509 = smul.addr %s506, 2
        %s510 = sadd.s32 %s508, %s509
        %s511 = smul.addr %s510, 8
        %s512 = scalar_lea.vmem %s12, %s511
        %s513 = smul.u32 2, %s30
        %p514 = scmp.lt.s32.totalorder %s29, 1
        %s515 = scalar_select %p514, %s29, 1
        %p516 = scmp.lt.s32.totalorder %s513, 1
        %s517 = scalar_select %p516, %s513, 1
        %s518 = smul.addr %s515, 2
        %s519 = sadd.s32 %s517, %s518
        %s520 = smul.addr %s519, 8
        %s521 = scalar_lea.vmem %s0, %s520
        %s522 = smul.u32 2, %s30
        %s523 = smul.u32 2, %s30
        %p524 = scmp.lt.s32.totalorder %s29, 1
        %s525 = scalar_select %p524, %s29, 1
        %p526 = scmp.lt.s32.totalorder %s523, 1
        %s527 = scalar_select %p526, %s523, 1
        %s528 = smul.addr %s525, 2
        %s529 = sadd.s32 %s527, %s528
        %s530 = smul.addr %s529, 8
        %s531 = scalar_lea.vmem %s1, %s530
        %s532 = smul.u32 2, %s30
        %p533 = scmp.lt.s32.totalorder %s29, 1
        %s534 = scalar_select %p533, %s29, 1
        %s535 = smul.addr %s534, 8
        %s536 = scalar_lea.vmem %s9, %s535
        %p537 = scmp.lt.s32.totalorder %s29, 1
        %s538 = scalar_select %p537, %s29, 1
        %s539 = smul.addr %s538, 8
        %s540 = scalar_lea.vmem %s10, %s539
        %s541 = smul.u32 2, %s30
        %p542 = scmp.lt.s32.totalorder %s29, 1
        %s543 = scalar_select %p542, %s29, 1
        %p544 = scmp.lt.s32.totalorder %s541, 1
        %s545 = scalar_select %p544, %s541, 1
        %s546 = smul.addr %s543, 2
        %s547 = sadd.s32 %s545, %s546
        %s548 = smul.addr %s547, 8
        %s549 = scalar_lea.vmem %s11, %s548
        %s550 = smul.u32 2, %s30
        %s551 = smul.u32 2, %s30
        %p552 = scmp.lt.s32.totalorder %s29, 1
        %s553 = scalar_select %p552, %s29, 1
        %p554 = scmp.lt.s32.totalorder %s551, 1
        %s555 = scalar_select %p554, %s551, 1
        %s556 = smul.addr %s553, 2
        %s557 = sadd.s32 %s555, %s556
        %s558 = smul.addr %s557, 8
        %s559 = scalar_lea.vmem %s12, %s558
        %s560 = smul.u32 2, %s30
        %v561 = vld [vmem:[%s521] sm:$0xff]
        %v562 = vld [vmem:[%s521 + $0x8] sm:$0xff]
        %v563 = vld [vmem:[%s531] sm:$0xff]
        %v564 = vld [vmem:[%s531 + $0x8] sm:$0xff]
        %v565 = vld [vmem:[%s2] sm:$0xff]
        %v566 = vld [vmem:[%s2 + $0x8] sm:$0xff]
        %v567 = vld [vmem:[%s2 + $0x10] sm:$0xff]
        %v568 = vld [vmem:[%s2 + $0x18] sm:$0xff]
        %v569 = vld [vmem:[%s2 + $0x20] sm:$0xff]
        %v570 = vld [vmem:[%s2 + $0x28] sm:$0xff]
        %v571 = vld [vmem:[%s2 + $0x30] sm:$0xff]
        %v572 = vld [vmem:[%s2 + $0x38] sm:$0xff]
        %v573 = vld [vmem:[%s2 + $0x40] sm:$0xff]
        %v574 = vld [vmem:[%s2 + $0x48] sm:$0xff]
        %v575 = vld [vmem:[%s2 + $0x50] sm:$0xff]
        %v576 = vld [vmem:[%s2 + $0x58] sm:$0xff]
        %v577 = vld [vmem:[%s2 + $0x60] sm:$0xff]
        %v578 = vld [vmem:[%s2 + $0x68] sm:$0xff]
        %v579 = vld [vmem:[%s2 + $0x70] sm:$0xff]
        %v580 = vld [vmem:[%s2 + $0x78] sm:$0xff]
        %v581 = vld [vmem:[%s3] sm:$0xff]
        %v582 = vld [vmem:[%s3 + $0x8] sm:$0xff]
        %v583 = vld [vmem:[%s3 + $0x10] sm:$0xff]
        %v584 = vld [vmem:[%s3 + $0x18] sm:$0xff]
        %v585 = vld [vmem:[%s3 + $0x20] sm:$0xff]
        %v586 = vld [vmem:[%s3 + $0x28] sm:$0xff]
        %v587 = vld [vmem:[%s3 + $0x30] sm:$0xff]
        %v588 = vld [vmem:[%s3 + $0x38] sm:$0xff]
        %v589 = vld [vmem:[%s3 + $0x40] sm:$0xff]
        %v590 = vld [vmem:[%s3 + $0x48] sm:$0xff]
        %v591 = vld [vmem:[%s3 + $0x50] sm:$0xff]
        %v592 = vld [vmem:[%s3 + $0x58] sm:$0xff]
        %v593 = vld [vmem:[%s3 + $0x60] sm:$0xff]
        %v594 = vld [vmem:[%s3 + $0x68] sm:$0xff]
        %v595 = vld [vmem:[%s3 + $0x70] sm:$0xff]
        %v596 = vld [vmem:[%s3 + $0x78] sm:$0xff]
        %v597 = vld [vmem:[%s4] sm:$0xff]
        %s598 = sld [smem:[#allocation2]]
        %600 = vset.pattern.permute.xlu0 0
        %601 = vperm.xlu0 %600, %v581
        %v602 = vpop.permute.xlu0 %601
        %605 = vset.pattern.permute.xlu0 0
        %606 = vperm.xlu0 %605, %v582
        %v607 = vpop.permute.xlu0 %606
        %610 = vset.pattern.permute.xlu0 0
        %611 = vperm.xlu0 %610, %v583
        %v612 = vpop.permute.xlu0 %611
        %615 = vset.pattern.permute.xlu0 0
        %616 = vperm.xlu0 %615, %v584
        %v617 = vpop.permute.xlu0 %616
        %620 = vset.pattern.permute.xlu0 0
        %621 = vperm.xlu0 %620, %v585
        %v622 = vpop.permute.xlu0 %621
        %625 = vset.pattern.permute.xlu0 0
        %626 = vperm.xlu0 %625, %v586
        %v627 = vpop.permute.xlu0 %626
        %630 = vset.pattern.permute.xlu0 0
        %631 = vperm.xlu0 %630, %v587
        %v632 = vpop.permute.xlu0 %631
        %635 = vset.pattern.permute.xlu0 0
        %636 = vperm.xlu0 %635, %v588
        %v637 = vpop.permute.xlu0 %636
        %640 = vset.pattern.permute.xlu0 0
        %641 = vperm.xlu0 %640, %v589
        %v642 = vpop.permute.xlu0 %641
        %645 = vset.pattern.permute.xlu0 0
        %646 = vperm.xlu0 %645, %v590
        %v647 = vpop.permute.xlu0 %646
        %650 = vset.pattern.permute.xlu0 0
        %651 = vperm.xlu0 %650, %v591
        %v652 = vpop.permute.xlu0 %651
        %655 = vset.pattern.permute.xlu0 0
        %656 = vperm.xlu0 %655, %v592
        %v657 = vpop.permute.xlu0 %656
        %660 = vset.pattern.permute.xlu0 0
        %661 = vperm.xlu0 %660, %v593
        %v662 = vpop.permute.xlu0 %661
        %665 = vset.pattern.permute.xlu0 0
        %666 = vperm.xlu0 %665, %v594
        %v667 = vpop.permute.xlu0 %666
        %670 = vset.pattern.permute.xlu0 0
        %671 = vperm.xlu0 %670, %v595
        %v672 = vpop.permute.xlu0 %671
        %675 = vset.pattern.permute.xlu0 0
        %676 = vperm.xlu0 %675, %v596
        %v677 = vpop.permute.xlu0 %676
        %vm679 = vcmask 64512
        %v681 = vsel %vm679, %v565, 0
        %v684 = vsel %vm679, %v566, 0
        %v687 = vsel %vm679, %v567, 0
        %v690 = vsel %vm679, %v568, 0
        %v693 = vsel %vm679, %v569, 0
        %v696 = vsel %vm679, %v570, 0
        %v699 = vsel %vm679, %v571, 0
        %v702 = vsel %vm679, %v572, 0
        %v705 = vsel %vm679, %v573, 0
        %v708 = vsel %vm679, %v574, 0
        %v711 = vsel %vm679, %v575, 0
        %v714 = vsel %vm679, %v576, 0
        %v717 = vsel %vm679, %v577, 0
        %v720 = vsel %vm679, %v578, 0
        %v723 = vsel %vm679, %v579, 0
        %v726 = vsel %vm679, %v580, 0
        %728 = vmatprep.subr.mxu0 %v564
        %729 = vmatpush1.msra.mxu0 %v563
        %730 = vmatprep.subr.mxu0 0.0
        %731 = vmatpush1.msra.mxu0 0.0
        %732 = vmatprep.subr.mxu0 0.0
        %733 = vmatpush1.msra.mxu0 0.0
        %734 = vmatprep.subr.mxu0 0.0
        %735 = vmatpush1.msra.mxu0 0.0
        %736 = vmatprep.subr.mxu0 0.0
        %737 = vmatpush1.msra.mxu0 0.0
        %738 = vmatprep.subr.mxu0 0.0
        %739 = vmatpush1.msra.mxu0 0.0
        %740 = vmatprep.subr.mxu0 0.0
        %741 = vmatpush1.msra.mxu0 0.0
        %742 = vmatprep.subr.mxu0 0.0
        %743 = vmatpush1.msra.mxu0 0.0
        %744 = vmatprep.subr.mxu0 0.0
        %745 = vmatpush1.msra.mxu0 0.0
        %746 = vmatprep.subr.mxu0 0.0
        %747 = vmatpush1.msra.mxu0 0.0
        %748 = vmatprep.subr.mxu0 0.0
        %749 = vmatpush1.msra.mxu0 0.0
        %750 = vmatprep.subr.mxu0 0.0
        %751 = vmatpush1.msra.mxu0 0.0
        %752 = vmatprep.subr.mxu0 0.0
        %753 = vmatpush1.msra.mxu0 0.0
        %754 = vmatprep.subr.mxu0 0.0
        %755 = vmatpush1.msra.mxu0 0.0
        %756 = vmatprep.subr.mxu0 0.0
        %757 = vmatpush1.msra.mxu0 0.0
        %758 = vmatprep.subr.mxu0 0.0
        %759 = vmatpush1.msra.mxu0 0.0
        %760 = vmatprep.subr.mxu0 0.0
        %761 = vmatpush1.msra.mxu0 0.0
        %762 = vmatprep.subr.mxu0 0.0
        %763 = vmatpush1.msra.mxu0 0.0
        %764 = vmatprep.subr.mxu0 0.0
        %765 = vmatpush1.msra.mxu0 0.0
        %766 = vmatprep.subr.mxu0 0.0
        %767 = vmatpush1.msra.mxu0 0.0
        %768 = vmatprep.subr.mxu0 0.0
        %769 = vmatpush1.msra.mxu0 0.0
        %770 = vmatprep.subr.mxu0 0.0
        %771 = vmatpush1.msra.mxu0 0.0
        %772 = vmatprep.subr.mxu0 0.0
        %773 = vmatpush1.msra.mxu0 0.0
        %774 = vmatprep.subr.mxu0 0.0
        %775 = vmatpush1.msra.mxu0 0.0
        %776 = vmatprep.subr.mxu0 0.0
        %777 = vmatpush1.msra.mxu0 0.0
        %778 = vmatprep.subr.mxu0 0.0
        %779 = vmatpush1.msra.mxu0 0.0
        %780 = vmatprep.subr.mxu0 0.0
        %781 = vmatpush1.msra.mxu0 0.0
        %782 = vmatprep.subr.mxu0 0.0
        %783 = vmatpush1.msra.mxu0 0.0
        %784 = vmatprep.subr.mxu0 0.0
        %785 = vmatpush1.msra.mxu0 0.0
        %786 = vmatprep.subr.mxu0 0.0
        %787 = vmatpush1.msra.mxu0 0.0
        %788 = vmatprep.subr.mxu0 0.0
        %789 = vmatpush1.msra.mxu0 0.0
        %790 = vmatprep.subr.mxu0 0.0
        %791 = vmatpush1.msra.mxu0 0.0
        %792 = vmatprep.mubr.f32.mxu0 0.0
        %793 = vmatmul.mubr.f32.gmra.mrb[0].mxu0 %v681
        %v794 = vpop.f32.mrb[0].mxu0
        %v795 = vadd.f32 %v602, %v794
        %v796 = vpop.f32.mrb[0].mxu0
        %v797 = vadd.f32 %v602, %v796
        %798 = vmatprep.mubr.f32.mxu0 0.0
        %799 = vmatmul.mubr.f32.gmra.mrb[0].mxu0 %v684
        %v800 = vpop.f32.mrb[0].mxu0
        %v801 = vadd.f32 %v607, %v800
        %v802 = vpop.f32.mrb[0].mxu0
        %v803 = vadd.f32 %v607, %v802
        %804 = vmatprep.mubr.f32.mxu0 0.0
        %805 = vmatmul.mubr.f32.gmra.mrb[0].mxu0 %v687
        %v806 = vpop.f32.mrb[0].mxu0
        %v807 = vadd.f32 %v612, %v806
        %v808 = vpop.f32.mrb[0].mxu0
        %v809 = vadd.f32 %v612, %v808
        %810 = vmatprep.mubr.f32.mxu0 0.0
        %811 = vmatmul.mubr.f32.gmra.mrb[0].mxu0 %v690
        %v812 = vpop.f32.mrb[0].mxu0
        %v813 = vadd.f32 %v617, %v812
        %v814 = vpop.f32.mrb[0].mxu0
        %v815 = vadd.f32 %v617, %v814
        %816 = vmatprep.mubr.f32.mxu0 0.0
        %817 = vmatmul.mubr.f32.gmra.mrb[0].mxu0 %v693
        %v818 = vpop.f32.mrb[0].mxu0
        %v819 = vadd.f32 %v622, %v818
        %v820 = vpop.f32.mrb[0].mxu0
        %v821 = vadd.f32 %v622, %v820
        %822 = vmatprep.mubr.f32.mxu0 0.0
        %823 = vmatmul.mubr.f32.gmra.mrb[0].mxu0 %v696
        %v824 = vpop.f32.mrb[0].mxu0
        %v825 = vadd.f32 %v627, %v824
        %v826 = vpop.f32.mrb[0].mxu0
        %v827 = vadd.f32 %v627, %v826
        %828 = vmatprep.mubr.f32.mxu0 0.0
        %829 = vmatmul.mubr.f32.gmra.mrb[0].mxu0 %v699
        %v830 = vpop.f32.mrb[0].mxu0
        %v831 = vadd.f32 %v632, %v830
        %v832 = vpop.f32.mrb[0].mxu0
        %v833 = vadd.f32 %v632, %v832
        %834 = vmatprep.mubr.f32.mxu0 0.0
        %835 = vmatmul.mubr.f32.gmra.mrb[0].mxu0 %v702
        %v836 = vpop.f32.mrb[0].mxu0
        %v837 = vadd.f32 %v637, %v836
        %v838 = vpop.f32.mrb[0].mxu0
        %v839 = vadd.f32 %v637, %v838
        %840 = vmatprep.mubr.f32.mxu0 0.0
        %841 = vmatmul.mubr.f32.gmra.mrb[0].mxu0 %v705
        %v842 = vpop.f32.mrb[0].mxu0
        %v843 = vadd.f32 %v642, %v842
        %v844 = vpop.f32.mrb[0].mxu0
        %v845 = vadd.f32 %v642, %v844
        %846 = vmatprep.mubr.f32.mxu0 0.0
        %847 = vmatmul.mubr.f32.gmra.mrb[0].mxu0 %v708
        %v848 = vpop.f32.mrb[0].mxu0
        %v849 = vadd.f32 %v647, %v848
        %v850 = vpop.f32.mrb[0].mxu0
        %v851 = vadd.f32 %v647, %v850
        %852 = vmatprep.mubr.f32.mxu0 0.0
        %853 = vmatmul.mubr.f32.gmra.mrb[0].mxu0 %v711
        %v854 = vpop.f32.mrb[0].mxu0
        %v855 = vadd.f32 %v652, %v854
        %v856 = vpop.f32.mrb[0].mxu0
        %v857 = vadd.f32 %v652, %v856
        %858 = vmatprep.mubr.f32.mxu0 0.0
        %859 = vmatmul.mubr.f32.gmra.mrb[0].mxu0 %v714
        %v860 = vpop.f32.mrb[0].mxu0
        %v861 = vadd.f32 %v657, %v860
        %v862 = vpop.f32.mrb[0].mxu0
        %v863 = vadd.f32 %v657, %v862
        %864 = vmatprep.mubr.f32.mxu0 0.0
        %865 = vmatmul.mubr.f32.gmra.mrb[0].mxu0 %v717
        %v866 = vpop.f32.mrb[0].mxu0
        %v867 = vadd.f32 %v662, %v866
        %v868 = vpop.f32.mrb[0].mxu0
        %v869 = vadd.f32 %v662, %v868
        %870 = vmatprep.mubr.f32.mxu0 0.0
        %871 = vmatmul.mubr.f32.gmra.mrb[0].mxu0 %v720
        %v872 = vpop.f32.mrb[0].mxu0
        %v873 = vadd.f32 %v667, %v872
        %v874 = vpop.f32.mrb[0].mxu0
        %v875 = vadd.f32 %v667, %v874
        %876 = vmatprep.mubr.f32.mxu0 0.0
        %877 = vmatmul.mubr.f32.gmra.mrb[0].mxu0 %v723
        %v878 = vpop.f32.mrb[0].mxu0
        %v879 = vadd.f32 %v672, %v878
        %v880 = vpop.f32.mrb[0].mxu0
        %v881 = vadd.f32 %v672, %v880
        %882 = vmatprep.mubr.f32.mxu0 0.0
        %883 = vmatmul.mubr.f32.gmra.mrb[0].mxu0 %v726
        %v884 = vpop.f32.mrb[0].mxu0
        %v885 = vadd.f32 %v677, %v884
        %v886 = vpop.f32.mrb[0].mxu0
        %v887 = vadd.f32 %v677, %v886
        %888 = vdwg.mxu0
        %v889 = vmax.f32 %v795, 0.0
        %v890 = vmax.f32 %v797, 0.0
        %v891 = vmax.f32 %v801, 0.0
        %v892 = vmax.f32 %v803, 0.0
        %v893 = vmax.f32 %v807, 0.0
        %v894 = vmax.f32 %v809, 0.0
        %v895 = vmax.f32 %v813, 0.0
        %v896 = vmax.f32 %v815, 0.0
        %v897 = vmax.f32 %v819, 0.0
        %v898 = vmax.f32 %v821, 0.0
        %v899 = vmax.f32 %v825, 0.0
        %v900 = vmax.f32 %v827, 0.0
        %v901 = vmax.f32 %v831, 0.0
        %v902 = vmax.f32 %v833, 0.0
        %v903 = vmax.f32 %v837, 0.0
        %v904 = vmax.f32 %v839, 0.0
        %v905 = vmax.f32 %v843, 0.0
        %v906 = vmax.f32 %v845, 0.0
        %v907 = vmax.f32 %v849, 0.0
        %v908 = vmax.f32 %v851, 0.0
        %v909 = vmax.f32 %v855, 0.0
        %v910 = vmax.f32 %v857, 0.0
        %v911 = vmax.f32 %v861, 0.0
        %v912 = vmax.f32 %v863, 0.0
        %v913 = vmax.f32 %v867, 0.0
        %v914 = vmax.f32 %v869, 0.0
        %v915 = vmax.f32 %v873, 0.0
        %v916 = vmax.f32 %v875, 0.0
        %v917 = vmax.f32 %v879, 0.0
        %v918 = vmax.f32 %v881, 0.0
        %v919 = vmax.f32 %v885, 0.0
        %v920 = vmax.f32 %v887, 0.0
        %v921 = vstv %s598
        %922 = vmatprep.subr.mxu0 %v890
        %923 = vmatpush1.msra.mxu0 %v889
        %924 = vmatprep.subr.mxu0 %v892
        %925 = vmatpush1.msra.mxu0 %v891
        %926 = vmatprep.subr.mxu0 %v894
        %927 = vmatpush1.msra.mxu0 %v893
        %928 = vmatprep.subr.mxu0 %v896
        %929 = vmatpush1.msra.mxu0 %v895
        %930 = vmatprep.subr.mxu0 %v898
        %931 = vmatpush1.msra.mxu0 %v897
        %932 = vmatprep.subr.mxu0 %v900
        %933 = vmatpush1.msra.mxu0 %v899
        %934 = vmatprep.subr.mxu0 %v902
        %935 = vmatpush1.msra.mxu0 %v901
        %936 = vmatprep.subr.mxu0 %v904
        %937 = vmatpush1.msra.mxu0 %v903
        %938 = vmatprep.subr.mxu0 %v906
        %939 = vmatpush1.msra.mxu0 %v905
        %940 = vmatprep.subr.mxu0 %v908
        %941 = vmatpush1.msra.mxu0 %v907
        %942 = vmatprep.subr.mxu0 %v910
        %943 = vmatpush1.msra.mxu0 %v909
        %944 = vmatprep.subr.mxu0 %v912
        %945 = vmatpush1.msra.mxu0 %v911
        %946 = vmatprep.subr.mxu0 %v914
        %947 = vmatpush1.msra.mxu0 %v913
        %948 = vmatprep.subr.mxu0 %v916
        %949 = vmatpush1.msra.mxu0 %v915
        %950 = vmatprep.subr.mxu0 %v918
        %951 = vmatpush1.msra.mxu0 %v917
        %952 = vmatprep.subr.mxu0 %v920
        %953 = vmatpush1.msra.mxu0 %v919
        %954 = vmatprep.subr.mxu0 0.0
        %955 = vmatpush1.msra.mxu0 0.0
        %956 = vmatprep.subr.mxu0 0.0
        %957 = vmatpush1.msra.mxu0 0.0
        %958 = vmatprep.subr.mxu0 0.0
        %959 = vmatpush1.msra.mxu0 0.0
        %960 = vmatprep.subr.mxu0 0.0
        %961 = vmatpush1.msra.mxu0 0.0
        %962 = vmatprep.subr.mxu0 0.0
        %963 = vmatpush1.msra.mxu0 0.0
        %964 = vmatprep.subr.mxu0 0.0
        %965 = vmatpush1.msra.mxu0 0.0
        %966 = vmatprep.subr.mxu0 0.0
        %967 = vmatpush1.msra.mxu0 0.0
        %968 = vmatprep.subr.mxu0 0.0
        %969 = vmatpush1.msra.mxu0 0.0
        %970 = vmatprep.subr.mxu0 0.0
        %971 = vmatpush1.msra.mxu0 0.0
        %972 = vmatprep.subr.mxu0 0.0
        %973 = vmatpush1.msra.mxu0 0.0
        %974 = vmatprep.subr.mxu0 0.0
        %975 = vmatpush1.msra.mxu0 0.0
        %976 = vmatprep.subr.mxu0 0.0
        %977 = vmatpush1.msra.mxu0 0.0
        %978 = vmatprep.subr.mxu0 0.0
        %979 = vmatpush1.msra.mxu0 0.0
        %980 = vmatprep.subr.mxu0 0.0
        %981 = vmatpush1.msra.mxu0 0.0
        %982 = vmatprep.subr.mxu0 0.0
        %983 = vmatpush1.msra.mxu0 0.0
        %984 = vmatprep.subr.mxu0 0.0
        %985 = vmatpush1.msra.mxu0 0.0
        %986 = vmatprep.mubr.f32.mxu0 0.0
        %987 = vmatmul.mubr.f32.gmra.mrb[0].mxu0 %v597
        %v988 = vpop.f32.mrb[0].mxu0
        %v989 = vadd.f32 %v921, %v988
        %v990 = vpop.f32.mrb[0].mxu0
        %v991 = vadd.f32 %v921, %v990
        %992 = vdwg.mxu0
        %v993 = vxor.u32 %v989, 2147483648
        %v994 = vxor.u32 %v991, 2147483648
        %v995 = vmul.f32 %v993, 1.442695
        %v996 = vpow.pop %v995
        %v997 = vmul.f32 %v994, 1.442695
        %v998 = vpow.pop %v997
        %v999 = vadd.f32 %v996, 1.0
        %v1000 = vadd.f32 %v998, 1.0
        %v1001 = vrcp.pop %v999
        %v1002 = vmul.f32 1.0, %v1001
        %v1003 = vrcp.pop %v1000
        %v1004 = vmul.f32 1.0, %v1003
        %v1005 = vmul.f32 %v561, %v1002
        %v1006 = vmul.f32 %v562, %v1004
        %v1007 = vld [vmem:[%s536] sm:$0xff]
        %1009 = vset.pattern.permute.xlu0 0
        %1010 = vperm.xlu0 %1009, %v1007
        %v1011 = vpop.permute.xlu0 %1010
        %v1013 = vmul.f32 %v1005, %v1011
        %v1014 = vmul.f32 %v1006, %v1011
        %1015 = vst [vmem:[%s549] sm:$0xff] %v1013
        %1016 = vst [vmem:[%s549 + $0x8] sm:$0xff] %v1014
        %v1017 = vld [vmem:[%s5] sm:$0xff]
        %v1018 = vld [vmem:[%s5 + $0x8] sm:$0xff]
        %v1019 = vld [vmem:[%s5 + $0x10] sm:$0xff]
        %v1020 = vld [vmem:[%s5 + $0x18] sm:$0xff]
        %v1021 = vld [vmem:[%s5 + $0x20] sm:$0xff]
        %v1022 = vld [vmem:[%s5 + $0x28] sm:$0xff]
        %v1023 = vld [vmem:[%s5 + $0x30] sm:$0xff]
        %v1024 = vld [vmem:[%s5 + $0x38] sm:$0xff]
        %v1025 = vld [vmem:[%s5 + $0x40] sm:$0xff]
        %v1026 = vld [vmem:[%s5 + $0x48] sm:$0xff]
        %v1027 = vld [vmem:[%s5 + $0x50] sm:$0xff]
        %v1028 = vld [vmem:[%s5 + $0x58] sm:$0xff]
        %v1029 = vld [vmem:[%s5 + $0x60] sm:$0xff]
        %v1030 = vld [vmem:[%s5 + $0x68] sm:$0xff]
        %v1031 = vld [vmem:[%s5 + $0x70] sm:$0xff]
        %v1032 = vld [vmem:[%s5 + $0x78] sm:$0xff]
        %v1033 = vld [vmem:[%s6] sm:$0xff]
        %v1034 = vld [vmem:[%s6 + $0x8] sm:$0xff]
        %v1035 = vld [vmem:[%s6 + $0x10] sm:$0xff]
        %v1036 = vld [vmem:[%s6 + $0x18] sm:$0xff]
        %v1037 = vld [vmem:[%s6 + $0x20] sm:$0xff]
        %v1038 = vld [vmem:[%s6 + $0x28] sm:$0xff]
        %v1039 = vld [vmem:[%s6 + $0x30] sm:$0xff]
        %v1040 = vld [vmem:[%s6 + $0x38] sm:$0xff]
        %v1041 = vld [vmem:[%s6 + $0x40] sm:$0xff]
        %v1042 = vld [vmem:[%s6 + $0x48] sm:$0xff]
        %v1043 = vld [vmem:[%s6 + $0x50] sm:$0xff]
        %v1044 = vld [vmem:[%s6 + $0x58] sm:$0xff]
        %v1045 = vld [vmem:[%s6 + $0x60] sm:$0xff]
        %v1046 = vld [vmem:[%s6 + $0x68] sm:$0xff]
        %v1047 = vld [vmem:[%s6 + $0x70] sm:$0xff]
        %v1048 = vld [vmem:[%s6 + $0x78] sm:$0xff]
        %v1049 = vld [vmem:[%s7] sm:$0xff]
        %s1050 = sld [smem:[#allocation2 + $0x1]]
        %1052 = vset.pattern.permute.xlu0 0
        %1053 = vperm.xlu0 %1052, %v1033
        %v1054 = vpop.permute.xlu0 %1053
        %1057 = vset.pattern.permute.xlu0 0
        %1058 = vperm.xlu0 %1057, %v1034
        %v1059 = vpop.permute.xlu0 %1058
        %1062 = vset.pattern.permute.xlu0 0
        %1063 = vperm.xlu0 %1062, %v1035
        %v1064 = vpop.permute.xlu0 %1063
        %1067 = vset.pattern.permute.xlu0 0
        %1068 = vperm.xlu0 %1067, %v1036
        %v1069 = vpop.permute.xlu0 %1068
        %1072 = vset.pattern.permute.xlu0 0
        %1073 = vperm.xlu0 %1072, %v1037
        %v1074 = vpop.permute.xlu0 %1073
        %1077 = vset.pattern.permute.xlu0 0
        %1078 = vperm.xlu0 %1077, %v1038
        %v1079 = vpop.permute.xlu0 %1078
        %1082 = vset.pattern.permute.xlu0 0
        %1083 = vperm.xlu0 %1082, %v1039
        %v1084 = vpop.permute.xlu0 %1083
        %1087 = vset.pattern.permute.xlu0 0
        %1088 = vperm.xlu0 %1087, %v1040
        %v1089 = vpop.permute.xlu0 %1088
        %1092 = vset.pattern.permute.xlu0 0
        %1093 = vperm.xlu0 %1092, %v1041
        %v1094 = vpop.permute.xlu0 %1093
        %1097 = vset.pattern.permute.xlu0 0
        %1098 = vperm.xlu0 %1097, %v1042
        %v1099 = vpop.permute.xlu0 %1098
        %1102 = vset.pattern.permute.xlu0 0
        %1103 = vperm.xlu0 %1102, %v1043
        %v1104 = vpop.permute.xlu0 %1103
        %1107 = vset.pattern.permute.xlu0 0
        %1108 = vperm.xlu0 %1107, %v1044
        %v1109 = vpop.permute.xlu0 %1108
        %1112 = vset.pattern.permute.xlu0 0
        %1113 = vperm.xlu0 %1112, %v1045
        %v1114 = vpop.permute.xlu0 %1113
        %1117 = vset.pattern.permute.xlu0 0
        %1118 = vperm.xlu0 %1117, %v1046
        %v1119 = vpop.permute.xlu0 %1118
        %1122 = vset.pattern.permute.xlu0 0
        %1123 = vperm.xlu0 %1122, %v1047
        %v1124 = vpop.permute.xlu0 %1123
        %1127 = vset.pattern.permute.xlu0 0
        %1128 = vperm.xlu0 %1127, %v1048
        %v1129 = vpop.permute.xlu0 %1128
        %v1132 = vsel %vm679, %v1017, 0
        %v1135 = vsel %vm679, %v1018, 0
        %v1138 = vsel %vm679, %v1019, 0
        %v1141 = vsel %vm679, %v1020, 0
        %v1144 = vsel %vm679, %v1021, 0
        %v1147 = vsel %vm679, %v1022, 0
        %v1150 = vsel %vm679, %v1023, 0
        %v1153 = vsel %vm679, %v1024, 0
        %v1156 = vsel %vm679, %v1025, 0
        %v1159 = vsel %vm679, %v1026, 0
        %v1162 = vsel %vm679, %v1027, 0
        %v1165 = vsel %vm679, %v1028, 0
        %v1168 = vsel %vm679, %v1029, 0
        %v1171 = vsel %vm679, %v1030, 0
        %v1174 = vsel %vm679, %v1031, 0
        %v1177 = vsel %vm679, %v1032, 0
        %1179 = vmatprep.subr.mxu0 %v562
        %1180 = vmatpush1.msra.mxu0 %v561
        %1181 = vmatprep.subr.mxu0 0.0
        %1182 = vmatpush1.msra.mxu0 0.0
        %1183 = vmatprep.subr.mxu0 0.0
        %1184 = vmatpush1.msra.mxu0 0.0
        %1185 = vmatprep.subr.mxu0 0.0
        %1186 = vmatpush1.msra.mxu0 0.0
        %1187 = vmatprep.subr.mxu0 0.0
        %1188 = vmatpush1.msra.mxu0 0.0
        %1189 = vmatprep.subr.mxu0 0.0
        %1190 = vmatpush1.msra.mxu0 0.0
        %1191 = vmatprep.subr.mxu0 0.0
        %1192 = vmatpush1.msra.mxu0 0.0
        %1193 = vmatprep.subr.mxu0 0.0
        %1194 = vmatpush1.msra.mxu0 0.0
        %1195 = vmatprep.subr.mxu0 0.0
        %1196 = vmatpush1.msra.mxu0 0.0
        %1197 = vmatprep.subr.mxu0 0.0
        %1198 = vmatpush1.msra.mxu0 0.0
        %1199 = vmatprep.subr.mxu0 0.0
        %1200 = vmatpush1.msra.mxu0 0.0
        %1201 = vmatprep.subr.mxu0 0.0
        %1202 = vmatpush1.msra.mxu0 0.0
        %1203 = vmatprep.subr.mxu0 0.0
        %1204 = vmatpush1.msra.mxu0 0.0
        %1205 = vmatprep.subr.mxu0 0.0
        %1206 = vmatpush1.msra.mxu0 0.0
        %1207 = vmatprep.subr.mxu0 0.0
        %1208 = vmatpush1.msra.mxu0 0.0
        %1209 = vmatprep.subr.mxu0 0.0
        %1210 = vmatpush1.msra.mxu0 0.0
        %1211 = vmatprep.subr.mxu0 0.0
        %1212 = vmatpush1.msra.mxu0 0.0
        %1213 = vmatprep.subr.mxu0 0.0
        %1214 = vmatpush1.msra.mxu0 0.0
        %1215 = vmatprep.subr.mxu0 0.0
        %1216 = vmatpush1.msra.mxu0 0.0
        %1217 = vmatprep.subr.mxu0 0.0
        %1218 = vmatpush1.msra.mxu0 0.0
        %1219 = vmatprep.subr.mxu0 0.0
        %1220 = vmatpush1.msra.mxu0 0.0
        %1221 = vmatprep.subr.mxu0 0.0
        %1222 = vmatpush1.msra.mxu0 0.0
        %1223 = vmatprep.subr.mxu0 0.0
        %1224 = vmatpush1.msra.mxu0 0.0
        %1225 = vmatprep.subr.mxu0 0.0
        %1226 = vmatpush1.msra.mxu0 0.0
        %1227 = vmatprep.subr.mxu0 0.0
        %1228 = vmatpush1.msra.mxu0 0.0
        %1229 = vmatprep.subr.mxu0 0.0
        %1230 = vmatpush1.msra.mxu0 0.0
        %1231 = vmatprep.subr.mxu0 0.0
        %1232 = vmatpush1.msra.mxu0 0.0
        %1233 = vmatprep.subr.mxu0 0.0
        %1234 = vmatpush1.msra.mxu0 0.0
        %1235 = vmatprep.subr.mxu0 0.0
        %1236 = vmatpush1.msra.mxu0 0.0
        %1237 = vmatprep.subr.mxu0 0.0
        %1238 = vmatpush1.msra.mxu0 0.0
        %1239 = vmatprep.subr.mxu0 0.0
        %1240 = vmatpush1.msra.mxu0 0.0
        %1241 = vmatprep.subr.mxu0 0.0
        %1242 = vmatpush1.msra.mxu0 0.0
        %1243 = vmatprep.mubr.f32.mxu0 0.0
        %1244 = vmatmul.mubr.f32.gmra.mrb[0].mxu0 %v1132
        %v1245 = vpop.f32.mrb[0].mxu0
        %v1246 = vadd.f32 %v1054, %v1245
        %v1247 = vpop.f32.mrb[0].mxu0
        %v1248 = vadd.f32 %v1054, %v1247
        %1249 = vmatprep.mubr.f32.mxu0 0.0
        %1250 = vmatmul.mubr.f32.gmra.mrb[0].mxu0 %v1135
        %v1251 = vpop.f32.mrb[0].mxu0
        %v1252 = vadd.f32 %v1059, %v1251
        %v1253 = vpop.f32.mrb[0].mxu0
        %v1254 = vadd.f32 %v1059, %v1253
        %1255 = vmatprep.mubr.f32.mxu0 0.0
        %1256 = vmatmul.mubr.f32.gmra.mrb[0].mxu0 %v1138
        %v1257 = vpop.f32.mrb[0].mxu0
        %v1258 = vadd.f32 %v1064, %v1257
        %v1259 = vpop.f32.mrb[0].mxu0
        %v1260 = vadd.f32 %v1064, %v1259
        %1261 = vmatprep.mubr.f32.mxu0 0.0
        %1262 = vmatmul.mubr.f32.gmra.mrb[0].mxu0 %v1141
        %v1263 = vpop.f32.mrb[0].mxu0
        %v1264 = vadd.f32 %v1069, %v1263
        %v1265 = vpop.f32.mrb[0].mxu0
        %v1266 = vadd.f32 %v1069, %v1265
        %1267 = vmatprep.mubr.f32.mxu0 0.0
        %1268 = vmatmul.mubr.f32.gmra.mrb[0].mxu0 %v1144
        %v1269 = vpop.f32.mrb[0].mxu0
        %v1270 = vadd.f32 %v1074, %v1269
        %v1271 = vpop.f32.mrb[0].mxu0
        %v1272 = vadd.f32 %v1074, %v1271
        %1273 = vmatprep.mubr.f32.mxu0 0.0
        %1274 = vmatmul.mubr.f32.gmra.mrb[0].mxu0 %v1147
        %v1275 = vpop.f32.mrb[0].mxu0
        %v1276 = vadd.f32 %v1079, %v1275
        %v1277 = vpop.f32.mrb[0].mxu0
        %v1278 = vadd.f32 %v1079, %v1277
        %1279 = vmatprep.mubr.f32.mxu0 0.0
        %1280 = vmatmul.mubr.f32.gmra.mrb[0].mxu0 %v1150
        %v1281 = vpop.f32.mrb[0].mxu0
        %v1282 = vadd.f32 %v1084, %v1281
        %v1283 = vpop.f32.mrb[0].mxu0
        %v1284 = vadd.f32 %v1084, %v1283
        %1285 = vmatprep.mubr.f32.mxu0 0.0
        %1286 = vmatmul.mubr.f32.gmra.mrb[0].mxu0 %v1153
        %v1287 = vpop.f32.mrb[0].mxu0
        %v1288 = vadd.f32 %v1089, %v1287
        %v1289 = vpop.f32.mrb[0].mxu0
        %v1290 = vadd.f32 %v1089, %v1289
        %1291 = vmatprep.mubr.f32.mxu0 0.0
        %1292 = vmatmul.mubr.f32.gmra.mrb[0].mxu0 %v1156
        %v1293 = vpop.f32.mrb[0].mxu0
        %v1294 = vadd.f32 %v1094, %v1293
        %v1295 = vpop.f32.mrb[0].mxu0
        %v1296 = vadd.f32 %v1094, %v1295
        %1297 = vmatprep.mubr.f32.mxu0 0.0
        %1298 = vmatmul.mubr.f32.gmra.mrb[0].mxu0 %v1159
        %v1299 = vpop.f32.mrb[0].mxu0
        %v1300 = vadd.f32 %v1099, %v1299
        %v1301 = vpop.f32.mrb[0].mxu0
        %v1302 = vadd.f32 %v1099, %v1301
        %1303 = vmatprep.mubr.f32.mxu0 0.0
        %1304 = vmatmul.mubr.f32.gmra.mrb[0].mxu0 %v1162
        %v1305 = vpop.f32.mrb[0].mxu0
        %v1306 = vadd.f32 %v1104, %v1305
        %v1307 = vpop.f32.mrb[0].mxu0
        %v1308 = vadd.f32 %v1104, %v1307
        %1309 = vmatprep.mubr.f32.mxu0 0.0
        %1310 = vmatmul.mubr.f32.gmra.mrb[0].mxu0 %v1165
        %v1311 = vpop.f32.mrb[0].mxu0
        %v1312 = vadd.f32 %v1109, %v1311
        %v1313 = vpop.f32.mrb[0].mxu0
        %v1314 = vadd.f32 %v1109, %v1313
        %1315 = vmatprep.mubr.f32.mxu0 0.0
        %1316 = vmatmul.mubr.f32.gmra.mrb[0].mxu0 %v1168
        %v1317 = vpop.f32.mrb[0].mxu0
        %v1318 = vadd.f32 %v1114, %v1317
        %v1319 = vpop.f32.mrb[0].mxu0
        %v1320 = vadd.f32 %v1114, %v1319
        %1321 = vmatprep.mubr.f32.mxu0 0.0
        %1322 = vmatmul.mubr.f32.gmra.mrb[0].mxu0 %v1171
        %v1323 = vpop.f32.mrb[0].mxu0
        %v1324 = vadd.f32 %v1119, %v1323
        %v1325 = vpop.f32.mrb[0].mxu0
        %v1326 = vadd.f32 %v1119, %v1325
        %1327 = vmatprep.mubr.f32.mxu0 0.0
        %1328 = vmatmul.mubr.f32.gmra.mrb[0].mxu0 %v1174
        %v1329 = vpop.f32.mrb[0].mxu0
        %v1330 = vadd.f32 %v1124, %v1329
        %v1331 = vpop.f32.mrb[0].mxu0
        %v1332 = vadd.f32 %v1124, %v1331
        %1333 = vmatprep.mubr.f32.mxu0 0.0
        %1334 = vmatmul.mubr.f32.gmra.mrb[0].mxu0 %v1177
        %v1335 = vpop.f32.mrb[0].mxu0
        %v1336 = vadd.f32 %v1129, %v1335
        %v1337 = vpop.f32.mrb[0].mxu0
        %v1338 = vadd.f32 %v1129, %v1337
        %1339 = vdwg.mxu0
        %v1340 = vmax.f32 %v1246, 0.0
        %v1341 = vmax.f32 %v1248, 0.0
        %v1342 = vmax.f32 %v1252, 0.0
        %v1343 = vmax.f32 %v1254, 0.0
        %v1344 = vmax.f32 %v1258, 0.0
        %v1345 = vmax.f32 %v1260, 0.0
        %v1346 = vmax.f32 %v1264, 0.0
        %v1347 = vmax.f32 %v1266, 0.0
        %v1348 = vmax.f32 %v1270, 0.0
        %v1349 = vmax.f32 %v1272, 0.0
        %v1350 = vmax.f32 %v1276, 0.0
        %v1351 = vmax.f32 %v1278, 0.0
        %v1352 = vmax.f32 %v1282, 0.0
        %v1353 = vmax.f32 %v1284, 0.0
        %v1354 = vmax.f32 %v1288, 0.0
        %v1355 = vmax.f32 %v1290, 0.0
        %v1356 = vmax.f32 %v1294, 0.0
        %v1357 = vmax.f32 %v1296, 0.0
        %v1358 = vmax.f32 %v1300, 0.0
        %v1359 = vmax.f32 %v1302, 0.0
        %v1360 = vmax.f32 %v1306, 0.0
        %v1361 = vmax.f32 %v1308, 0.0
        %v1362 = vmax.f32 %v1312, 0.0
        %v1363 = vmax.f32 %v1314, 0.0
        %v1364 = vmax.f32 %v1318, 0.0
        %v1365 = vmax.f32 %v1320, 0.0
        %v1366 = vmax.f32 %v1324, 0.0
        %v1367 = vmax.f32 %v1326, 0.0
        %v1368 = vmax.f32 %v1330, 0.0
        %v1369 = vmax.f32 %v1332, 0.0
        %v1370 = vmax.f32 %v1336, 0.0
        %v1371 = vmax.f32 %v1338, 0.0
        %v1372 = vstv %s1050
        %1373 = vmatprep.subr.mxu0 %v1341
        %1374 = vmatpush1.msra.mxu0 %v1340
        %1375 = vmatprep.subr.mxu0 %v1343
        %1376 = vmatpush1.msra.mxu0 %v1342
        %1377 = vmatprep.subr.mxu0 %v1345
        %1378 = vmatpush1.msra.mxu0 %v1344
        %1379 = vmatprep.subr.mxu0 %v1347
        %1380 = vmatpush1.msra.mxu0 %v1346
        %1381 = vmatprep.subr.mxu0 %v1349
        %1382 = vmatpush1.msra.mxu0 %v1348
        %1383 = vmatprep.subr.mxu0 %v1351
        %1384 = vmatpush1.msra.mxu0 %v1350
        %1385 = vmatprep.subr.mxu0 %v1353
        %1386 = vmatpush1.msra.mxu0 %v1352
        %1387 = vmatprep.subr.mxu0 %v1355
        %1388 = vmatpush1.msra.mxu0 %v1354
        %1389 = vmatprep.subr.mxu0 %v1357
        %1390 = vmatpush1.msra.mxu0 %v1356
        %1391 = vmatprep.subr.mxu0 %v1359
        %1392 = vmatpush1.msra.mxu0 %v1358
        %1393 = vmatprep.subr.mxu0 %v1361
        %1394 = vmatpush1.msra.mxu0 %v1360
        %1395 = vmatprep.subr.mxu0 %v1363
        %1396 = vmatpush1.msra.mxu0 %v1362
        %1397 = vmatprep.subr.mxu0 %v1365
        %1398 = vmatpush1.msra.mxu0 %v1364
        %1399 = vmatprep.subr.mxu0 %v1367
        %1400 = vmatpush1.msra.mxu0 %v1366
        %1401 = vmatprep.subr.mxu0 %v1369
        %1402 = vmatpush1.msra.mxu0 %v1368
        %1403 = vmatprep.subr.mxu0 %v1371
        %1404 = vmatpush1.msra.mxu0 %v1370
        %1405 = vmatprep.subr.mxu0 0.0
        %1406 = vmatpush1.msra.mxu0 0.0
        %1407 = vmatprep.subr.mxu0 0.0
        %1408 = vmatpush1.msra.mxu0 0.0
        %1409 = vmatprep.subr.mxu0 0.0
        %1410 = vmatpush1.msra.mxu0 0.0
        %1411 = vmatprep.subr.mxu0 0.0
        %1412 = vmatpush1.msra.mxu0 0.0
        %1413 = vmatprep.subr.mxu0 0.0
        %1414 = vmatpush1.msra.mxu0 0.0
        %1415 = vmatprep.subr.mxu0 0.0
        %1416 = vmatpush1.msra.mxu0 0.0
        %1417 = vmatprep.subr.mxu0 0.0
        %1418 = vmatpush1.msra.mxu0 0.0
        %1419 = vmatprep.subr.mxu0 0.0
        %1420 = vmatpush1.msra.mxu0 0.0
        %1421 = vmatprep.subr.mxu0 0.0
        %1422 = vmatpush1.msra.mxu0 0.0
        %1423 = vmatprep.subr.mxu0 0.0
        %1424 = vmatpush1.msra.mxu0 0.0
        %1425 = vmatprep.subr.mxu0 0.0
        %1426 = vmatpush1.msra.mxu0 0.0
        %1427 = vmatprep.subr.mxu0 0.0
        %1428 = vmatpush1.msra.mxu0 0.0
        %1429 = vmatprep.subr.mxu0 0.0
        %1430 = vmatpush1.msra.mxu0 0.0
        %1431 = vmatprep.subr.mxu0 0.0
        %1432 = vmatpush1.msra.mxu0 0.0
        %1433 = vmatprep.subr.mxu0 0.0
        %1434 = vmatpush1.msra.mxu0 0.0
        %1435 = vmatprep.subr.mxu0 0.0
        %1436 = vmatpush1.msra.mxu0 0.0
        %1437 = vmatprep.mubr.f32.mxu0 0.0
        %1438 = vmatmul.mubr.f32.gmra.mrb[0].mxu0 %v1049
        %v1439 = vpop.f32.mrb[0].mxu0
        %v1440 = vadd.f32 %v1372, %v1439
        %v1441 = vpop.f32.mrb[0].mxu0
        %v1442 = vadd.f32 %v1372, %v1441
        %1443 = vdwg.mxu0
        %v1444 = vxor.u32 %v1440, 2147483648
        %v1445 = vxor.u32 %v1442, 2147483648
        %v1446 = vmul.f32 %v1444, 1.442695
        %v1447 = vpow.pop %v1446
        %v1448 = vmul.f32 %v1445, 1.442695
        %v1449 = vpow.pop %v1448
        %v1450 = vadd.f32 %v1447, 1.0
        %v1451 = vadd.f32 %v1449, 1.0
        %v1452 = vrcp.pop %v1450
        %v1453 = vmul.f32 1.0, %v1452
        %v1454 = vrcp.pop %v1451
        %v1455 = vmul.f32 1.0, %v1454
        %v1456 = vmul.f32 %v563, %v1453
        %v1457 = vmul.f32 %v564, %v1455
        %v1458 = vld [vmem:[%s540] sm:$0xff]
        %1460 = vset.pattern.permute.xlu0 0
        %1461 = vperm.xlu0 %1460, %v1458
        %v1462 = vpop.permute.xlu0 %1461
        %v1464 = vmul.f32 %v1456, %v1462
        %v1465 = vmul.f32 %v1457, %v1462
        %1466 = vst [vmem:[%s559] sm:$0xff] %v1464
        %1467 = vst [vmem:[%s559 + $0x8] sm:$0xff] %v1465
        %s1468 = smul.u32 2, %s30
        %p1469 = scmp.lt.s32.totalorder %s29, 1
        %s1470 = scalar_select %p1469, %s29, 1
        %p1471 = scmp.lt.s32.totalorder %s1468, 1
        %s1472 = scalar_select %p1471, %s1468, 1
        %s1473 = smul.addr %s1470, 2
        %s1474 = sadd.s32 %s1472, %s1473
        %s1475 = smul.addr %s1474, 8
        %s1476 = scalar_lea.vmem %s11, %s1475
        %s1477 = smul.u32 2, %s30
        %p1478 = scmp.lt.s32.totalorder %s29, 1
        %s1479 = scalar_select %p1478, %s29, 1
        %p1480 = scmp.lt.s32.totalorder %s1477, 1
        %s1481 = scalar_select %p1480, %s1477, 1
        %s1482 = smul.addr %s1479, 2
        %s1483 = sadd.s32 %s1481, %s1482
        %s1484 = smul.addr %s1483, 8
        %s1485 = scalar_lea.vmem %s12, %s1484
        // Predicated region
        $region69: #{_scma_impl.3} parent=63 // pred_check
          %p1486 = pneg %p312
        $region70: #{_scma_impl.3} parent=63 // pred_check_branch
          %1488 = sbr.rel (%p1486) target = $region72
        $region71: #{_scma_impl.3} parent=63 // pred_region
          %s1489 = smul.u32 2, %s30
        $region72: #{_scma_impl.3} parent=63 // pred_fallthru
          _
        // Predicated region
        $region73: #{_scma_impl.3} parent=63 // pred_check
          %p1490 = pneg %p340
        $region74: #{_scma_impl.3} parent=63 // pred_check_branch
          %1492 = sbr.rel (%p1490) target = $region76
        $region75: #{_scma_impl.3} parent=63 // pred_region
          %s1493 = smul.u32 2, %s30
        $region76: #{_scma_impl.3} parent=63 // pred_fallthru
          _
      $region64: #{_scma_impl.3} parent=5 // pred_fallthru
        _
      %p1494 = scmp.le.s32.totalorder 2, %s20
      // Predicated region
      $region77: #{_scma_impl.3} parent=5 // pred_check
        %p1495 = pneg %p1494
      $region78: #{_scma_impl.3} parent=5 // pred_check_branch
        %1497 = sbr.rel (%p1495) target = $region80
      $region79: #{_scma_impl.3} parent=5 // pred_region
        %s1498 = ssub.s32 %s20, 2
        // Predicated region
        $region81: #{_scma_impl.3} parent=79 // pred_check
          %p1499 = pneg %p318
        $region82: #{_scma_impl.3} parent=79 // pred_check_branch
          %1501 = sbr.rel (%p1499) target = $region84
        $region83: #{_scma_impl.3} parent=79 // pred_region
          %s1502 = smul.u32 2, %s32
          %p1503 = scmp.lt.s32.totalorder %s31, 1
          %s1504 = scalar_select %p1503, %s31, 1
          %p1505 = scmp.lt.s32.totalorder %s1502, 1
          %s1506 = scalar_select %p1505, %s1502, 1
          %s1507 = smul.addr %s1504, 2
          %s1508 = sadd.s32 %s1506, %s1507
          %s1509 = smul.addr %s1508, 8
          %s1510 = scalar_lea.vmem %s11, %s1509
        $region84: #{_scma_impl.3} parent=79 // pred_fallthru
          _
        // Predicated region
        $region85: #{_scma_impl.3} parent=79 // pred_check
          %p1511 = pneg %p346
        $region86: #{_scma_impl.3} parent=79 // pred_check_branch
          %1513 = sbr.rel (%p1511) target = $region88
        $region87: #{_scma_impl.3} parent=79 // pred_region
          %s1514 = smul.u32 2, %s32
          %p1515 = scmp.lt.s32.totalorder %s31, 1
          %s1516 = scalar_select %p1515, %s31, 1
          %p1517 = scmp.lt.s32.totalorder %s1514, 1
          %s1518 = scalar_select %p1517, %s1514, 1
          %s1519 = smul.addr %s1516, 2
          %s1520 = sadd.s32 %s1518, %s1519
          %s1521 = smul.addr %s1520, 8
          %s1522 = scalar_lea.vmem %s12, %s1521
        $region88: #{_scma_impl.3} parent=79 // pred_fallthru
          _
      $region80: #{_scma_impl.3} parent=5 // pred_fallthru
        _
    $region6: #{_scma_impl.3} parent=1 // loop_footer
      %s24 = sadd.s32 1, %s20
    $region7: #{_scma_impl.3} parent=1 // loop_footer_branch
      %19 = sbr.rel target = $region3
    $region8: #{_scma_impl.3} parent=1 // loop_exit
      _
    %1523 = vsyncpa [#allocation3], 1
    %s1524 = scalar_lea.sflag [#allocation3], 1
    %1525 = vsyncpa %s1524, 1

</llo_original>
